<compile_context>
chip_gen: v7x
topology: tpu7x:2x2x1
jax: 0.10.0
libtpu: 0.0.40
codegen_flags: <defaults>
</compile_context>

<pallas_src>
import math
import numpy as np
import jax
import jax.numpy as jnp
from jax.experimental import pallas as pl
from jax.experimental.pallas import tpu as pltpu

NEG_SLOPE = 0.01   # LeakyReLU(0.01)
SUBLANE = 8
LANE = 128


def _leaky(v):
    return jnp.where(v > 0, v, NEG_SLOPE * v)


def _round_up(n, m):
    return ((n + m - 1) // m) * m


# ----------------------------- fused Pallas kernel --------------------------

def _make_fused_kernel(T, B_pad, I, H, H2, H4, OUTP):
    """Fully-fused forward kernel for static shapes (weights in one slab)."""
    # Static row offsets into the packed weight slab (all multiples of 8).
    r_w0 = 0                 # w0   : I  rows, H    cols
    r_wih1 = r_w0 + I        # wih1 : H  rows, H    cols
    r_whh1 = r_wih1 + H      # whh1 : H  rows, H    cols
    r_wih2 = r_whh1 + H      # wih2 : H  rows, H2   cols
    r_whh2 = r_wih2 + H      # whh2 : H2 rows, H2   cols
    r_wih3 = r_whh2 + H2     # wih3 : H2 rows, H4   cols
    r_whh3 = r_wih3 + H2     # whh3 : H4 rows, H4   cols
    r_wf = r_whh3 + H4       # wf   : H4 rows, OUTP cols
    r_end = r_wf + H4

    def kernel(x_ref, w_ref, b_ref, out_ref):
        # Load all (tiny) weights once; they stay vreg/VMEM resident.
        w0 = w_ref[r_w0:r_wih1, :H]
        wih1 = w_ref[r_wih1:r_whh1, :H]
        whh1 = w_ref[r_whh1:r_wih2, :H]
        wih2 = w_ref[r_wih2:r_whh2, :H2]
        whh2 = w_ref[r_whh2:r_wih3, :H2]
        wih3 = w_ref[r_wih3:r_whh3, :H4]
        whh3 = w_ref[r_whh3:r_wf, :H4]
        wf = w_ref[r_wf:r_end, :OUTP]
        b0 = b_ref[0:1, :H]
        b1 = b_ref[1:2, :H]
        b2 = b_ref[2:3, :H2]
        b3 = b_ref[3:4, :H4]
        bf = b_ref[4:5, :OUTP]

        # ---- Linear_0 + LeakyReLU on the whole (T*B_pad, I) slab ----
        h0 = _leaky(jnp.dot(x_ref[...], w0,
                            preferred_element_type=jnp.float32) + b0)
        # ---- layer-1 input projection hoisted across all T steps ----
        p1 = jnp.dot(h0, wih1, preferred_element_type=jnp.float32) + b1

        h1_prev = jnp.zeros((B_pad, H), jnp.float32)
        h2_prev = jnp.zeros((B_pad, H2), jnp.float32)
        h3_prev = jnp.zeros((B_pad, H4), jnp.float32)

        # Wavefront over the three stacked recurrences.  At wave w:
        #   layer 1 runs step w, layer 2 runs step w-1, layer 3 runs step w-2
        # (plus fc1 + output store).  The three per-wave steps only depend on
        # values produced in earlier waves, so they overlap on MXU/EUP and the
        # serial dependency chain is ~T+2 steps instead of 3T.
        for w in range(T + 2):
            n1 = n2 = n3 = None
            if w < T:
                n1 = jnp.tanh(
                    p1[w * B_pad:(w + 1) * B_pad, :]
                    + jnp.dot(h1_prev, whh1,
                              preferred_element_type=jnp.float32))
            if 1 <= w <= T:
                # h1_prev here is layer-1's output for step w-1 (last wave).
                n2 = jnp.tanh(
                    jnp.dot(h1_prev, wih2, preferred_element_type=jnp.float32)
                    + jnp.dot(h2_prev, whh2,
                              preferred_element_type=jnp.float32)
                    + b2)
            if w >= 2:
                t = w - 2
                # h2_prev here is layer-2's output for step w-2 (last wave).
                n3 = jnp.tanh(
                    jnp.dot(h2_prev, wih3, preferred_element_type=jnp.float32)
                    + jnp.dot(h3_prev, whh3,
                              preferred_element_type=jnp.float32)
                    + b3)
                # fc1 + LeakyReLU folded into the last recurrence; store is
                # sublane-aligned and lane-dense (B_pad x 128) -> unmasked vst.
                y = jnp.dot(n3, wf, preferred_element_type=jnp.float32) + bf
                out_ref[t * B_pad:(t + 1) * B_pad, :] = _leaky(y)
            # Shift the pipeline registers for the next wave.
            if n1 is not None:
                h1_prev = n1
            if n2 is not None:
                h2_prev = n2
            if n3 is not None:
                h3_prev = n3

    return kernel


# ----------------------------- setup-time packing ----------------------------

def pack_params(params):
    """Pack all weights/biases into two lane-dense slabs (done once at init)."""
    I, H = params["w0"].shape
    H2 = params["rnn2"][0].shape[1]
    H4 = params["rnn3"][0].shape[1]
    out_dim = params["w1"].shape[1]
    assert max(H, H2, H4, out_dim) <= LANE

    def padw(w):
        return jnp.pad(w, ((0, 0), (0, LANE - w.shape[1])))

    def padb(b):
        return jnp.pad(b, ((0, LANE - b.shape[0]),))

    w_slab = jnp.concatenate([
        padw(params["w0"]),
        padw(params["rnn1"][0]), padw(params["rnn1"][1]),
        padw(params["rnn2"][0]), padw(params["rnn2"][1]),
        padw(params["rnn3"][0]), padw(params["rnn3"][1]),
        padw(params["w1"]),
    ], axis=0)

    b_slab = jnp.stack([
        padb(params["b0"]),
        padb(params["rnn1"][2]),
        padb(params["rnn2"][2]),
        padb(params["rnn3"][2]),
        padb(params["b1"]),
    ], axis=0)
    b_slab = jnp.pad(b_slab, ((0, SUBLANE - b_slab.shape[0]), (0, 0)))

    n_rows = I + 3 * H + 2 * H2 + 2 * H4
    assert w_slab.shape == (n_rows, LANE)
    return w_slab, b_slab


def build_forward(T, B_pad, input_size, hidden_size, output_size):
    """Build the jitted fused forward; returns (fn, out_pad)."""
    H, H2, H4 = hidden_size, hidden_size // 2, hidden_size // 4
    out_pad = _round_up(max(output_size, LANE), LANE)
    kernel = _make_fused_kernel(T, B_pad, input_size, H, H2, H4, out_pad)

    n_rows = input_size + 3 * H + 2 * H2 + 2 * H4
    vmem_bytes = 4 * (T * B_pad * input_size + n_rows * LANE
                      + SUBLANE * LANE + T * B_pad * out_pad)
    # TODO(synk): if T / hidden_size grow, switch to a T-tiled grid with a
    # carried hidden state instead of this fully-VMEM-resident design
    # (v7x VMEM is 64 MiB; default scoped limit 32 MiB).
    assert vmem_bytes < 16 * 1024 * 1024, "fully-resident design would blow VMEM"

    vmem = pltpu.MemorySpace.VMEM
    fwd = pl.pallas_call(
        kernel,
        out_shape=jax.ShapeDtypeStruct((T * B_pad, out_pad), jnp.float32),
        in_specs=[pl.BlockSpec(memory_space=vmem)] * 3,
        out_specs=pl.BlockSpec(memory_space=vmem),
    )
    return jax.jit(fwd), out_pad


# ----------------------------- parameter init -------------------------------

def init_params(key, input_size, hidden_size, output_size):
    """Deterministic PyTorch-style uniform(-1/sqrt(fan), 1/sqrt(fan)) init."""
    h2, h4 = hidden_size // 2, hidden_size // 4
    ks = jax.random.split(key, 16)

    def u(k, shape, fan):
        bound = 1.0 / math.sqrt(fan)
        return jax.random.uniform(k, shape, jnp.float32, -bound, bound)

    params = {
        # Linear_0: (in, out) transposed layout
        "w0": u(ks[0], (input_size, hidden_size), input_size),
        "b0": u(ks[1], (hidden_size,), input_size),
        # rnn_1: hidden -> hidden   (W_ih^T, W_hh^T, b_ih+b_hh)
        "rnn1": (u(ks[2], (hidden_size, hidden_size), hidden_size),
                 u(ks[3], (hidden_size, hidden_size), hidden_size),
                 u(ks[4], (hidden_size,), hidden_size)
                 + u(ks[5], (hidden_size,), hidden_size)),
        # rnn_2: hidden -> hidden//2
        "rnn2": (u(ks[6], (hidden_size, h2), h2),
                 u(ks[7], (h2, h2), h2),
                 u(ks[8], (h2,), h2) + u(ks[9], (h2,), h2)),
        # rnn_3: hidden//2 -> hidden//4
        "rnn3": (u(ks[10], (h2, h4), h4),
                 u(ks[11], (h4, h4), h4),
                 u(ks[12], (h4,), h4) + u(ks[13], (h4,), h4)),
        # fc1: hidden//4 -> output
        "w1": u(ks[14], (h4, output_size), h4),
        "b1": u(ks[15], (output_size,), h4),
    }
    return params


# --------------------------- pure-JAX reference -----------------------------

def _rnn_ref(x, w_ih, w_hh, b):
    B = x.shape[1]
    H = w_ih.shape[1]

    def step(h, xt):
        h_new = jnp.tanh(xt @ w_ih + h @ w_hh + b)
        return h_new, h_new

    _, outs = jax.lax.scan(step, jnp.zeros((B, H), jnp.float32), x)
    return outs


def model_ref(x, params):
    h = _leaky(x @ params["w0"] + params["b0"])
    h = _rnn_ref(h, *params["rnn1"])
    h = _rnn_ref(h, *params["rnn2"])
    h = _rnn_ref(h, *params["rnn3"])
    return _leaky(h @ params["w1"] + params["b1"])


# --------------------------------- main --------------------------------------

if __name__ == "__main__":
    input_size, hidden_size, output_size = 16, 32, 8
    T, B = 8, 4

    key = jax.random.PRNGKey(0)
    kx, kp = jax.random.split(key)
    x = jax.random.normal(kx, (T, B, input_size), jnp.float32)
    params = init_params(kp, input_size, hidden_size, output_size)

    # ---- one-time setup (off the per-call path) ----
    B_pad = _round_up(max(B, SUBLANE), SUBLANE)
    w_slab, b_slab = pack_params(params)
    fwd, out_pad = build_forward(T, B_pad, input_size, hidden_size, output_size)
    # Batch padded once to full sublanes; padded rows are independent zeros.
    x2d = jnp.pad(x, ((0, 0), (0, B_pad - B), (0, 0))).reshape(T * B_pad,
                                                               input_size)

    out2d = jax.block_until_ready(fwd(x2d, w_slab, b_slab))

    # Consumer-side view: slice padded batch rows / output lanes off here.
    out = np.asarray(out2d).reshape(T, B_pad, out_pad)[:, :B, :output_size]
    outs = (out, out, out, out, out)   # the module returns the same tensor 5x

    ref = np.asarray(model_ref(x, params))
    for o in outs:
        assert o.shape == (T, B, output_size)
        np.testing.assert_allclose(o, ref, rtol=1e-5, atol=1e-5)

    print("KERNEL_OK")
</pallas_src>

<mosaic_0001>
module attributes {stable_mosaic.version = 11 : i64} {
  func.func @kernel(%arg0: memref<64x16xf32, #tpu.memory_space<vmem>>, %arg1: memref<160x128xf32, #tpu.memory_space<vmem>>, %arg2: memref<8x128xf32, #tpu.memory_space<vmem>>, %arg3: memref<64x128xf32, #tpu.memory_space<vmem>>) attributes {dimension_semantics = [], scalar_prefetch = 0 : i64, scratch_operands = 0 : i64, tpu.core_type = #tpu.core_type<tc>} {
    %c0 = arith.constant 0 : index
    %c0_0 = arith.constant 0 : index
    %0 = vector.load %arg1[%c0, %c0_0] : memref<160x128xf32, #tpu.memory_space<vmem>>, vector<16x32xf32>
    %c16 = arith.constant 16 : index
    %c0_1 = arith.constant 0 : index
    %1 = vector.load %arg1[%c16, %c0_1] : memref<160x128xf32, #tpu.memory_space<vmem>>, vector<32x32xf32>
    %c48 = arith.constant 48 : index
    %c0_2 = arith.constant 0 : index
    %2 = vector.load %arg1[%c48, %c0_2] : memref<160x128xf32, #tpu.memory_space<vmem>>, vector<32x32xf32>
    %c80 = arith.constant 80 : index
    %c0_3 = arith.constant 0 : index
    %3 = vector.load %arg1[%c80, %c0_3] : memref<160x128xf32, #tpu.memory_space<vmem>>, vector<32x16xf32>
    %c112 = arith.constant 112 : index
    %c0_4 = arith.constant 0 : index
    %4 = vector.load %arg1[%c112, %c0_4] : memref<160x128xf32, #tpu.memory_space<vmem>>, vector<16x16xf32>
    %c128 = arith.constant 128 : index
    %c0_5 = arith.constant 0 : index
    %5 = vector.load %arg1[%c128, %c0_5] : memref<160x128xf32, #tpu.memory_space<vmem>>, vector<16x8xf32>
    %c144 = arith.constant 144 : index
    %c0_6 = arith.constant 0 : index
    %6 = vector.load %arg1[%c144, %c0_6] : memref<160x128xf32, #tpu.memory_space<vmem>>, vector<8x8xf32>
    %c152 = arith.constant 152 : index
    %c0_7 = arith.constant 0 : index
    %7 = vector.load %arg1[%c152, %c0_7] : memref<160x128xf32, #tpu.memory_space<vmem>>, vector<8x128xf32>
    %c0_8 = arith.constant 0 : index
    %c0_9 = arith.constant 0 : index
    %8 = vector.load %arg2[%c0_8, %c0_9] : memref<8x128xf32, #tpu.memory_space<vmem>>, vector<1x32xf32>
    %c1 = arith.constant 1 : index
    %c0_10 = arith.constant 0 : index
    %9 = vector.load %arg2[%c1, %c0_10] : memref<8x128xf32, #tpu.memory_space<vmem>>, vector<1x32xf32>
    %c2 = arith.constant 2 : index
    %c0_11 = arith.constant 0 : index
    %10 = vector.load %arg2[%c2, %c0_11] : memref<8x128xf32, #tpu.memory_space<vmem>>, vector<1x16xf32>
    %c3 = arith.constant 3 : index
    %c0_12 = arith.constant 0 : index
    %11 = vector.load %arg2[%c3, %c0_12] : memref<8x128xf32, #tpu.memory_space<vmem>>, vector<1x8xf32>
    %c4 = arith.constant 4 : index
    %c0_13 = arith.constant 0 : index
    %12 = vector.load %arg2[%c4, %c0_13] : memref<8x128xf32, #tpu.memory_space<vmem>>, vector<1x128xf32>
    %c0_14 = arith.constant 0 : index
    %c0_15 = arith.constant 0 : index
    %13 = vector.load %arg0[%c0_14, %c0_15] : memref<64x16xf32, #tpu.memory_space<vmem>>, vector<64x16xf32>
    %cst = arith.constant dense<0.000000e+00> : vector<64x32xf32>
    %14 = tpu.matmul %13, %0, %cst {dimension_numbers = #tpu.dot_dimension_numbers<[1], [0], [0], [1], [0, 0, 1, 1], [], []>} : vector<64x16xf32>, vector<16x32xf32>, vector<64x32xf32> -> vector<64x32xf32>
    %15 = vector.broadcast %8 : vector<1x32xf32> to vector<64x32xf32>
    %16 = arith.addf %14, %15 : vector<64x32xf32>
    %cst_16 = arith.constant 0.000000e+00 : f32
    %17 = vector.broadcast %cst_16 : f32 to vector<64x32xf32>
    %18 = arith.cmpf ogt, %16, %17 : vector<64x32xf32>
    %cst_17 = arith.constant 0.00999999977 : f32
    %19 = vector.broadcast %cst_17 : f32 to vector<64x32xf32>
    %20 = arith.mulf %19, %16 : vector<64x32xf32>
    %21 = arith.select %18, %16, %20 : vector<64x32xi1>, vector<64x32xf32>
    %cst_18 = arith.constant dense<0.000000e+00> : vector<64x32xf32>
    %22 = tpu.matmul %21, %1, %cst_18 {dimension_numbers = #tpu.dot_dimension_numbers<[1], [0], [0], [1], [0, 0, 1, 1], [], []>} : vector<64x32xf32>, vector<32x32xf32>, vector<64x32xf32> -> vector<64x32xf32>
    %23 = vector.broadcast %9 : vector<1x32xf32> to vector<64x32xf32>
    %24 = arith.addf %22, %23 : vector<64x32xf32>
    %cst_19 = arith.constant 0.000000e+00 : f32
    %25 = vector.broadcast %cst_19 : f32 to vector<8x32xf32>
    %cst_20 = arith.constant 0.000000e+00 : f32
    %26 = vector.broadcast %cst_20 : f32 to vector<8x16xf32>
    %cst_21 = arith.constant 0.000000e+00 : f32
    %27 = vector.broadcast %cst_21 : f32 to vector<8x8xf32>
    %28 = vector.extract_strided_slice %24 {offsets = [0, 0], sizes = [8, 32], strides = [1, 1]} : vector<64x32xf32> to vector<8x32xf32>
    %cst_22 = arith.constant dense<0.000000e+00> : vector<8x32xf32>
    %29 = tpu.matmul %25, %2, %cst_22 {dimension_numbers = #tpu.dot_dimension_numbers<[1], [0], [0], [1], [0, 0, 1, 1], [], []>} : vector<8x32xf32>, vector<32x32xf32>, vector<8x32xf32> -> vector<8x32xf32>
    %30 = arith.addf %28, %29 : vector<8x32xf32>
    %31 = math.tanh %30 : vector<8x32xf32>
    %32 = vector.extract_strided_slice %24 {offsets = [8, 0], sizes = [8, 32], strides = [1, 1]} : vector<64x32xf32> to vector<8x32xf32>
    %cst_23 = arith.constant dense<0.000000e+00> : vector<8x32xf32>
    %33 = tpu.matmul %31, %2, %cst_23 {dimension_numbers = #tpu.dot_dimension_numbers<[1], [0], [0], [1], [0, 0, 1, 1], [], []>} : vector<8x32xf32>, vector<32x32xf32>, vector<8x32xf32> -> vector<8x32xf32>
    %34 = arith.addf %32, %33 : vector<8x32xf32>
    %35 = math.tanh %34 : vector<8x32xf32>
    %cst_24 = arith.constant dense<0.000000e+00> : vector<8x16xf32>
    %36 = tpu.matmul %31, %3, %cst_24 {dimension_numbers = #tpu.dot_dimension_numbers<[1], [0], [0], [1], [0, 0, 1, 1], [], []>} : vector<8x32xf32>, vector<32x16xf32>, vector<8x16xf32> -> vector<8x16xf32>
    %cst_25 = arith.constant dense<0.000000e+00> : vector<8x16xf32>
    %37 = tpu.matmul %26, %4, %cst_25 {dimension_numbers = #tpu.dot_dimension_numbers<[1], [0], [0], [1], [0, 0, 1, 1], [], []>} : vector<8x16xf32>, vector<16x16xf32>, vector<8x16xf32> -> vector<8x16xf32>
    %38 = arith.addf %36, %37 : vector<8x16xf32>
    %39 = vector.broadcast %10 : vector<1x16xf32> to vector<8x16xf32>
    %40 = arith.addf %38, %39 : vector<8x16xf32>
    %41 = math.tanh %40 : vector<8x16xf32>
    %42 = vector.extract_strided_slice %24 {offsets = [16, 0], sizes = [8, 32], strides = [1, 1]} : vector<64x32xf32> to vector<8x32xf32>
    %cst_26 = arith.constant dense<0.000000e+00> : vector<8x32xf32>
    %43 = tpu.matmul %35, %2, %cst_26 {dimension_numbers = #tpu.dot_dimension_numbers<[1], [0], [0], [1], [0, 0, 1, 1], [], []>} : vector<8x32xf32>, vector<32x32xf32>, vector<8x32xf32> -> vector<8x32xf32>
    %44 = arith.addf %42, %43 : vector<8x32xf32>
    %45 = math.tanh %44 : vector<8x32xf32>
    %cst_27 = arith.constant dense<0.000000e+00> : vector<8x16xf32>
    %46 = tpu.matmul %35, %3, %cst_27 {dimension_numbers = #tpu.dot_dimension_numbers<[1], [0], [0], [1], [0, 0, 1, 1], [], []>} : vector<8x32xf32>, vector<32x16xf32>, vector<8x16xf32> -> vector<8x16xf32>
    %cst_28 = arith.constant dense<0.000000e+00> : vector<8x16xf32>
    %47 = tpu.matmul %41, %4, %cst_28 {dimension_numbers = #tpu.dot_dimension_numbers<[1], [0], [0], [1], [0, 0, 1, 1], [], []>} : vector<8x16xf32>, vector<16x16xf32>, vector<8x16xf32> -> vector<8x16xf32>
    %48 = arith.addf %46, %47 : vector<8x16xf32>
    %49 = vector.broadcast %10 : vector<1x16xf32> to vector<8x16xf32>
    %50 = arith.addf %48, %49 : vector<8x16xf32>
    %51 = math.tanh %50 : vector<8x16xf32>
    %cst_29 = arith.constant dense<0.000000e+00> : vector<8x8xf32>
    %52 = tpu.matmul %41, %5, %cst_29 {dimension_numbers = #tpu.dot_dimension_numbers<[1], [0], [0], [1], [0, 0, 1, 1], [], []>} : vector<8x16xf32>, vector<16x8xf32>, vector<8x8xf32> -> vector<8x8xf32>
    %cst_30 = arith.constant dense<0.000000e+00> : vector<8x8xf32>
    %53 = tpu.matmul %27, %6, %cst_30 {dimension_numbers = #tpu.dot_dimension_numbers<[1], [0], [0], [1], [0, 0, 1, 1], [], []>} : vector<8x8xf32>, vector<8x8xf32>, vector<8x8xf32> -> vector<8x8xf32>
    %54 = arith.addf %52, %53 : vector<8x8xf32>
    %55 = vector.broadcast %11 : vector<1x8xf32> to vector<8x8xf32>
    %56 = arith.addf %54, %55 : vector<8x8xf32>
    %57 = math.tanh %56 : vector<8x8xf32>
    %cst_31 = arith.constant dense<0.000000e+00> : vector<8x128xf32>
    %58 = tpu.matmul %57, %7, %cst_31 {dimension_numbers = #tpu.dot_dimension_numbers<[1], [0], [0], [1], [0, 0, 1, 1], [], []>} : vector<8x8xf32>, vector<8x128xf32>, vector<8x128xf32> -> vector<8x128xf32>
    %59 = vector.broadcast %12 : vector<1x128xf32> to vector<8x128xf32>
    %60 = arith.addf %58, %59 : vector<8x128xf32>
    %cst_32 = arith.constant 0.000000e+00 : f32
    %61 = vector.broadcast %cst_32 : f32 to vector<8x128xf32>
    %62 = arith.cmpf ogt, %60, %61 : vector<8x128xf32>
    %cst_33 = arith.constant 0.00999999977 : f32
    %63 = vector.broadcast %cst_33 : f32 to vector<8x128xf32>
    %64 = arith.mulf %63, %60 : vector<8x128xf32>
    %65 = arith.select %62, %60, %64 : vector<8x128xi1>, vector<8x128xf32>
    %c0_34 = arith.constant 0 : index
    %c0_35 = arith.constant 0 : index
    %66 = vector.load %arg3[%c0_34, %c0_35] : memref<64x128xf32, #tpu.memory_space<vmem>>, vector<8x128xf32>
    tpu.vector_store %arg3[%c0_34, %c0_35], %65 {strides = array<i32>} : memref<64x128xf32, #tpu.memory_space<vmem>>, vector<8x128xf32>,
    %67 = vector.extract_strided_slice %24 {offsets = [24, 0], sizes = [8, 32], strides = [1, 1]} : vector<64x32xf32> to vector<8x32xf32>
    %cst_36 = arith.constant dense<0.000000e+00> : vector<8x32xf32>
    %68 = tpu.matmul %45, %2, %cst_36 {dimension_numbers = #tpu.dot_dimension_numbers<[1], [0], [0], [1], [0, 0, 1, 1], [], []>} : vector<8x32xf32>, vector<32x32xf32>, vector<8x32xf32> -> vector<8x32xf32>
    %69 = arith.addf %67, %68 : vector<8x32xf32>
    %70 = math.tanh %69 : vector<8x32xf32>
    %cst_37 = arith.constant dense<0.000000e+00> : vector<8x16xf32>
    %71 = tpu.matmul %45, %3, %cst_37 {dimension_numbers = #tpu.dot_dimension_numbers<[1], [0], [0], [1], [0, 0, 1, 1], [], []>} : vector<8x32xf32>, vector<32x16xf32>, vector<8x16xf32> -> vector<8x16xf32>
    %cst_38 = arith.constant dense<0.000000e+00> : vector<8x16xf32>
    %72 = tpu.matmul %51, %4, %cst_38 {dimension_numbers = #tpu.dot_dimension_numbers<[1], [0], [0], [1], [0, 0, 1, 1], [], []>} : vector<8x16xf32>, vector<16x16xf32>, vector<8x16xf32> -> vector<8x16xf32>
    %73 = arith.addf %71, %72 : vector<8x16xf32>
    %74 = vector.broadcast %10 : vector<1x16xf32> to vector<8x16xf32>
    %75 = arith.addf %73, %74 : vector<8x16xf32>
    %76 = math.tanh %75 : vector<8x16xf32>
    %cst_39 = arith.constant dense<0.000000e+00> : vector<8x8xf32>
    %77 = tpu.matmul %51, %5, %cst_39 {dimension_numbers = #tpu.dot_dimension_numbers<[1], [0], [0], [1], [0, 0, 1, 1], [], []>} : vector<8x16xf32>, vector<16x8xf32>, vector<8x8xf32> -> vector<8x8xf32>
    %cst_40 = arith.constant dense<0.000000e+00> : vector<8x8xf32>
    %78 = tpu.matmul %57, %6, %cst_40 {dimension_numbers = #tpu.dot_dimension_numbers<[1], [0], [0], [1], [0, 0, 1, 1], [], []>} : vector<8x8xf32>, vector<8x8xf32>, vector<8x8xf32> -> vector<8x8xf32>
    %79 = arith.addf %77, %78 : vector<8x8xf32>
    %80 = vector.broadcast %11 : vector<1x8xf32> to vector<8x8xf32>
    %81 = arith.addf %79, %80 : vector<8x8xf32>
    %82 = math.tanh %81 : vector<8x8xf32>
    %cst_41 = arith.constant dense<0.000000e+00> : vector<8x128xf32>
    %83 = tpu.matmul %82, %7, %cst_41 {dimension_numbers = #tpu.dot_dimension_numbers<[1], [0], [0], [1], [0, 0, 1, 1], [], []>} : vector<8x8xf32>, vector<8x128xf32>, vector<8x128xf32> -> vector<8x128xf32>
    %84 = vector.broadcast %12 : vector<1x128xf32> to vector<8x128xf32>
    %85 = arith.addf %83, %84 : vector<8x128xf32>
    %cst_42 = arith.constant 0.000000e+00 : f32
    %86 = vector.broadcast %cst_42 : f32 to vector<8x128xf32>
    %87 = arith.cmpf ogt, %85, %86 : vector<8x128xf32>
    %cst_43 = arith.constant 0.00999999977 : f32
    %88 = vector.broadcast %cst_43 : f32 to vector<8x128xf32>
    %89 = arith.mulf %88, %85 : vector<8x128xf32>
    %90 = arith.select %87, %85, %89 : vector<8x128xi1>, vector<8x128xf32>
    %c8 = arith.constant 8 : index
    %c0_44 = arith.constant 0 : index
    %91 = vector.load %arg3[%c8, %c0_44] : memref<64x128xf32, #tpu.memory_space<vmem>>, vector<8x128xf32>
    tpu.vector_store %arg3[%c8, %c0_44], %90 {strides = array<i32>} : memref<64x128xf32, #tpu.memory_space<vmem>>, vector<8x128xf32>,
    %92 = vector.extract_strided_slice %24 {offsets = [32, 0], sizes = [8, 32], strides = [1, 1]} : vector<64x32xf32> to vector<8x32xf32>
    %cst_45 = arith.constant dense<0.000000e+00> : vector<8x32xf32>
    %93 = tpu.matmul %70, %2, %cst_45 {dimension_numbers = #tpu.dot_dimension_numbers<[1], [0], [0], [1], [0, 0, 1, 1], [], []>} : vector<8x32xf32>, vector<32x32xf32>, vector<8x32xf32> -> vector<8x32xf32>
    %94 = arith.addf %92, %93 : vector<8x32xf32>
    %95 = math.tanh %94 : vector<8x32xf32>
    %cst_46 = arith.constant dense<0.000000e+00> : vector<8x16xf32>
    %96 = tpu.matmul %70, %3, %cst_46 {dimension_numbers = #tpu.dot_dimension_numbers<[1], [0], [0], [1], [0, 0, 1, 1], [], []>} : vector<8x32xf32>, vector<32x16xf32>, vector<8x16xf32> -> vector<8x16xf32>
    %cst_47 = arith.constant dense<0.000000e+00> : vector<8x16xf32>
    %97 = tpu.matmul %76, %4, %cst_47 {dimension_numbers = #tpu.dot_dimension_numbers<[1], [0], [0], [1], [0, 0, 1, 1], [], []>} : vector<8x16xf32>, vector<16x16xf32>, vector<8x16xf32> -> vector<8x16xf32>
    %98 = arith.addf %96, %97 : vector<8x16xf32>
    %99 = vector.broadcast %10 : vector<1x16xf32> to vector<8x16xf32>
    %100 = arith.addf %98, %99 : vector<8x16xf32>
    %101 = math.tanh %100 : vector<8x16xf32>
    %cst_48 = arith.constant dense<0.000000e+00> : vector<8x8xf32>
    %102 = tpu.matmul %76, %5, %cst_48 {dimension_numbers = #tpu.dot_dimension_numbers<[1], [0], [0], [1], [0, 0, 1, 1], [], []>} : vector<8x16xf32>, vector<16x8xf32>, vector<8x8xf32> -> vector<8x8xf32>
    %cst_49 = arith.constant dense<0.000000e+00> : vector<8x8xf32>
    %103 = tpu.matmul %82, %6, %cst_49 {dimension_numbers = #tpu.dot_dimension_numbers<[1], [0], [0], [1], [0, 0, 1, 1], [], []>} : vector<8x8xf32>, vector<8x8xf32>, vector<8x8xf32> -> vector<8x8xf32>
    %104 = arith.addf %102, %103 : vector<8x8xf32>
    %105 = vector.broadcast %11 : vector<1x8xf32> to vector<8x8xf32>
    %106 = arith.addf %104, %105 : vector<8x8xf32>
    %107 = math.tanh %106 : vector<8x8xf32>
    %cst_50 = arith.constant dense<0.000000e+00> : vector<8x128xf32>
    %108 = tpu.matmul %107, %7, %cst_50 {dimension_numbers = #tpu.dot_dimension_numbers<[1], [0], [0], [1], [0, 0, 1, 1], [], []>} : vector<8x8xf32>, vector<8x128xf32>, vector<8x128xf32> -> vector<8x128xf32>
    %109 = vector.broadcast %12 : vector<1x128xf32> to vector<8x128xf32>
    %110 = arith.addf %108, %109 : vector<8x128xf32>
    %cst_51 = arith.constant 0.000000e+00 : f32
    %111 = vector.broadcast %cst_51 : f32 to vector<8x128xf32>
    %112 = arith.cmpf ogt, %110, %111 : vector<8x128xf32>
    %cst_52 = arith.constant 0.00999999977 : f32
    %113 = vector.broadcast %cst_52 : f32 to vector<8x128xf32>
    %114 = arith.mulf %113, %110 : vector<8x128xf32>
    %115 = arith.select %112, %110, %114 : vector<8x128xi1>, vector<8x128xf32>
    %c16_53 = arith.constant 16 : index
    %c0_54 = arith.constant 0 : index
    %116 = vector.load %arg3[%c16_53, %c0_54] : memref<64x128xf32, #tpu.memory_space<vmem>>, vector<8x128xf32>
    tpu.vector_store %arg3[%c16_53, %c0_54], %115 {strides = array<i32>} : memref<64x128xf32, #tpu.memory_space<vmem>>, vector<8x128xf32>,
    %117 = vector.extract_strided_slice %24 {offsets = [40, 0], sizes = [8, 32], strides = [1, 1]} : vector<64x32xf32> to vector<8x32xf32>
    %cst_55 = arith.constant dense<0.000000e+00> : vector<8x32xf32>
    %118 = tpu.matmul %95, %2, %cst_55 {dimension_numbers = #tpu.dot_dimension_numbers<[1], [0], [0], [1], [0, 0, 1, 1], [], []>} : vector<8x32xf32>, vector<32x32xf32>, vector<8x32xf32> -> vector<8x32xf32>
    %119 = arith.addf %117, %118 : vector<8x32xf32>
    %120 = math.tanh %119 : vector<8x32xf32>
    %cst_56 = arith.constant dense<0.000000e+00> : vector<8x16xf32>
    %121 = tpu.matmul %95, %3, %cst_56 {dimension_numbers = #tpu.dot_dimension_numbers<[1], [0], [0], [1], [0, 0, 1, 1], [], []>} : vector<8x32xf32>, vector<32x16xf32>, vector<8x16xf32> -> vector<8x16xf32>
    %cst_57 = arith.constant dense<0.000000e+00> : vector<8x16xf32>
    %122 = tpu.matmul %101, %4, %cst_57 {dimension_numbers = #tpu.dot_dimension_numbers<[1], [0], [0], [1], [0, 0, 1, 1], [], []>} : vector<8x16xf32>, vector<16x16xf32>, vector<8x16xf32> -> vector<8x16xf32>
    %123 = arith.addf %121, %122 : vector<8x16xf32>
    %124 = vector.broadcast %10 : vector<1x16xf32> to vector<8x16xf32>
    %125 = arith.addf %123, %124 : vector<8x16xf32>
    %126 = math.tanh %125 : vector<8x16xf32>
    %cst_58 = arith.constant dense<0.000000e+00> : vector<8x8xf32>
    %127 = tpu.matmul %101, %5, %cst_58 {dimension_numbers = #tpu.dot_dimension_numbers<[1], [0], [0], [1], [0, 0, 1, 1], [], []>} : vector<8x16xf32>, vector<16x8xf32>, vector<8x8xf32> -> vector<8x8xf32>
    %cst_59 = arith.constant dense<0.000000e+00> : vector<8x8xf32>
    %128 = tpu.matmul %107, %6, %cst_59 {dimension_numbers = #tpu.dot_dimension_numbers<[1], [0], [0], [1], [0, 0, 1, 1], [], []>} : vector<8x8xf32>, vector<8x8xf32>, vector<8x8xf32> -> vector<8x8xf32>
    %129 = arith.addf %127, %128 : vector<8x8xf32>
    %130 = vector.broadcast %11 : vector<1x8xf32> to vector<8x8xf32>
    %131 = arith.addf %129, %130 : vector<8x8xf32>
    %132 = math.tanh %131 : vector<8x8xf32>
    %cst_60 = arith.constant dense<0.000000e+00> : vector<8x128xf32>
    %133 = tpu.matmul %132, %7, %cst_60 {dimension_numbers = #tpu.dot_dimension_numbers<[1], [0], [0], [1], [0, 0, 1, 1], [], []>} : vector<8x8xf32>, vector<8x128xf32>, vector<8x128xf32> -> vector<8x128xf32>
    %134 = vector.broadcast %12 : vector<1x128xf32> to vector<8x128xf32>
    %135 = arith.addf %133, %134 : vector<8x128xf32>
    %cst_61 = arith.constant 0.000000e+00 : f32
    %136 = vector.broadcast %cst_61 : f32 to vector<8x128xf32>
    %137 = arith.cmpf ogt, %135, %136 : vector<8x128xf32>
    %cst_62 = arith.constant 0.00999999977 : f32
    %138 = vector.broadcast %cst_62 : f32 to vector<8x128xf32>
    %139 = arith.mulf %138, %135 : vector<8x128xf32>
    %140 = arith.select %137, %135, %139 : vector<8x128xi1>, vector<8x128xf32>
    %c24 = arith.constant 24 : index
    %c0_63 = arith.constant 0 : index
    %141 = vector.load %arg3[%c24, %c0_63] : memref<64x128xf32, #tpu.memory_space<vmem>>, vector<8x128xf32>
    tpu.vector_store %arg3[%c24, %c0_63], %140 {strides = array<i32>} : memref<64x128xf32, #tpu.memory_space<vmem>>, vector<8x128xf32>,
    %142 = vector.extract_strided_slice %24 {offsets = [48, 0], sizes = [8, 32], strides = [1, 1]} : vector<64x32xf32> to vector<8x32xf32>
    %cst_64 = arith.constant dense<0.000000e+00> : vector<8x32xf32>
    %143 = tpu.matmul %120, %2, %cst_64 {dimension_numbers = #tpu.dot_dimension_numbers<[1], [0], [0], [1], [0, 0, 1, 1], [], []>} : vector<8x32xf32>, vector<32x32xf32>, vector<8x32xf32> -> vector<8x32xf32>
    %144 = arith.addf %142, %143 : vector<8x32xf32>
    %145 = math.tanh %144 : vector<8x32xf32>
    %cst_65 = arith.constant dense<0.000000e+00> : vector<8x16xf32>
    %146 = tpu.matmul %120, %3, %cst_65 {dimension_numbers = #tpu.dot_dimension_numbers<[1], [0], [0], [1], [0, 0, 1, 1], [], []>} : vector<8x32xf32>, vector<32x16xf32>, vector<8x16xf32> -> vector<8x16xf32>
    %cst_66 = arith.constant dense<0.000000e+00> : vector<8x16xf32>
    %147 = tpu.matmul %126, %4, %cst_66 {dimension_numbers = #tpu.dot_dimension_numbers<[1], [0], [0], [1], [0, 0, 1, 1], [], []>} : vector<8x16xf32>, vector<16x16xf32>, vector<8x16xf32> -> vector<8x16xf32>
    %148 = arith.addf %146, %147 : vector<8x16xf32>
    %149 = vector.broadcast %10 : vector<1x16xf32> to vector<8x16xf32>
    %150 = arith.addf %148, %149 : vector<8x16xf32>
    %151 = math.tanh %150 : vector<8x16xf32>
    %cst_67 = arith.constant dense<0.000000e+00> : vector<8x8xf32>
    %152 = tpu.matmul %126, %5, %cst_67 {dimension_numbers = #tpu.dot_dimension_numbers<[1], [0], [0], [1], [0, 0, 1, 1], [], []>} : vector<8x16xf32>, vector<16x8xf32>, vector<8x8xf32> -> vector<8x8xf32>
    %cst_68 = arith.constant dense<0.000000e+00> : vector<8x8xf32>
    %153 = tpu.matmul %132, %6, %cst_68 {dimension_numbers = #tpu.dot_dimension_numbers<[1], [0], [0], [1], [0, 0, 1, 1], [], []>} : vector<8x8xf32>, vector<8x8xf32>, vector<8x8xf32> -> vector<8x8xf32>
    %154 = arith.addf %152, %153 : vector<8x8xf32>
    %155 = vector.broadcast %11 : vector<1x8xf32> to vector<8x8xf32>
    %156 = arith.addf %154, %155 : vector<8x8xf32>
    %157 = math.tanh %156 : vector<8x8xf32>
    %cst_69 = arith.constant dense<0.000000e+00> : vector<8x128xf32>
    %158 = tpu.matmul %157, %7, %cst_69 {dimension_numbers = #tpu.dot_dimension_numbers<[1], [0], [0], [1], [0, 0, 1, 1], [], []>} : vector<8x8xf32>, vector<8x128xf32>, vector<8x128xf32> -> vector<8x128xf32>
    %159 = vector.broadcast %12 : vector<1x128xf32> to vector<8x128xf32>
    %160 = arith.addf %158, %159 : vector<8x128xf32>
    %cst_70 = arith.constant 0.000000e+00 : f32
    %161 = vector.broadcast %cst_70 : f32 to vector<8x128xf32>
    %162 = arith.cmpf ogt, %160, %161 : vector<8x128xf32>
    %cst_71 = arith.constant 0.00999999977 : f32
    %163 = vector.broadcast %cst_71 : f32 to vector<8x128xf32>
    %164 = arith.mulf %163, %160 : vector<8x128xf32>
    %165 = arith.select %162, %160, %164 : vector<8x128xi1>, vector<8x128xf32>
    %c32 = arith.constant 32 : index
    %c0_72 = arith.constant 0 : index
    %166 = vector.load %arg3[%c32, %c0_72] : memref<64x128xf32, #tpu.memory_space<vmem>>, vector<8x128xf32>
    tpu.vector_store %arg3[%c32, %c0_72], %165 {strides = array<i32>} : memref<64x128xf32, #tpu.memory_space<vmem>>, vector<8x128xf32>,
    %167 = vector.extract_strided_slice %24 {offsets = [56, 0], sizes = [8, 32], strides = [1, 1]} : vector<64x32xf32> to vector<8x32xf32>
    %cst_73 = arith.constant dense<0.000000e+00> : vector<8x32xf32>
    %168 = tpu.matmul %145, %2, %cst_73 {dimension_numbers = #tpu.dot_dimension_numbers<[1], [0], [0], [1], [0, 0, 1, 1], [], []>} : vector<8x32xf32>, vector<32x32xf32>, vector<8x32xf32> -> vector<8x32xf32>
    %169 = arith.addf %167, %168 : vector<8x32xf32>
    %170 = math.tanh %169 : vector<8x32xf32>
    %cst_74 = arith.constant dense<0.000000e+00> : vector<8x16xf32>
    %171 = tpu.matmul %145, %3, %cst_74 {dimension_numbers = #tpu.dot_dimension_numbers<[1], [0], [0], [1], [0, 0, 1, 1], [], []>} : vector<8x32xf32>, vector<32x16xf32>, vector<8x16xf32> -> vector<8x16xf32>
    %cst_75 = arith.constant dense<0.000000e+00> : vector<8x16xf32>
    %172 = tpu.matmul %151, %4, %cst_75 {dimension_numbers = #tpu.dot_dimension_numbers<[1], [0], [0], [1], [0, 0, 1, 1], [], []>} : vector<8x16xf32>, vector<16x16xf32>, vector<8x16xf32> -> vector<8x16xf32>
    %173 = arith.addf %171, %172 : vector<8x16xf32>
    %174 = vector.broadcast %10 : vector<1x16xf32> to vector<8x16xf32>
    %175 = arith.addf %173, %174 : vector<8x16xf32>
    %176 = math.tanh %175 : vector<8x16xf32>
    %cst_76 = arith.constant dense<0.000000e+00> : vector<8x8xf32>
    %177 = tpu.matmul %151, %5, %cst_76 {dimension_numbers = #tpu.dot_dimension_numbers<[1], [0], [0], [1], [0, 0, 1, 1], [], []>} : vector<8x16xf32>, vector<16x8xf32>, vector<8x8xf32> -> vector<8x8xf32>
    %cst_77 = arith.constant dense<0.000000e+00> : vector<8x8xf32>
    %178 = tpu.matmul %157, %6, %cst_77 {dimension_numbers = #tpu.dot_dimension_numbers<[1], [0], [0], [1], [0, 0, 1, 1], [], []>} : vector<8x8xf32>, vector<8x8xf32>, vector<8x8xf32> -> vector<8x8xf32>
    %179 = arith.addf %177, %178 : vector<8x8xf32>
    %180 = vector.broadcast %11 : vector<1x8xf32> to vector<8x8xf32>
    %181 = arith.addf %179, %180 : vector<8x8xf32>
    %182 = math.tanh %181 : vector<8x8xf32>
    %cst_78 = arith.constant dense<0.000000e+00> : vector<8x128xf32>
    %183 = tpu.matmul %182, %7, %cst_78 {dimension_numbers = #tpu.dot_dimension_numbers<[1], [0], [0], [1], [0, 0, 1, 1], [], []>} : vector<8x8xf32>, vector<8x128xf32>, vector<8x128xf32> -> vector<8x128xf32>
    %184 = vector.broadcast %12 : vector<1x128xf32> to vector<8x128xf32>
    %185 = arith.addf %183, %184 : vector<8x128xf32>
    %cst_79 = arith.constant 0.000000e+00 : f32
    %186 = vector.broadcast %cst_79 : f32 to vector<8x128xf32>
    %187 = arith.cmpf ogt, %185, %186 : vector<8x128xf32>
    %cst_80 = arith.constant 0.00999999977 : f32
    %188 = vector.broadcast %cst_80 : f32 to vector<8x128xf32>
    %189 = arith.mulf %188, %185 : vector<8x128xf32>
    %190 = arith.select %187, %185, %189 : vector<8x128xi1>, vector<8x128xf32>
    %c40 = arith.constant 40 : index
    %c0_81 = arith.constant 0 : index
    %191 = vector.load %arg3[%c40, %c0_81] : memref<64x128xf32, #tpu.memory_space<vmem>>, vector<8x128xf32>
    tpu.vector_store %arg3[%c40, %c0_81], %190 {strides = array<i32>} : memref<64x128xf32, #tpu.memory_space<vmem>>, vector<8x128xf32>,
    %cst_82 = arith.constant dense<0.000000e+00> : vector<8x16xf32>
    %192 = tpu.matmul %170, %3, %cst_82 {dimension_numbers = #tpu.dot_dimension_numbers<[1], [0], [0], [1], [0, 0, 1, 1], [], []>} : vector<8x32xf32>, vector<32x16xf32>, vector<8x16xf32> -> vector<8x16xf32>
    %cst_83 = arith.constant dense<0.000000e+00> : vector<8x16xf32>
    %193 = tpu.matmul %176, %4, %cst_83 {dimension_numbers = #tpu.dot_dimension_numbers<[1], [0], [0], [1], [0, 0, 1, 1], [], []>} : vector<8x16xf32>, vector<16x16xf32>, vector<8x16xf32> -> vector<8x16xf32>
    %194 = arith.addf %192, %193 : vector<8x16xf32>
    %195 = vector.broadcast %10 : vector<1x16xf32> to vector<8x16xf32>
    %196 = arith.addf %194, %195 : vector<8x16xf32>
    %197 = math.tanh %196 : vector<8x16xf32>
    %cst_84 = arith.constant dense<0.000000e+00> : vector<8x8xf32>
    %198 = tpu.matmul %176, %5, %cst_84 {dimension_numbers = #tpu.dot_dimension_numbers<[1], [0], [0], [1], [0, 0, 1, 1], [], []>} : vector<8x16xf32>, vector<16x8xf32>, vector<8x8xf32> -> vector<8x8xf32>
    %cst_85 = arith.constant dense<0.000000e+00> : vector<8x8xf32>
    %199 = tpu.matmul %182, %6, %cst_85 {dimension_numbers = #tpu.dot_dimension_numbers<[1], [0], [0], [1], [0, 0, 1, 1], [], []>} : vector<8x8xf32>, vector<8x8xf32>, vector<8x8xf32> -> vector<8x8xf32>
    %200 = arith.addf %198, %199 : vector<8x8xf32>
    %201 = vector.broadcast %11 : vector<1x8xf32> to vector<8x8xf32>
    %202 = arith.addf %200, %201 : vector<8x8xf32>
    %203 = math.tanh %202 : vector<8x8xf32>
    %cst_86 = arith.constant dense<0.000000e+00> : vector<8x128xf32>
    %204 = tpu.matmul %203, %7, %cst_86 {dimension_numbers = #tpu.dot_dimension_numbers<[1], [0], [0], [1], [0, 0, 1, 1], [], []>} : vector<8x8xf32>, vector<8x128xf32>, vector<8x128xf32> -> vector<8x128xf32>
    %205 = vector.broadcast %12 : vector<1x128xf32> to vector<8x128xf32>
    %206 = arith.addf %204, %205 : vector<8x128xf32>
    %cst_87 = arith.constant 0.000000e+00 : f32
    %207 = vector.broadcast %cst_87 : f32 to vector<8x128xf32>
    %208 = arith.cmpf ogt, %206, %207 : vector<8x128xf32>
    %cst_88 = arith.constant 0.00999999977 : f32
    %209 = vector.broadcast %cst_88 : f32 to vector<8x128xf32>
    %210 = arith.mulf %209, %206 : vector<8x128xf32>
    %211 = arith.select %208, %206, %210 : vector<8x128xi1>, vector<8x128xf32>
    %c48_89 = arith.constant 48 : index
    %c0_90 = arith.constant 0 : index
    %212 = vector.load %arg3[%c48_89, %c0_90] : memref<64x128xf32, #tpu.memory_space<vmem>>, vector<8x128xf32>
    tpu.vector_store %arg3[%c48_89, %c0_90], %211 {strides = array<i32>} : memref<64x128xf32, #tpu.memory_space<vmem>>, vector<8x128xf32>,
    %cst_91 = arith.constant dense<0.000000e+00> : vector<8x8xf32>
    %213 = tpu.matmul %197, %5, %cst_91 {dimension_numbers = #tpu.dot_dimension_numbers<[1], [0], [0], [1], [0, 0, 1, 1], [], []>} : vector<8x16xf32>, vector<16x8xf32>, vector<8x8xf32> -> vector<8x8xf32>
    %cst_92 = arith.constant dense<0.000000e+00> : vector<8x8xf32>
    %214 = tpu.matmul %203, %6, %cst_92 {dimension_numbers = #tpu.dot_dimension_numbers<[1], [0], [0], [1], [0, 0, 1, 1], [], []>} : vector<8x8xf32>, vector<8x8xf32>, vector<8x8xf32> -> vector<8x8xf32>
    %215 = arith.addf %213, %214 : vector<8x8xf32>
    %216 = vector.broadcast %11 : vector<1x8xf32> to vector<8x8xf32>
    %217 = arith.addf %215, %216 : vector<8x8xf32>
    %218 = math.tanh %217 : vector<8x8xf32>
    %cst_93 = arith.constant dense<0.000000e+00> : vector<8x128xf32>
    %219 = tpu.matmul %218, %7, %cst_93 {dimension_numbers = #tpu.dot_dimension_numbers<[1], [0], [0], [1], [0, 0, 1, 1], [], []>} : vector<8x8xf32>, vector<8x128xf32>, vector<8x128xf32> -> vector<8x128xf32>
    %220 = vector.broadcast %12 : vector<1x128xf32> to vector<8x128xf32>
    %221 = arith.addf %219, %220 : vector<8x128xf32>
    %cst_94 = arith.constant 0.000000e+00 : f32
    %222 = vector.broadcast %cst_94 : f32 to vector<8x128xf32>
    %223 = arith.cmpf ogt, %221, %222 : vector<8x128xf32>
    %cst_95 = arith.constant 0.00999999977 : f32
    %224 = vector.broadcast %cst_95 : f32 to vector<8x128xf32>
    %225 = arith.mulf %224, %221 : vector<8x128xf32>
    %226 = arith.select %223, %221, %225 : vector<8x128xi1>, vector<8x128xf32>
    %c56 = arith.constant 56 : index
    %c0_96 = arith.constant 0 : index
    %227 = vector.load %arg3[%c56, %c0_96] : memref<64x128xf32, #tpu.memory_space<vmem>>, vector<8x128xf32>
    tpu.vector_store %arg3[%c56, %c0_96], %226 {strides = array<i32>} : memref<64x128xf32, #tpu.memory_space<vmem>>, vector<8x128xf32>,
    return
  }
}

</mosaic_0001>

<llo_original>
// kernel: tpu_custom_call.1
$region0: #{tpu_custom_call.1}
  #allocation0 [shape = 'u32[]', space=smem, size = 0x4, offset = 0x4, fixed_abs, tag = 'smem constant byte address 0x4 - core index']
  #allocation1 [shape = 'u32[144,128]{1,0:T(1,128)}', space=vmem, size = 0x12000, scoped, tag = 'internal scratch']
  %s0 = inlined_call_operand.vmem [shape: f32[64,16], index: 0, kind: input, shape index: {}]
  %s1 = inlined_call_operand.hbm [shape: f32[160,128], index: 1, kind: input, shape index: {}]
  %s2 = inlined_call_operand.vmem [shape: f32[8,128], index: 2, kind: input, shape index: {}]
  %s3 = inlined_call_operand.hbm [shape: f32[64,128], index: 3, kind: output, shape index: {}]
  %s4 = sld [smem:[#allocation0]]
  $region26: #{tpu_custom_call.1} parent=0
    _
  %s6 = ssub.s32 1, %s4
  %s7 = scalar_select 0, %s6, %s4
  $region1: #{tpu_custom_call.1} parent=0
    #allocation2 [shape = 'u8[81920]{0}', space=vmem, size = 0x14000, scoped, tag = 'input window, operand 1, single buffered']
    #allocation3 [shape = 's32[1]{0}', space=sflag, size = 0x4, scoped, tag = 'scoped memory for tpu_custom_call.1']
    #allocation4 [shape = 's32[1]{0}', space=sflag, size = 0x4, scoped, tag = 'scoped memory for tpu_custom_call.1']
    #allocation5 [shape = 'u8[32768]{0}', space=vmem, size = 0x8000, scoped, tag = 'output window, operand 0, single buffered']
    %8 = vsyncpa [#allocation3], 0
    %9 = vsyncpa [#allocation4], 0
    // Predicated region
    $region2: #{tpu_custom_call.1} parent=1 // pred_check
      _
    $region3: #{tpu_custom_call.1} parent=1 // pred_check_branch
      %11 = sbr.rel (0) target = $region5
    $region4: #{tpu_custom_call.1} parent=1 // pred_region
      _
    $region5: #{tpu_custom_call.1} parent=1 // pred_fallthru
      _
    // Predicated region
    $region6: #{tpu_custom_call.1} parent=1 // pred_check
      _
    $region7: #{tpu_custom_call.1} parent=1 // pred_check_branch
      %13 = sbr.rel (0) target = $region9
    $region8: #{tpu_custom_call.1} parent=1 // pred_region
      %s15 = ssub.s32 2560, 2560
      %16 = vsyncadd [#allocation3], %s15
      %s17 = sshll.u32 [#allocation2], 4
      %s18 = int_to_ptr.vmem [resolvable:$true] %s17
      %23 = dma.hbm_to_vmem [thread:$0]  %s1, 2560, %s18, [#allocation3], 128, 128, 8
    $region9: #{tpu_custom_call.1} parent=1 // pred_fallthru
      _
    // Predicated region
    $region10: #{tpu_custom_call.1} parent=1 // pred_check
      _
    $region11: #{tpu_custom_call.1} parent=1 // pred_check_branch
      %25 = sbr.rel (0) target = $region13
    $region12: #{tpu_custom_call.1} parent=1 // pred_region
      _
    $region13: #{tpu_custom_call.1} parent=1 // pred_fallthru
      _
    // Predicated region
    $region14: #{tpu_custom_call.1} parent=1 // pred_check
      _
    $region15: #{tpu_custom_call.1} parent=1 // pred_check_branch
      %27 = sbr.rel (0) target = $region17
    $region16: #{tpu_custom_call.1} parent=1 // pred_region
      %28 = dma.done [#allocation3], 2560
    $region17: #{tpu_custom_call.1} parent=1 // pred_fallthru
      _
    %v29 = vld [vmem:[#allocation2] sm:$0xff]
    %v30 = vld [vmem:[#allocation2 + $0x8] sm:$0xff]
    %v31 = vld [vmem:[#allocation2 + $0x10] sm:$0xff]
    %v32 = vld [vmem:[#allocation2 + $0x18] sm:$0xff]
    %v33 = vld [vmem:[#allocation2 + $0x20] sm:$0xff]
    %v34 = vld [vmem:[#allocation2 + $0x28] sm:$0xff]
    %v35 = vld [vmem:[#allocation2 + $0x30] sm:$0xff]
    %v36 = vld [vmem:[#allocation2 + $0x38] sm:$0xff]
    %v37 = vld [vmem:[#allocation2 + $0x40] sm:$0xff]
    %v38 = vld [vmem:[#allocation2 + $0x48] sm:$0xff]
    %v39 = vld [vmem:[#allocation2 + $0x50] sm:$0xff]
    %v40 = vld [vmem:[#allocation2 + $0x58] sm:$0xff]
    %v41 = vld [vmem:[#allocation2 + $0x60] sm:$0xff]
    %v42 = vld [vmem:[#allocation2 + $0x68] sm:$0xff]
    %v43 = vld [vmem:[#allocation2 + $0x70] sm:$0xff]
    %v44 = vld [vmem:[#allocation2 + $0x78] sm:$0xff]
    %v45 = vld [vmem:[#allocation2 + $0x80] sm:$0xff]
    %v46 = vld [vmem:[#allocation2 + $0x88] sm:$0xff]
    %v47 = vld [vmem:[#allocation2 + $0x90] sm:$0xff]
    %v48 = vld [vmem:[#allocation2 + $0x98] sm:$0xff]
    %v49 = vld [vmem:[%s2] sm:$0x1]
    %v50 = vld [vmem:[%s2 + $0x1] sm:$0x1]
    %v51 = vld [vmem:[%s2 + $0x2] sm:$0x1]
    %v52 = vld [vmem:[%s2 + $0x3] sm:$0x1]
    %v53 = vld [vmem:[%s2 + $0x4] sm:$0x1]
    %v54 = vld [vmem:[%s0] sm:$0xff]
    %v55 = vld [vmem:[%s0 + $0x8] sm:$0xff]
    %v56 = vld [vmem:[%s0 + $0x10] sm:$0xff]
    %v57 = vld [vmem:[%s0 + $0x18] sm:$0xff]
    %v58 = vld [vmem:[%s0 + $0x20] sm:$0xff]
    %v59 = vld [vmem:[%s0 + $0x28] sm:$0xff]
    %v60 = vld [vmem:[%s0 + $0x30] sm:$0xff]
    %v61 = vld [vmem:[%s0 + $0x38] sm:$0xff]
    %v62 = vlaneseq
    %v63 = vshrl.u32 %v62, 7
    %v64 = vsub.s32 0, %v63
    %v65 = vrot.slane %v49, %v64
    %vm66 = vcmask 130048
    %v68 = vsel %vm66, %v54, 0
    %v71 = vsel %vm66, %v55, 0
    %v74 = vsel %vm66, %v56, 0
    %v77 = vsel %vm66, %v57, 0
    %v80 = vsel %vm66, %v58, 0
    %v83 = vsel %vm66, %v59, 0
    %v86 = vsel %vm66, %v60, 0
    %v89 = vsel %vm66, %v61, 0
    %91 = vmatprep.subr.mxu0 0.0
    %92 = vmatpush1.msra.mxu0 %v29
    %93 = vmatprep.subr.mxu0 0.0
    %94 = vmatpush1.msra.mxu0 %v30
    %95 = vmatprep.subr.mxu0 0.0
    %96 = vmatpush1.msra.mxu0 0.0
    %97 = vmatprep.subr.mxu0 0.0
    %98 = vmatpush1.msra.mxu0 0.0
    %99 = vmatprep.subr.mxu0 0.0
    %100 = vmatpush1.msra.mxu0 0.0
    %101 = vmatprep.subr.mxu0 0.0
    %102 = vmatpush1.msra.mxu0 0.0
    %103 = vmatprep.subr.mxu0 0.0
    %104 = vmatpush1.msra.mxu0 0.0
    %105 = vmatprep.subr.mxu0 0.0
    %106 = vmatpush1.msra.mxu0 0.0
    %107 = vmatprep.subr.mxu0 0.0
    %108 = vmatpush1.msra.mxu0 0.0
    %109 = vmatprep.subr.mxu0 0.0
    %110 = vmatpush1.msra.mxu0 0.0
    %111 = vmatprep.subr.mxu0 0.0
    %112 = vmatpush1.msra.mxu0 0.0
    %113 = vmatprep.subr.mxu0 0.0
    %114 = vmatpush1.msra.mxu0 0.0
    %115 = vmatprep.subr.mxu0 0.0
    %116 = vmatpush1.msra.mxu0 0.0
    %117 = vmatprep.subr.mxu0 0.0
    %118 = vmatpush1.msra.mxu0 0.0
    %119 = vmatprep.subr.mxu0 0.0
    %120 = vmatpush1.msra.mxu0 0.0
    %121 = vmatprep.subr.mxu0 0.0
    %122 = vmatpush1.msra.mxu0 0.0
    %123 = vmatprep.subr.mxu0 0.0
    %124 = vmatpush1.msra.mxu0 0.0
    %125 = vmatprep.subr.mxu0 0.0
    %126 = vmatpush1.msra.mxu0 0.0
    %127 = vmatprep.subr.mxu0 0.0
    %128 = vmatpush1.msra.mxu0 0.0
    %129 = vmatprep.subr.mxu0 0.0
    %130 = vmatpush1.msra.mxu0 0.0
    %131 = vmatprep.subr.mxu0 0.0
    %132 = vmatpush1.msra.mxu0 0.0
    %133 = vmatprep.subr.mxu0 0.0
    %134 = vmatpush1.msra.mxu0 0.0
    %135 = vmatprep.subr.mxu0 0.0
    %136 = vmatpush1.msra.mxu0 0.0
    %137 = vmatprep.subr.mxu0 0.0
    %138 = vmatpush1.msra.mxu0 0.0
    %139 = vmatprep.subr.mxu0 0.0
    %140 = vmatpush1.msra.mxu0 0.0
    %141 = vmatprep.subr.mxu0 0.0
    %142 = vmatpush1.msra.mxu0 0.0
    %143 = vmatprep.subr.mxu0 0.0
    %144 = vmatpush1.msra.mxu0 0.0
    %145 = vmatprep.subr.mxu0 0.0
    %146 = vmatpush1.msra.mxu0 0.0
    %147 = vmatprep.subr.mxu0 0.0
    %148 = vmatpush1.msra.mxu0 0.0
    %149 = vmatprep.subr.mxu0 0.0
    %150 = vmatpush1.msra.mxu0 0.0
    %151 = vmatprep.subr.mxu0 0.0
    %152 = vmatpush1.msra.mxu0 0.0
    %153 = vmatprep.subr.mxu0 0.0
    %154 = vmatpush1.msra.mxu0 0.0
    %155 = vmatprep.mubr.f32.mxu0 0.0
    %156 = vmatmul.mubr.f32.gmra.mrb[0].mxu0 %v68
    %v157 = vpop.f32.mrb[0].mxu0
    %v158 = vadd.f32 %v65, %v157
    %v159 = vpop.f32.mrb[0].mxu0
    %160 = vmatprep.mubr.f32.mxu0 0.0
    %161 = vmatmul.mubr.f32.gmra.mrb[0].mxu0 %v71
    %v162 = vpop.f32.mrb[0].mxu0
    %v163 = vadd.f32 %v65, %v162
    %v164 = vpop.f32.mrb[0].mxu0
    %165 = vmatprep.mubr.f32.mxu0 0.0
    %166 = vmatmul.mubr.f32.gmra.mrb[0].mxu0 %v74
    %v167 = vpop.f32.mrb[0].mxu0
    %v168 = vadd.f32 %v65, %v167
    %v169 = vpop.f32.mrb[0].mxu0
    %170 = vmatprep.mubr.f32.mxu0 0.0
    %171 = vmatmul.mubr.f32.gmra.mrb[0].mxu0 %v77
    %v172 = vpop.f32.mrb[0].mxu0
    %v173 = vadd.f32 %v65, %v172
    %v174 = vpop.f32.mrb[0].mxu0
    %175 = vmatprep.mubr.f32.mxu0 0.0
    %176 = vmatmul.mubr.f32.gmra.mrb[0].mxu0 %v80
    %v177 = vpop.f32.mrb[0].mxu0
    %v178 = vadd.f32 %v65, %v177
    %v179 = vpop.f32.mrb[0].mxu0
    %180 = vmatprep.mubr.f32.mxu0 0.0
    %181 = vmatmul.mubr.f32.gmra.mrb[0].mxu0 %v83
    %v182 = vpop.f32.mrb[0].mxu0
    %v183 = vadd.f32 %v65, %v182
    %v184 = vpop.f32.mrb[0].mxu0
    %185 = vmatprep.mubr.f32.mxu0 0.0
    %186 = vmatmul.mubr.f32.gmra.mrb[0].mxu0 %v86
    %v187 = vpop.f32.mrb[0].mxu0
    %v188 = vadd.f32 %v65, %v187
    %v189 = vpop.f32.mrb[0].mxu0
    %190 = vmatprep.mubr.f32.mxu0 0.0
    %191 = vmatmul.mubr.f32.gmra.mrb[0].mxu0 %v89
    %v192 = vpop.f32.mrb[0].mxu0
    %v193 = vadd.f32 %v65, %v192
    %v194 = vpop.f32.mrb[0].mxu0
    %195 = vdwg.mxu0
    %vm196 = vcmp.gt.f32.partialorder %v158, 0.0
    %vm197 = vcmp.gt.f32.partialorder %v163, 0.0
    %vm198 = vcmp.gt.f32.partialorder %v168, 0.0
    %vm199 = vcmp.gt.f32.partialorder %v173, 0.0
    %vm200 = vcmp.gt.f32.partialorder %v178, 0.0
    %vm201 = vcmp.gt.f32.partialorder %v183, 0.0
    %vm202 = vcmp.gt.f32.partialorder %v188, 0.0
    %vm203 = vcmp.gt.f32.partialorder %v193, 0.0
    %v204 = vmul.f32 %v158, 0.01
    %v205 = vmul.f32 %v163, 0.01
    %v206 = vmul.f32 %v168, 0.01
    %v207 = vmul.f32 %v173, 0.01
    %v208 = vmul.f32 %v178, 0.01
    %v209 = vmul.f32 %v183, 0.01
    %v210 = vmul.f32 %v188, 0.01
    %v211 = vmul.f32 %v193, 0.01
    %v212 = vsel %vm196, %v158, %v204
    %v213 = vsel %vm197, %v163, %v205
    %v214 = vsel %vm198, %v168, %v206
    %v215 = vsel %vm199, %v173, %v207
    %v216 = vsel %vm200, %v178, %v208
    %v217 = vsel %vm201, %v183, %v209
    %v218 = vsel %vm202, %v188, %v210
    %v219 = vsel %vm203, %v193, %v211
    %v220 = vlaneseq
    %v221 = vshrl.u32 %v220, 7
    %v222 = vsub.s32 0, %v221
    %v223 = vrot.slane %v50, %v222
    %vm224 = vcmask 261120
    %v226 = vsel %vm224, %v212, 0
    %v229 = vsel %vm224, %v213, 0
    %v232 = vsel %vm224, %v214, 0
    %v235 = vsel %vm224, %v215, 0
    %v238 = vsel %vm224, %v216, 0
    %v241 = vsel %vm224, %v217, 0
    %v244 = vsel %vm224, %v218, 0
    %v247 = vsel %vm224, %v219, 0
    %249 = vmatprep.subr.mxu0 0.0
    %250 = vmatpush1.msra.mxu0 %v31
    %251 = vmatprep.subr.mxu0 0.0
    %252 = vmatpush1.msra.mxu0 %v32
    %253 = vmatprep.subr.mxu0 0.0
    %254 = vmatpush1.msra.mxu0 %v33
    %255 = vmatprep.subr.mxu0 0.0
    %256 = vmatpush1.msra.mxu0 %v34
    %257 = vmatprep.subr.mxu0 0.0
    %258 = vmatpush1.msra.mxu0 0.0
    %259 = vmatprep.subr.mxu0 0.0
    %260 = vmatpush1.msra.mxu0 0.0
    %261 = vmatprep.subr.mxu0 0.0
    %262 = vmatpush1.msra.mxu0 0.0
    %263 = vmatprep.subr.mxu0 0.0
    %264 = vmatpush1.msra.mxu0 0.0
    %265 = vmatprep.subr.mxu0 0.0
    %266 = vmatpush1.msra.mxu0 0.0
    %267 = vmatprep.subr.mxu0 0.0
    %268 = vmatpush1.msra.mxu0 0.0
    %269 = vmatprep.subr.mxu0 0.0
    %270 = vmatpush1.msra.mxu0 0.0
    %271 = vmatprep.subr.mxu0 0.0
    %272 = vmatpush1.msra.mxu0 0.0
    %273 = vmatprep.subr.mxu0 0.0
    %274 = vmatpush1.msra.mxu0 0.0
    %275 = vmatprep.subr.mxu0 0.0
    %276 = vmatpush1.msra.mxu0 0.0
    %277 = vmatprep.subr.mxu0 0.0
    %278 = vmatpush1.msra.mxu0 0.0
    %279 = vmatprep.subr.mxu0 0.0
    %280 = vmatpush1.msra.mxu0 0.0
    %281 = vmatprep.subr.mxu0 0.0
    %282 = vmatpush1.msra.mxu0 0.0
    %283 = vmatprep.subr.mxu0 0.0
    %284 = vmatpush1.msra.mxu0 0.0
    %285 = vmatprep.subr.mxu0 0.0
    %286 = vmatpush1.msra.mxu0 0.0
    %287 = vmatprep.subr.mxu0 0.0
    %288 = vmatpush1.msra.mxu0 0.0
    %289 = vmatprep.subr.mxu0 0.0
    %290 = vmatpush1.msra.mxu0 0.0
    %291 = vmatprep.subr.mxu0 0.0
    %292 = vmatpush1.msra.mxu0 0.0
    %293 = vmatprep.subr.mxu0 0.0
    %294 = vmatpush1.msra.mxu0 0.0
    %295 = vmatprep.subr.mxu0 0.0
    %296 = vmatpush1.msra.mxu0 0.0
    %297 = vmatprep.subr.mxu0 0.0
    %298 = vmatpush1.msra.mxu0 0.0
    %299 = vmatprep.subr.mxu0 0.0
    %300 = vmatpush1.msra.mxu0 0.0
    %301 = vmatprep.subr.mxu0 0.0
    %302 = vmatpush1.msra.mxu0 0.0
    %303 = vmatprep.subr.mxu0 0.0
    %304 = vmatpush1.msra.mxu0 0.0
    %305 = vmatprep.subr.mxu0 0.0
    %306 = vmatpush1.msra.mxu0 0.0
    %307 = vmatprep.subr.mxu0 0.0
    %308 = vmatpush1.msra.mxu0 0.0
    %309 = vmatprep.subr.mxu0 0.0
    %310 = vmatpush1.msra.mxu0 0.0
    %311 = vmatprep.subr.mxu0 0.0
    %312 = vmatpush1.msra.mxu0 0.0
    %313 = vmatprep.mubr.f32.mxu0 0.0
    %314 = vmatmul.mubr.f32.gmra.mrb[0].mxu0 %v226
    %v315 = vpop.f32.mrb[0].mxu0
    %v316 = vadd.f32 %v223, %v315
    %v317 = vpop.f32.mrb[0].mxu0
    %318 = vmatprep.mubr.f32.mxu0 0.0
    %319 = vmatmul.mubr.f32.gmra.mrb[0].mxu0 %v229
    %v320 = vpop.f32.mrb[0].mxu0
    %v321 = vadd.f32 %v223, %v320
    %v322 = vpop.f32.mrb[0].mxu0
    %323 = vmatprep.mubr.f32.mxu0 0.0
    %324 = vmatmul.mubr.f32.gmra.mrb[0].mxu0 %v232
    %v325 = vpop.f32.mrb[0].mxu0
    %v326 = vadd.f32 %v223, %v325
    %v327 = vpop.f32.mrb[0].mxu0
    %328 = vmatprep.mubr.f32.mxu0 0.0
    %329 = vmatmul.mubr.f32.gmra.mrb[0].mxu0 %v235
    %v330 = vpop.f32.mrb[0].mxu0
    %v331 = vadd.f32 %v223, %v330
    %v332 = vpop.f32.mrb[0].mxu0
    %333 = vmatprep.mubr.f32.mxu0 0.0
    %334 = vmatmul.mubr.f32.gmra.mrb[0].mxu0 %v238
    %v335 = vpop.f32.mrb[0].mxu0
    %v336 = vadd.f32 %v223, %v335
    %v337 = vpop.f32.mrb[0].mxu0
    %338 = vmatprep.mubr.f32.mxu0 0.0
    %339 = vmatmul.mubr.f32.gmra.mrb[0].mxu0 %v241
    %v340 = vpop.f32.mrb[0].mxu0
    %v341 = vadd.f32 %v223, %v340
    %v342 = vpop.f32.mrb[0].mxu0
    %343 = vmatprep.mubr.f32.mxu0 0.0
    %344 = vmatmul.mubr.f32.gmra.mrb[0].mxu0 %v244
    %v345 = vpop.f32.mrb[0].mxu0
    %v346 = vadd.f32 %v223, %v345
    %v347 = vpop.f32.mrb[0].mxu0
    %348 = vmatprep.mubr.f32.mxu0 0.0
    %349 = vmatmul.mubr.f32.gmra.mrb[0].mxu0 %v247
    %v350 = vpop.f32.mrb[0].mxu0
    %v351 = vadd.f32 %v223, %v350
    %v352 = vpop.f32.mrb[0].mxu0
    %353 = vdwg.mxu0
    %v355 = vsel %vm224, 0.0, 0
    %357 = vmatprep.subr.mxu0 0.0
    %358 = vmatpush1.msra.mxu0 %v35
    %359 = vmatprep.subr.mxu0 0.0
    %360 = vmatpush1.msra.mxu0 %v36
    %361 = vmatprep.subr.mxu0 0.0
    %362 = vmatpush1.msra.mxu0 %v37
    %363 = vmatprep.subr.mxu0 0.0
    %364 = vmatpush1.msra.mxu0 %v38
    %365 = vmatprep.subr.mxu0 0.0
    %366 = vmatpush1.msra.mxu0 0.0
    %367 = vmatprep.subr.mxu0 0.0
    %368 = vmatpush1.msra.mxu0 0.0
    %369 = vmatprep.subr.mxu0 0.0
    %370 = vmatpush1.msra.mxu0 0.0
    %371 = vmatprep.subr.mxu0 0.0
    %372 = vmatpush1.msra.mxu0 0.0
    %373 = vmatprep.subr.mxu0 0.0
    %374 = vmatpush1.msra.mxu0 0.0
    %375 = vmatprep.subr.mxu0 0.0
    %376 = vmatpush1.msra.mxu0 0.0
    %377 = vmatprep.subr.mxu0 0.0
    %378 = vmatpush1.msra.mxu0 0.0
    %379 = vmatprep.subr.mxu0 0.0
    %380 = vmatpush1.msra.mxu0 0.0
    %381 = vmatprep.subr.mxu0 0.0
    %382 = vmatpush1.msra.mxu0 0.0
    %383 = vmatprep.subr.mxu0 0.0
    %384 = vmatpush1.msra.mxu0 0.0
    %385 = vmatprep.subr.mxu0 0.0
    %386 = vmatpush1.msra.mxu0 0.0
    %387 = vmatprep.subr.mxu0 0.0
    %388 = vmatpush1.msra.mxu0 0.0
    %389 = vmatprep.subr.mxu0 0.0
    %390 = vmatpush1.msra.mxu0 0.0
    %391 = vmatprep.subr.mxu0 0.0
    %392 = vmatpush1.msra.mxu0 0.0
    %393 = vmatprep.subr.mxu0 0.0
    %394 = vmatpush1.msra.mxu0 0.0
    %395 = vmatprep.subr.mxu0 0.0
    %396 = vmatpush1.msra.mxu0 0.0
    %397 = vmatprep.subr.mxu0 0.0
    %398 = vmatpush1.msra.mxu0 0.0
    %399 = vmatprep.subr.mxu0 0.0
    %400 = vmatpush1.msra.mxu0 0.0
    %401 = vmatprep.subr.mxu0 0.0
    %402 = vmatpush1.msra.mxu0 0.0
    %403 = vmatprep.subr.mxu0 0.0
    %404 = vmatpush1.msra.mxu0 0.0
    %405 = vmatprep.subr.mxu0 0.0
    %406 = vmatpush1.msra.mxu0 0.0
    %407 = vmatprep.subr.mxu0 0.0
    %408 = vmatpush1.msra.mxu0 0.0
    %409 = vmatprep.subr.mxu0 0.0
    %410 = vmatpush1.msra.mxu0 0.0
    %411 = vmatprep.subr.mxu0 0.0
    %412 = vmatpush1.msra.mxu0 0.0
    %413 = vmatprep.subr.mxu0 0.0
    %414 = vmatpush1.msra.mxu0 0.0
    %415 = vmatprep.subr.mxu0 0.0
    %416 = vmatpush1.msra.mxu0 0.0
    %417 = vmatprep.subr.mxu0 0.0
    %418 = vmatpush1.msra.mxu0 0.0
    %419 = vmatprep.subr.mxu0 0.0
    %420 = vmatpush1.msra.mxu0 0.0
    %421 = vmatprep.mubr.f32.mxu0 0.0
    %422 = vmatmul.mubr.f32.gmra.mrb[0].mxu0 %v355
    %v423 = vpop.f32.mrb[0].mxu0
    %v424 = vadd.f32 0.0, %v423
    %v425 = vpop.f32.mrb[0].mxu0
    %426 = vdwg.mxu0
    %v427 = vadd.f32 %v316, %v424
    %v428 = vtanh.pop %v427
    %v430 = vsel %vm224, %v428, 0
    %432 = vmatprep.subr.mxu0 0.0
    %433 = vmatpush1.msra.mxu0 %v35
    %434 = vmatprep.subr.mxu0 0.0
    %435 = vmatpush1.msra.mxu0 %v36
    %436 = vmatprep.subr.mxu0 0.0
    %437 = vmatpush1.msra.mxu0 %v37
    %438 = vmatprep.subr.mxu0 0.0
    %439 = vmatpush1.msra.mxu0 %v38
    %440 = vmatprep.subr.mxu0 0.0
    %441 = vmatpush1.msra.mxu0 0.0
    %442 = vmatprep.subr.mxu0 0.0
    %443 = vmatpush1.msra.mxu0 0.0
    %444 = vmatprep.subr.mxu0 0.0
    %445 = vmatpush1.msra.mxu0 0.0
    %446 = vmatprep.subr.mxu0 0.0
    %447 = vmatpush1.msra.mxu0 0.0
    %448 = vmatprep.subr.mxu0 0.0
    %449 = vmatpush1.msra.mxu0 0.0
    %450 = vmatprep.subr.mxu0 0.0
    %451 = vmatpush1.msra.mxu0 0.0
    %452 = vmatprep.subr.mxu0 0.0
    %453 = vmatpush1.msra.mxu0 0.0
    %454 = vmatprep.subr.mxu0 0.0
    %455 = vmatpush1.msra.mxu0 0.0
    %456 = vmatprep.subr.mxu0 0.0
    %457 = vmatpush1.msra.mxu0 0.0
    %458 = vmatprep.subr.mxu0 0.0
    %459 = vmatpush1.msra.mxu0 0.0
    %460 = vmatprep.subr.mxu0 0.0
    %461 = vmatpush1.msra.mxu0 0.0
    %462 = vmatprep.subr.mxu0 0.0
    %463 = vmatpush1.msra.mxu0 0.0
    %464 = vmatprep.subr.mxu0 0.0
    %465 = vmatpush1.msra.mxu0 0.0
    %466 = vmatprep.subr.mxu0 0.0
    %467 = vmatpush1.msra.mxu0 0.0
    %468 = vmatprep.subr.mxu0 0.0
    %469 = vmatpush1.msra.mxu0 0.0
    %470 = vmatprep.subr.mxu0 0.0
    %471 = vmatpush1.msra.mxu0 0.0
    %472 = vmatprep.subr.mxu0 0.0
    %473 = vmatpush1.msra.mxu0 0.0
    %474 = vmatprep.subr.mxu0 0.0
    %475 = vmatpush1.msra.mxu0 0.0
    %476 = vmatprep.subr.mxu0 0.0
    %477 = vmatpush1.msra.mxu0 0.0
    %478 = vmatprep.subr.mxu0 0.0
    %479 = vmatpush1.msra.mxu0 0.0
    %480 = vmatprep.subr.mxu0 0.0
    %481 = vmatpush1.msra.mxu0 0.0
    %482 = vmatprep.subr.mxu0 0.0
    %483 = vmatpush1.msra.mxu0 0.0
    %484 = vmatprep.subr.mxu0 0.0
    %485 = vmatpush1.msra.mxu0 0.0
    %486 = vmatprep.subr.mxu0 0.0
    %487 = vmatpush1.msra.mxu0 0.0
    %488 = vmatprep.subr.mxu0 0.0
    %489 = vmatpush1.msra.mxu0 0.0
    %490 = vmatprep.subr.mxu0 0.0
    %491 = vmatpush1.msra.mxu0 0.0
    %492 = vmatprep.subr.mxu0 0.0
    %493 = vmatpush1.msra.mxu0 0.0
    %494 = vmatprep.subr.mxu0 0.0
    %495 = vmatpush1.msra.mxu0 0.0
    %496 = vmatprep.mubr.f32.mxu0 0.0
    %497 = vmatmul.mubr.f32.gmra.mrb[0].mxu0 %v430
    %v498 = vpop.f32.mrb[0].mxu0
    %v499 = vadd.f32 0.0, %v498
    %v500 = vpop.f32.mrb[0].mxu0
    %501 = vdwg.mxu0
    %v502 = vadd.f32 %v321, %v499
    %v503 = vtanh.pop %v502
    %v504 = vsel %vm66, 0.0, 0
    %506 = vmatprep.subr.mxu0 0.0
    %507 = vmatpush1.msra.mxu0 %v43
    %508 = vmatprep.subr.mxu0 0.0
    %509 = vmatpush1.msra.mxu0 %v44
    %510 = vmatprep.subr.mxu0 0.0
    %511 = vmatpush1.msra.mxu0 0.0
    %512 = vmatprep.subr.mxu0 0.0
    %513 = vmatpush1.msra.mxu0 0.0
    %514 = vmatprep.subr.mxu0 0.0
    %515 = vmatpush1.msra.mxu0 0.0
    %516 = vmatprep.subr.mxu0 0.0
    %517 = vmatpush1.msra.mxu0 0.0
    %518 = vmatprep.subr.mxu0 0.0
    %519 = vmatpush1.msra.mxu0 0.0
    %520 = vmatprep.subr.mxu0 0.0
    %521 = vmatpush1.msra.mxu0 0.0
    %522 = vmatprep.subr.mxu0 0.0
    %523 = vmatpush1.msra.mxu0 0.0
    %524 = vmatprep.subr.mxu0 0.0
    %525 = vmatpush1.msra.mxu0 0.0
    %526 = vmatprep.subr.mxu0 0.0
    %527 = vmatpush1.msra.mxu0 0.0
    %528 = vmatprep.subr.mxu0 0.0
    %529 = vmatpush1.msra.mxu0 0.0
    %530 = vmatprep.subr.mxu0 0.0
    %531 = vmatpush1.msra.mxu0 0.0
    %532 = vmatprep.subr.mxu0 0.0
    %533 = vmatpush1.msra.mxu0 0.0
    %534 = vmatprep.subr.mxu0 0.0
    %535 = vmatpush1.msra.mxu0 0.0
    %536 = vmatprep.subr.mxu0 0.0
    %537 = vmatpush1.msra.mxu0 0.0
    %538 = vmatprep.subr.mxu0 0.0
    %539 = vmatpush1.msra.mxu0 0.0
    %540 = vmatprep.subr.mxu0 0.0
    %541 = vmatpush1.msra.mxu0 0.0
    %542 = vmatprep.subr.mxu0 0.0
    %543 = vmatpush1.msra.mxu0 0.0
    %544 = vmatprep.subr.mxu0 0.0
    %545 = vmatpush1.msra.mxu0 0.0
    %546 = vmatprep.subr.mxu0 0.0
    %547 = vmatpush1.msra.mxu0 0.0
    %548 = vmatprep.subr.mxu0 0.0
    %549 = vmatpush1.msra.mxu0 0.0
    %550 = vmatprep.subr.mxu0 0.0
    %551 = vmatpush1.msra.mxu0 0.0
    %552 = vmatprep.subr.mxu0 0.0
    %553 = vmatpush1.msra.mxu0 0.0
    %554 = vmatprep.subr.mxu0 0.0
    %555 = vmatpush1.msra.mxu0 0.0
    %556 = vmatprep.subr.mxu0 0.0
    %557 = vmatpush1.msra.mxu0 0.0
    %558 = vmatprep.subr.mxu0 0.0
    %559 = vmatpush1.msra.mxu0 0.0
    %560 = vmatprep.subr.mxu0 0.0
    %561 = vmatpush1.msra.mxu0 0.0
    %562 = vmatprep.subr.mxu0 0.0
    %563 = vmatpush1.msra.mxu0 0.0
    %564 = vmatprep.subr.mxu0 0.0
    %565 = vmatpush1.msra.mxu0 0.0
    %566 = vmatprep.subr.mxu0 0.0
    %567 = vmatpush1.msra.mxu0 0.0
    %568 = vmatprep.subr.mxu0 0.0
    %569 = vmatpush1.msra.mxu0 0.0
    %570 = vmatprep.mubr.f32.mxu0 0.0
    %571 = vmatmul.mubr.f32.gmra.mrb[0].mxu0 %v504
    %v572 = vpop.f32.mrb[0].mxu0
    %v573 = vadd.f32 0.0, %v572
    %v574 = vpop.f32.mrb[0].mxu0
    %575 = vdwg.mxu0
    %576 = vmatprep.subr.mxu0 0.0
    %577 = vmatpush1.msra.mxu0 %v39
    %578 = vmatprep.subr.mxu0 0.0
    %579 = vmatpush1.msra.mxu0 %v40
    %580 = vmatprep.subr.mxu0 0.0
    %581 = vmatpush1.msra.mxu0 %v41
    %582 = vmatprep.subr.mxu0 0.0
    %583 = vmatpush1.msra.mxu0 %v42
    %584 = vmatprep.subr.mxu0 0.0
    %585 = vmatpush1.msra.mxu0 0.0
    %586 = vmatprep.subr.mxu0 0.0
    %587 = vmatpush1.msra.mxu0 0.0
    %588 = vmatprep.subr.mxu0 0.0
    %589 = vmatpush1.msra.mxu0 0.0
    %590 = vmatprep.subr.mxu0 0.0
    %591 = vmatpush1.msra.mxu0 0.0
    %592 = vmatprep.subr.mxu0 0.0
    %593 = vmatpush1.msra.mxu0 0.0
    %594 = vmatprep.subr.mxu0 0.0
    %595 = vmatpush1.msra.mxu0 0.0
    %596 = vmatprep.subr.mxu0 0.0
    %597 = vmatpush1.msra.mxu0 0.0
    %598 = vmatprep.subr.mxu0 0.0
    %599 = vmatpush1.msra.mxu0 0.0
    %600 = vmatprep.subr.mxu0 0.0
    %601 = vmatpush1.msra.mxu0 0.0
    %602 = vmatprep.subr.mxu0 0.0
    %603 = vmatpush1.msra.mxu0 0.0
    %604 = vmatprep.subr.mxu0 0.0
    %605 = vmatpush1.msra.mxu0 0.0
    %606 = vmatprep.subr.mxu0 0.0
    %607 = vmatpush1.msra.mxu0 0.0
    %608 = vmatprep.subr.mxu0 0.0
    %609 = vmatpush1.msra.mxu0 0.0
    %610 = vmatprep.subr.mxu0 0.0
    %611 = vmatpush1.msra.mxu0 0.0
    %612 = vmatprep.subr.mxu0 0.0
    %613 = vmatpush1.msra.mxu0 0.0
    %614 = vmatprep.subr.mxu0 0.0
    %615 = vmatpush1.msra.mxu0 0.0
    %616 = vmatprep.subr.mxu0 0.0
    %617 = vmatpush1.msra.mxu0 0.0
    %618 = vmatprep.subr.mxu0 0.0
    %619 = vmatpush1.msra.mxu0 0.0
    %620 = vmatprep.subr.mxu0 0.0
    %621 = vmatpush1.msra.mxu0 0.0
    %622 = vmatprep.subr.mxu0 0.0
    %623 = vmatpush1.msra.mxu0 0.0
    %624 = vmatprep.subr.mxu0 0.0
    %625 = vmatpush1.msra.mxu0 0.0
    %626 = vmatprep.subr.mxu0 0.0
    %627 = vmatpush1.msra.mxu0 0.0
    %628 = vmatprep.subr.mxu0 0.0
    %629 = vmatpush1.msra.mxu0 0.0
    %630 = vmatprep.subr.mxu0 0.0
    %631 = vmatpush1.msra.mxu0 0.0
    %632 = vmatprep.subr.mxu0 0.0
    %633 = vmatpush1.msra.mxu0 0.0
    %634 = vmatprep.subr.mxu0 0.0
    %635 = vmatpush1.msra.mxu0 0.0
    %636 = vmatprep.subr.mxu0 0.0
    %637 = vmatpush1.msra.mxu0 0.0
    %638 = vmatprep.subr.mxu0 0.0
    %639 = vmatpush1.msra.mxu0 0.0
    %640 = vmatprep.mubr.f32.mxu0 0.0
    %641 = vmatmul.mubr.f32.gmra.mrb[0].mxu0 %v430
    %v642 = vpop.f32.mrb[0].mxu0
    %v643 = vadd.f32 %v573, %v642
    %v644 = vpop.f32.mrb[0].mxu0
    %645 = vdwg.mxu0
    %v646 = vlaneseq
    %v647 = vshrl.u32 %v646, 7
    %v648 = vsub.s32 0, %v647
    %v649 = vrot.slane %v51, %v648
    %v650 = vadd.f32 %v643, %v649
    %v651 = vtanh.pop %v650
    %v653 = vsel %vm224, %v503, 0
    %655 = vmatprep.subr.mxu0 0.0
    %656 = vmatpush1.msra.mxu0 %v35
    %657 = vmatprep.subr.mxu0 0.0
    %658 = vmatpush1.msra.mxu0 %v36
    %659 = vmatprep.subr.mxu0 0.0
    %660 = vmatpush1.msra.mxu0 %v37
    %661 = vmatprep.subr.mxu0 0.0
    %662 = vmatpush1.msra.mxu0 %v38
    %663 = vmatprep.subr.mxu0 0.0
    %664 = vmatpush1.msra.mxu0 0.0
    %665 = vmatprep.subr.mxu0 0.0
    %666 = vmatpush1.msra.mxu0 0.0
    %667 = vmatprep.subr.mxu0 0.0
    %668 = vmatpush1.msra.mxu0 0.0
    %669 = vmatprep.subr.mxu0 0.0
    %670 = vmatpush1.msra.mxu0 0.0
    %671 = vmatprep.subr.mxu0 0.0
    %672 = vmatpush1.msra.mxu0 0.0
    %673 = vmatprep.subr.mxu0 0.0
    %674 = vmatpush1.msra.mxu0 0.0
    %675 = vmatprep.subr.mxu0 0.0
    %676 = vmatpush1.msra.mxu0 0.0
    %677 = vmatprep.subr.mxu0 0.0
    %678 = vmatpush1.msra.mxu0 0.0
    %679 = vmatprep.subr.mxu0 0.0
    %680 = vmatpush1.msra.mxu0 0.0
    %681 = vmatprep.subr.mxu0 0.0
    %682 = vmatpush1.msra.mxu0 0.0
    %683 = vmatprep.subr.mxu0 0.0
    %684 = vmatpush1.msra.mxu0 0.0
    %685 = vmatprep.subr.mxu0 0.0
    %686 = vmatpush1.msra.mxu0 0.0
    %687 = vmatprep.subr.mxu0 0.0
    %688 = vmatpush1.msra.mxu0 0.0
    %689 = vmatprep.subr.mxu0 0.0
    %690 = vmatpush1.msra.mxu0 0.0
    %691 = vmatprep.subr.mxu0 0.0
    %692 = vmatpush1.msra.mxu0 0.0
    %693 = vmatprep.subr.mxu0 0.0
    %694 = vmatpush1.msra.mxu0 0.0
    %695 = vmatprep.subr.mxu0 0.0
    %696 = vmatpush1.msra.mxu0 0.0
    %697 = vmatprep.subr.mxu0 0.0
    %698 = vmatpush1.msra.mxu0 0.0
    %699 = vmatprep.subr.mxu0 0.0
    %700 = vmatpush1.msra.mxu0 0.0
    %701 = vmatprep.subr.mxu0 0.0
    %702 = vmatpush1.msra.mxu0 0.0
    %703 = vmatprep.subr.mxu0 0.0
    %704 = vmatpush1.msra.mxu0 0.0
    %705 = vmatprep.subr.mxu0 0.0
    %706 = vmatpush1.msra.mxu0 0.0
    %707 = vmatprep.subr.mxu0 0.0
    %708 = vmatpush1.msra.mxu0 0.0
    %709 = vmatprep.subr.mxu0 0.0
    %710 = vmatpush1.msra.mxu0 0.0
    %711 = vmatprep.subr.mxu0 0.0
    %712 = vmatpush1.msra.mxu0 0.0
    %713 = vmatprep.subr.mxu0 0.0
    %714 = vmatpush1.msra.mxu0 0.0
    %715 = vmatprep.subr.mxu0 0.0
    %716 = vmatpush1.msra.mxu0 0.0
    %717 = vmatprep.subr.mxu0 0.0
    %718 = vmatpush1.msra.mxu0 0.0
    %719 = vmatprep.mubr.f32.mxu0 0.0
    %720 = vmatmul.mubr.f32.gmra.mrb[0].mxu0 %v653
    %v721 = vpop.f32.mrb[0].mxu0
    %v722 = vadd.f32 0.0, %v721
    %v723 = vpop.f32.mrb[0].mxu0
    %724 = vdwg.mxu0
    %v725 = vadd.f32 %v326, %v722
    %v726 = vtanh.pop %v725
    %v728 = vsel %vm66, %v651, 0
    %730 = vmatprep.subr.mxu0 0.0
    %731 = vmatpush1.msra.mxu0 %v43
    %732 = vmatprep.subr.mxu0 0.0
    %733 = vmatpush1.msra.mxu0 %v44
    %734 = vmatprep.subr.mxu0 0.0
    %735 = vmatpush1.msra.mxu0 0.0
    %736 = vmatprep.subr.mxu0 0.0
    %737 = vmatpush1.msra.mxu0 0.0
    %738 = vmatprep.subr.mxu0 0.0
    %739 = vmatpush1.msra.mxu0 0.0
    %740 = vmatprep.subr.mxu0 0.0
    %741 = vmatpush1.msra.mxu0 0.0
    %742 = vmatprep.subr.mxu0 0.0
    %743 = vmatpush1.msra.mxu0 0.0
    %744 = vmatprep.subr.mxu0 0.0
    %745 = vmatpush1.msra.mxu0 0.0
    %746 = vmatprep.subr.mxu0 0.0
    %747 = vmatpush1.msra.mxu0 0.0
    %748 = vmatprep.subr.mxu0 0.0
    %749 = vmatpush1.msra.mxu0 0.0
    %750 = vmatprep.subr.mxu0 0.0
    %751 = vmatpush1.msra.mxu0 0.0
    %752 = vmatprep.subr.mxu0 0.0
    %753 = vmatpush1.msra.mxu0 0.0
    %754 = vmatprep.subr.mxu0 0.0
    %755 = vmatpush1.msra.mxu0 0.0
    %756 = vmatprep.subr.mxu0 0.0
    %757 = vmatpush1.msra.mxu0 0.0
    %758 = vmatprep.subr.mxu0 0.0
    %759 = vmatpush1.msra.mxu0 0.0
    %760 = vmatprep.subr.mxu0 0.0
    %761 = vmatpush1.msra.mxu0 0.0
    %762 = vmatprep.subr.mxu0 0.0
    %763 = vmatpush1.msra.mxu0 0.0
    %764 = vmatprep.subr.mxu0 0.0
    %765 = vmatpush1.msra.mxu0 0.0
    %766 = vmatprep.subr.mxu0 0.0
    %767 = vmatpush1.msra.mxu0 0.0
    %768 = vmatprep.subr.mxu0 0.0
    %769 = vmatpush1.msra.mxu0 0.0
    %770 = vmatprep.subr.mxu0 0.0
    %771 = vmatpush1.msra.mxu0 0.0
    %772 = vmatprep.subr.mxu0 0.0
    %773 = vmatpush1.msra.mxu0 0.0
    %774 = vmatprep.subr.mxu0 0.0
    %775 = vmatpush1.msra.mxu0 0.0
    %776 = vmatprep.subr.mxu0 0.0
    %777 = vmatpush1.msra.mxu0 0.0
    %778 = vmatprep.subr.mxu0 0.0
    %779 = vmatpush1.msra.mxu0 0.0
    %780 = vmatprep.subr.mxu0 0.0
    %781 = vmatpush1.msra.mxu0 0.0
    %782 = vmatprep.subr.mxu0 0.0
    %783 = vmatpush1.msra.mxu0 0.0
    %784 = vmatprep.subr.mxu0 0.0
    %785 = vmatpush1.msra.mxu0 0.0
    %786 = vmatprep.subr.mxu0 0.0
    %787 = vmatpush1.msra.mxu0 0.0
    %788 = vmatprep.subr.mxu0 0.0
    %789 = vmatpush1.msra.mxu0 0.0
    %790 = vmatprep.subr.mxu0 0.0
    %791 = vmatpush1.msra.mxu0 0.0
    %792 = vmatprep.subr.mxu0 0.0
    %793 = vmatpush1.msra.mxu0 0.0
    %794 = vmatprep.mubr.f32.mxu0 0.0
    %795 = vmatmul.mubr.f32.gmra.mrb[0].mxu0 %v728
    %v796 = vpop.f32.mrb[0].mxu0
    %v797 = vadd.f32 0.0, %v796
    %v798 = vpop.f32.mrb[0].mxu0
    %799 = vdwg.mxu0
    %800 = vmatprep.subr.mxu0 0.0
    %801 = vmatpush1.msra.mxu0 %v39
    %802 = vmatprep.subr.mxu0 0.0
    %803 = vmatpush1.msra.mxu0 %v40
    %804 = vmatprep.subr.mxu0 0.0
    %805 = vmatpush1.msra.mxu0 %v41
    %806 = vmatprep.subr.mxu0 0.0
    %807 = vmatpush1.msra.mxu0 %v42
    %808 = vmatprep.subr.mxu0 0.0
    %809 = vmatpush1.msra.mxu0 0.0
    %810 = vmatprep.subr.mxu0 0.0
    %811 = vmatpush1.msra.mxu0 0.0
    %812 = vmatprep.subr.mxu0 0.0
    %813 = vmatpush1.msra.mxu0 0.0
    %814 = vmatprep.subr.mxu0 0.0
    %815 = vmatpush1.msra.mxu0 0.0
    %816 = vmatprep.subr.mxu0 0.0
    %817 = vmatpush1.msra.mxu0 0.0
    %818 = vmatprep.subr.mxu0 0.0
    %819 = vmatpush1.msra.mxu0 0.0
    %820 = vmatprep.subr.mxu0 0.0
    %821 = vmatpush1.msra.mxu0 0.0
    %822 = vmatprep.subr.mxu0 0.0
    %823 = vmatpush1.msra.mxu0 0.0
    %824 = vmatprep.subr.mxu0 0.0
    %825 = vmatpush1.msra.mxu0 0.0
    %826 = vmatprep.subr.mxu0 0.0
    %827 = vmatpush1.msra.mxu0 0.0
    %828 = vmatprep.subr.mxu0 0.0
    %829 = vmatpush1.msra.mxu0 0.0
    %830 = vmatprep.subr.mxu0 0.0
    %831 = vmatpush1.msra.mxu0 0.0
    %832 = vmatprep.subr.mxu0 0.0
    %833 = vmatpush1.msra.mxu0 0.0
    %834 = vmatprep.subr.mxu0 0.0
    %835 = vmatpush1.msra.mxu0 0.0
    %836 = vmatprep.subr.mxu0 0.0
    %837 = vmatpush1.msra.mxu0 0.0
    %838 = vmatprep.subr.mxu0 0.0
    %839 = vmatpush1.msra.mxu0 0.0
    %840 = vmatprep.subr.mxu0 0.0
    %841 = vmatpush1.msra.mxu0 0.0
    %842 = vmatprep.subr.mxu0 0.0
    %843 = vmatpush1.msra.mxu0 0.0
    %844 = vmatprep.subr.mxu0 0.0
    %845 = vmatpush1.msra.mxu0 0.0
    %846 = vmatprep.subr.mxu0 0.0
    %847 = vmatpush1.msra.mxu0 0.0
    %848 = vmatprep.subr.mxu0 0.0
    %849 = vmatpush1.msra.mxu0 0.0
    %850 = vmatprep.subr.mxu0 0.0
    %851 = vmatpush1.msra.mxu0 0.0
    %852 = vmatprep.subr.mxu0 0.0
    %853 = vmatpush1.msra.mxu0 0.0
    %854 = vmatprep.subr.mxu0 0.0
    %855 = vmatpush1.msra.mxu0 0.0
    %856 = vmatprep.subr.mxu0 0.0
    %857 = vmatpush1.msra.mxu0 0.0
    %858 = vmatprep.subr.mxu0 0.0
    %859 = vmatpush1.msra.mxu0 0.0
    %860 = vmatprep.subr.mxu0 0.0
    %861 = vmatpush1.msra.mxu0 0.0
    %862 = vmatprep.subr.mxu0 0.0
    %863 = vmatpush1.msra.mxu0 0.0
    %864 = vmatprep.mubr.f32.mxu0 0.0
    %865 = vmatmul.mubr.f32.gmra.mrb[0].mxu0 %v653
    %v866 = vpop.f32.mrb[0].mxu0
    %v867 = vadd.f32 %v797, %v866
    %v868 = vpop.f32.mrb[0].mxu0
    %869 = vdwg.mxu0
    %v870 = vadd.f32 %v867, %v649
    %v871 = vtanh.pop %v870
    %vm872 = vcmask 64512
    %v873 = vsel %vm872, 0.0, 0
    %875 = vmatprep.subr.mxu0 0.0
    %876 = vmatpush1.msra.mxu0 %v47
    %877 = vmatprep.subr.mxu0 0.0
    %878 = vmatpush1.msra.mxu0 0.0
    %879 = vmatprep.subr.mxu0 0.0
    %880 = vmatpush1.msra.mxu0 0.0
    %881 = vmatprep.subr.mxu0 0.0
    %882 = vmatpush1.msra.mxu0 0.0
    %883 = vmatprep.subr.mxu0 0.0
    %884 = vmatpush1.msra.mxu0 0.0
    %885 = vmatprep.subr.mxu0 0.0
    %886 = vmatpush1.msra.mxu0 0.0
    %887 = vmatprep.subr.mxu0 0.0
    %888 = vmatpush1.msra.mxu0 0.0
    %889 = vmatprep.subr.mxu0 0.0
    %890 = vmatpush1.msra.mxu0 0.0
    %891 = vmatprep.subr.mxu0 0.0
    %892 = vmatpush1.msra.mxu0 0.0
    %893 = vmatprep.subr.mxu0 0.0
    %894 = vmatpush1.msra.mxu0 0.0
    %895 = vmatprep.subr.mxu0 0.0
    %896 = vmatpush1.msra.mxu0 0.0
    %897 = vmatprep.subr.mxu0 0.0
    %898 = vmatpush1.msra.mxu0 0.0
    %899 = vmatprep.subr.mxu0 0.0
    %900 = vmatpush1.msra.mxu0 0.0
    %901 = vmatprep.subr.mxu0 0.0
    %902 = vmatpush1.msra.mxu0 0.0
    %903 = vmatprep.subr.mxu0 0.0
    %904 = vmatpush1.msra.mxu0 0.0
    %905 = vmatprep.subr.mxu0 0.0
    %906 = vmatpush1.msra.mxu0 0.0
    %907 = vmatprep.subr.mxu0 0.0
    %908 = vmatpush1.msra.mxu0 0.0
    %909 = vmatprep.subr.mxu0 0.0
    %910 = vmatpush1.msra.mxu0 0.0
    %911 = vmatprep.subr.mxu0 0.0
    %912 = vmatpush1.msra.mxu0 0.0
    %913 = vmatprep.subr.mxu0 0.0
    %914 = vmatpush1.msra.mxu0 0.0
    %915 = vmatprep.subr.mxu0 0.0
    %916 = vmatpush1.msra.mxu0 0.0
    %917 = vmatprep.subr.mxu0 0.0
    %918 = vmatpush1.msra.mxu0 0.0
    %919 = vmatprep.subr.mxu0 0.0
    %920 = vmatpush1.msra.mxu0 0.0
    %921 = vmatprep.subr.mxu0 0.0
    %922 = vmatpush1.msra.mxu0 0.0
    %923 = vmatprep.subr.mxu0 0.0
    %924 = vmatpush1.msra.mxu0 0.0
    %925 = vmatprep.subr.mxu0 0.0
    %926 = vmatpush1.msra.mxu0 0.0
    %927 = vmatprep.subr.mxu0 0.0
    %928 = vmatpush1.msra.mxu0 0.0
    %929 = vmatprep.subr.mxu0 0.0
    %930 = vmatpush1.msra.mxu0 0.0
    %931 = vmatprep.subr.mxu0 0.0
    %932 = vmatpush1.msra.mxu0 0.0
    %933 = vmatprep.subr.mxu0 0.0
    %934 = vmatpush1.msra.mxu0 0.0
    %935 = vmatprep.subr.mxu0 0.0
    %936 = vmatpush1.msra.mxu0 0.0
    %937 = vmatprep.subr.mxu0 0.0
    %938 = vmatpush1.msra.mxu0 0.0
    %939 = vmatprep.mubr.f32.mxu0 0.0
    %940 = vmatmul.mubr.f32.gmra.mrb[0].mxu0 %v873
    %v941 = vpop.f32.mrb[0].mxu0
    %v942 = vadd.f32 0.0, %v941
    %v943 = vpop.f32.mrb[0].mxu0
    %944 = vdwg.mxu0
    %945 = vmatprep.subr.mxu0 0.0
    %946 = vmatpush1.msra.mxu0 %v45
    %947 = vmatprep.subr.mxu0 0.0
    %948 = vmatpush1.msra.mxu0 %v46
    %949 = vmatprep.subr.mxu0 0.0
    %950 = vmatpush1.msra.mxu0 0.0
    %951 = vmatprep.subr.mxu0 0.0
    %952 = vmatpush1.msra.mxu0 0.0
    %953 = vmatprep.subr.mxu0 0.0
    %954 = vmatpush1.msra.mxu0 0.0
    %955 = vmatprep.subr.mxu0 0.0
    %956 = vmatpush1.msra.mxu0 0.0
    %957 = vmatprep.subr.mxu0 0.0
    %958 = vmatpush1.msra.mxu0 0.0
    %959 = vmatprep.subr.mxu0 0.0
    %960 = vmatpush1.msra.mxu0 0.0
    %961 = vmatprep.subr.mxu0 0.0
    %962 = vmatpush1.msra.mxu0 0.0
    %963 = vmatprep.subr.mxu0 0.0
    %964 = vmatpush1.msra.mxu0 0.0
    %965 = vmatprep.subr.mxu0 0.0
    %966 = vmatpush1.msra.mxu0 0.0
    %967 = vmatprep.subr.mxu0 0.0
    %968 = vmatpush1.msra.mxu0 0.0
    %969 = vmatprep.subr.mxu0 0.0
    %970 = vmatpush1.msra.mxu0 0.0
    %971 = vmatprep.subr.mxu0 0.0
    %972 = vmatpush1.msra.mxu0 0.0
    %973 = vmatprep.subr.mxu0 0.0
    %974 = vmatpush1.msra.mxu0 0.0
    %975 = vmatprep.subr.mxu0 0.0
    %976 = vmatpush1.msra.mxu0 0.0
    %977 = vmatprep.subr.mxu0 0.0
    %978 = vmatpush1.msra.mxu0 0.0
    %979 = vmatprep.subr.mxu0 0.0
    %980 = vmatpush1.msra.mxu0 0.0
    %981 = vmatprep.subr.mxu0 0.0
    %982 = vmatpush1.msra.mxu0 0.0
    %983 = vmatprep.subr.mxu0 0.0
    %984 = vmatpush1.msra.mxu0 0.0
    %985 = vmatprep.subr.mxu0 0.0
    %986 = vmatpush1.msra.mxu0 0.0
    %987 = vmatprep.subr.mxu0 0.0
    %988 = vmatpush1.msra.mxu0 0.0
    %989 = vmatprep.subr.mxu0 0.0
    %990 = vmatpush1.msra.mxu0 0.0
    %991 = vmatprep.subr.mxu0 0.0
    %992 = vmatpush1.msra.mxu0 0.0
    %993 = vmatprep.subr.mxu0 0.0
    %994 = vmatpush1.msra.mxu0 0.0
    %995 = vmatprep.subr.mxu0 0.0
    %996 = vmatpush1.msra.mxu0 0.0
    %997 = vmatprep.subr.mxu0 0.0
    %998 = vmatpush1.msra.mxu0 0.0
    %999 = vmatprep.subr.mxu0 0.0
    %1000 = vmatpush1.msra.mxu0 0.0
    %1001 = vmatprep.subr.mxu0 0.0
    %1002 = vmatpush1.msra.mxu0 0.0
    %1003 = vmatprep.subr.mxu0 0.0
    %1004 = vmatpush1.msra.mxu0 0.0
    %1005 = vmatprep.subr.mxu0 0.0
    %1006 = vmatpush1.msra.mxu0 0.0
    %1007 = vmatprep.subr.mxu0 0.0
    %1008 = vmatpush1.msra.mxu0 0.0
    %1009 = vmatprep.mubr.f32.mxu0 0.0
    %1010 = vmatmul.mubr.f32.gmra.mrb[0].mxu0 %v728
    %v1011 = vpop.f32.mrb[0].mxu0
    %v1012 = vadd.f32 %v942, %v1011
    %v1013 = vpop.f32.mrb[0].mxu0
    %1014 = vdwg.mxu0
    %v1015 = vlaneseq
    %v1016 = vshrl.u32 %v1015, 7
    %v1017 = vsub.s32 0, %v1016
    %v1018 = vrot.slane %v52, %v1017
    %v1019 = vadd.f32 %v1012, %v1018
    %v1020 = vtanh.pop %v1019
    %v1021 = vlaneseq
    %v1022 = vshrl.u32 %v1021, 7
    %v1023 = vsub.s32 0, %v1022
    %v1024 = vrot.slane %v53, %v1023
    %v1026 = vsel %vm872, %v1020, 0
    %1028 = vmatprep.subr.mxu0 0.0
    %1029 = vmatpush1.msra.mxu0 %v48
    %1030 = vmatprep.subr.mxu0 0.0
    %1031 = vmatpush1.msra.mxu0 0.0
    %1032 = vmatprep.subr.mxu0 0.0
    %1033 = vmatpush1.msra.mxu0 0.0
    %1034 = vmatprep.subr.mxu0 0.0
    %1035 = vmatpush1.msra.mxu0 0.0
    %1036 = vmatprep.subr.mxu0 0.0
    %1037 = vmatpush1.msra.mxu0 0.0
    %1038 = vmatprep.subr.mxu0 0.0
    %1039 = vmatpush1.msra.mxu0 0.0
    %1040 = vmatprep.subr.mxu0 0.0
    %1041 = vmatpush1.msra.mxu0 0.0
    %1042 = vmatprep.subr.mxu0 0.0
    %1043 = vmatpush1.msra.mxu0 0.0
    %1044 = vmatprep.subr.mxu0 0.0
    %1045 = vmatpush1.msra.mxu0 0.0
    %1046 = vmatprep.subr.mxu0 0.0
    %1047 = vmatpush1.msra.mxu0 0.0
    %1048 = vmatprep.subr.mxu0 0.0
    %1049 = vmatpush1.msra.mxu0 0.0
    %1050 = vmatprep.subr.mxu0 0.0
    %1051 = vmatpush1.msra.mxu0 0.0
    %1052 = vmatprep.subr.mxu0 0.0
    %1053 = vmatpush1.msra.mxu0 0.0
    %1054 = vmatprep.subr.mxu0 0.0
    %1055 = vmatpush1.msra.mxu0 0.0
    %1056 = vmatprep.subr.mxu0 0.0
    %1057 = vmatpush1.msra.mxu0 0.0
    %1058 = vmatprep.subr.mxu0 0.0
    %1059 = vmatpush1.msra.mxu0 0.0
    %1060 = vmatprep.subr.mxu0 0.0
    %1061 = vmatpush1.msra.mxu0 0.0
    %1062 = vmatprep.subr.mxu0 0.0
    %1063 = vmatpush1.msra.mxu0 0.0
    %1064 = vmatprep.subr.mxu0 0.0
    %1065 = vmatpush1.msra.mxu0 0.0
    %1066 = vmatprep.subr.mxu0 0.0
    %1067 = vmatpush1.msra.mxu0 0.0
    %1068 = vmatprep.subr.mxu0 0.0
    %1069 = vmatpush1.msra.mxu0 0.0
    %1070 = vmatprep.subr.mxu0 0.0
    %1071 = vmatpush1.msra.mxu0 0.0
    %1072 = vmatprep.subr.mxu0 0.0
    %1073 = vmatpush1.msra.mxu0 0.0
    %1074 = vmatprep.subr.mxu0 0.0
    %1075 = vmatpush1.msra.mxu0 0.0
    %1076 = vmatprep.subr.mxu0 0.0
    %1077 = vmatpush1.msra.mxu0 0.0
    %1078 = vmatprep.subr.mxu0 0.0
    %1079 = vmatpush1.msra.mxu0 0.0
    %1080 = vmatprep.subr.mxu0 0.0
    %1081 = vmatpush1.msra.mxu0 0.0
    %1082 = vmatprep.subr.mxu0 0.0
    %1083 = vmatpush1.msra.mxu0 0.0
    %1084 = vmatprep.subr.mxu0 0.0
    %1085 = vmatpush1.msra.mxu0 0.0
    %1086 = vmatprep.subr.mxu0 0.0
    %1087 = vmatpush1.msra.mxu0 0.0
    %1088 = vmatprep.subr.mxu0 0.0
    %1089 = vmatpush1.msra.mxu0 0.0
    %1090 = vmatprep.subr.mxu0 0.0
    %1091 = vmatpush1.msra.mxu0 0.0
    %1092 = vmatprep.mubr.f32.mxu0 0.0
    %1093 = vmatmul.mubr.f32.gmra.mrb[0].mxu0 %v1026
    %v1094 = vpop.f32.mrb[0].mxu0
    %v1095 = vadd.f32 %v1024, %v1094
    %v1096 = vpop.f32.mrb[0].mxu0
    %1097 = vdwg.mxu0
    %vm1098 = vcmp.gt.f32.partialorder %v1095, 0.0
    %v1099 = vmul.f32 %v1095, 0.01
    %v1100 = vsel %vm1098, %v1095, %v1099
    %1101 = vst [vmem:[#allocation5] sm:$0xff] %v1100
    %v1103 = vsel %vm224, %v726, 0
    %1105 = vmatprep.subr.mxu0 0.0
    %1106 = vmatpush1.msra.mxu0 %v35
    %1107 = vmatprep.subr.mxu0 0.0
    %1108 = vmatpush1.msra.mxu0 %v36
    %1109 = vmatprep.subr.mxu0 0.0
    %1110 = vmatpush1.msra.mxu0 %v37
    %1111 = vmatprep.subr.mxu0 0.0
    %1112 = vmatpush1.msra.mxu0 %v38
    %1113 = vmatprep.subr.mxu0 0.0
    %1114 = vmatpush1.msra.mxu0 0.0
    %1115 = vmatprep.subr.mxu0 0.0
    %1116 = vmatpush1.msra.mxu0 0.0
    %1117 = vmatprep.subr.mxu0 0.0
    %1118 = vmatpush1.msra.mxu0 0.0
    %1119 = vmatprep.subr.mxu0 0.0
    %1120 = vmatpush1.msra.mxu0 0.0
    %1121 = vmatprep.subr.mxu0 0.0
    %1122 = vmatpush1.msra.mxu0 0.0
    %1123 = vmatprep.subr.mxu0 0.0
    %1124 = vmatpush1.msra.mxu0 0.0
    %1125 = vmatprep.subr.mxu0 0.0
    %1126 = vmatpush1.msra.mxu0 0.0
    %1127 = vmatprep.subr.mxu0 0.0
    %1128 = vmatpush1.msra.mxu0 0.0
    %1129 = vmatprep.subr.mxu0 0.0
    %1130 = vmatpush1.msra.mxu0 0.0
    %1131 = vmatprep.subr.mxu0 0.0
    %1132 = vmatpush1.msra.mxu0 0.0
    %1133 = vmatprep.subr.mxu0 0.0
    %1134 = vmatpush1.msra.mxu0 0.0
    %1135 = vmatprep.subr.mxu0 0.0
    %1136 = vmatpush1.msra.mxu0 0.0
    %1137 = vmatprep.subr.mxu0 0.0
    %1138 = vmatpush1.msra.mxu0 0.0
    %1139 = vmatprep.subr.mxu0 0.0
    %1140 = vmatpush1.msra.mxu0 0.0
    %1141 = vmatprep.subr.mxu0 0.0
    %1142 = vmatpush1.msra.mxu0 0.0
    %1143 = vmatprep.subr.mxu0 0.0
    %1144 = vmatpush1.msra.mxu0 0.0
    %1145 = vmatprep.subr.mxu0 0.0
    %1146 = vmatpush1.msra.mxu0 0.0
    %1147 = vmatprep.subr.mxu0 0.0
    %1148 = vmatpush1.msra.mxu0 0.0
    %1149 = vmatprep.subr.mxu0 0.0
    %1150 = vmatpush1.msra.mxu0 0.0
    %1151 = vmatprep.subr.mxu0 0.0
    %1152 = vmatpush1.msra.mxu0 0.0
    %1153 = vmatprep.subr.mxu0 0.0
    %1154 = vmatpush1.msra.mxu0 0.0
    %1155 = vmatprep.subr.mxu0 0.0
    %1156 = vmatpush1.msra.mxu0 0.0
    %1157 = vmatprep.subr.mxu0 0.0
    %1158 = vmatpush1.msra.mxu0 0.0
    %1159 = vmatprep.subr.mxu0 0.0
    %1160 = vmatpush1.msra.mxu0 0.0
    %1161 = vmatprep.subr.mxu0 0.0
    %1162 = vmatpush1.msra.mxu0 0.0
    %1163 = vmatprep.subr.mxu0 0.0
    %1164 = vmatpush1.msra.mxu0 0.0
    %1165 = vmatprep.subr.mxu0 0.0
    %1166 = vmatpush1.msra.mxu0 0.0
    %1167 = vmatprep.subr.mxu0 0.0
    %1168 = vmatpush1.msra.mxu0 0.0
    %1169 = vmatprep.mubr.f32.mxu0 0.0
    %1170 = vmatmul.mubr.f32.gmra.mrb[0].mxu0 %v1103
    %v1171 = vpop.f32.mrb[0].mxu0
    %v1172 = vadd.f32 0.0, %v1171
    %v1173 = vpop.f32.mrb[0].mxu0
    %1174 = vdwg.mxu0
    %v1175 = vadd.f32 %v331, %v1172
    %v1176 = vtanh.pop %v1175
    %v1178 = vsel %vm66, %v871, 0
    %1180 = vmatprep.subr.mxu0 0.0
    %1181 = vmatpush1.msra.mxu0 %v43
    %1182 = vmatprep.subr.mxu0 0.0
    %1183 = vmatpush1.msra.mxu0 %v44
    %1184 = vmatprep.subr.mxu0 0.0
    %1185 = vmatpush1.msra.mxu0 0.0
    %1186 = vmatprep.subr.mxu0 0.0
    %1187 = vmatpush1.msra.mxu0 0.0
    %1188 = vmatprep.subr.mxu0 0.0
    %1189 = vmatpush1.msra.mxu0 0.0
    %1190 = vmatprep.subr.mxu0 0.0
    %1191 = vmatpush1.msra.mxu0 0.0
    %1192 = vmatprep.subr.mxu0 0.0
    %1193 = vmatpush1.msra.mxu0 0.0
    %1194 = vmatprep.subr.mxu0 0.0
    %1195 = vmatpush1.msra.mxu0 0.0
    %1196 = vmatprep.subr.mxu0 0.0
    %1197 = vmatpush1.msra.mxu0 0.0
    %1198 = vmatprep.subr.mxu0 0.0
    %1199 = vmatpush1.msra.mxu0 0.0
    %1200 = vmatprep.subr.mxu0 0.0
    %1201 = vmatpush1.msra.mxu0 0.0
    %1202 = vmatprep.subr.mxu0 0.0
    %1203 = vmatpush1.msra.mxu0 0.0
    %1204 = vmatprep.subr.mxu0 0.0
    %1205 = vmatpush1.msra.mxu0 0.0
    %1206 = vmatprep.subr.mxu0 0.0
    %1207 = vmatpush1.msra.mxu0 0.0
    %1208 = vmatprep.subr.mxu0 0.0
    %1209 = vmatpush1.msra.mxu0 0.0
    %1210 = vmatprep.subr.mxu0 0.0
    %1211 = vmatpush1.msra.mxu0 0.0
    %1212 = vmatprep.subr.mxu0 0.0
    %1213 = vmatpush1.msra.mxu0 0.0
    %1214 = vmatprep.subr.mxu0 0.0
    %1215 = vmatpush1.msra.mxu0 0.0
    %1216 = vmatprep.subr.mxu0 0.0
    %1217 = vmatpush1.msra.mxu0 0.0
    %1218 = vmatprep.subr.mxu0 0.0
    %1219 = vmatpush1.msra.mxu0 0.0
    %1220 = vmatprep.subr.mxu0 0.0
    %1221 = vmatpush1.msra.mxu0 0.0
    %1222 = vmatprep.subr.mxu0 0.0
    %1223 = vmatpush1.msra.mxu0 0.0
    %1224 = vmatprep.subr.mxu0 0.0
    %1225 = vmatpush1.msra.mxu0 0.0
    %1226 = vmatprep.subr.mxu0 0.0
    %1227 = vmatpush1.msra.mxu0 0.0
    %1228 = vmatprep.subr.mxu0 0.0
    %1229 = vmatpush1.msra.mxu0 0.0
    %1230 = vmatprep.subr.mxu0 0.0
    %1231 = vmatpush1.msra.mxu0 0.0
    %1232 = vmatprep.subr.mxu0 0.0
    %1233 = vmatpush1.msra.mxu0 0.0
    %1234 = vmatprep.subr.mxu0 0.0
    %1235 = vmatpush1.msra.mxu0 0.0
    %1236 = vmatprep.subr.mxu0 0.0
    %1237 = vmatpush1.msra.mxu0 0.0
    %1238 = vmatprep.subr.mxu0 0.0
    %1239 = vmatpush1.msra.mxu0 0.0
    %1240 = vmatprep.subr.mxu0 0.0
    %1241 = vmatpush1.msra.mxu0 0.0
    %1242 = vmatprep.subr.mxu0 0.0
    %1243 = vmatpush1.msra.mxu0 0.0
    %1244 = vmatprep.mubr.f32.mxu0 0.0
    %1245 = vmatmul.mubr.f32.gmra.mrb[0].mxu0 %v1178
    %v1246 = vpop.f32.mrb[0].mxu0
    %v1247 = vadd.f32 0.0, %v1246
    %v1248 = vpop.f32.mrb[0].mxu0
    %1249 = vdwg.mxu0
    %1250 = vmatprep.subr.mxu0 0.0
    %1251 = vmatpush1.msra.mxu0 %v39
    %1252 = vmatprep.subr.mxu0 0.0
    %1253 = vmatpush1.msra.mxu0 %v40
    %1254 = vmatprep.subr.mxu0 0.0
    %1255 = vmatpush1.msra.mxu0 %v41
    %1256 = vmatprep.subr.mxu0 0.0
    %1257 = vmatpush1.msra.mxu0 %v42
    %1258 = vmatprep.subr.mxu0 0.0
    %1259 = vmatpush1.msra.mxu0 0.0
    %1260 = vmatprep.subr.mxu0 0.0
    %1261 = vmatpush1.msra.mxu0 0.0
    %1262 = vmatprep.subr.mxu0 0.0
    %1263 = vmatpush1.msra.mxu0 0.0
    %1264 = vmatprep.subr.mxu0 0.0
    %1265 = vmatpush1.msra.mxu0 0.0
    %1266 = vmatprep.subr.mxu0 0.0
    %1267 = vmatpush1.msra.mxu0 0.0
    %1268 = vmatprep.subr.mxu0 0.0
    %1269 = vmatpush1.msra.mxu0 0.0
    %1270 = vmatprep.subr.mxu0 0.0
    %1271 = vmatpush1.msra.mxu0 0.0
    %1272 = vmatprep.subr.mxu0 0.0
    %1273 = vmatpush1.msra.mxu0 0.0
    %1274 = vmatprep.subr.mxu0 0.0
    %1275 = vmatpush1.msra.mxu0 0.0
    %1276 = vmatprep.subr.mxu0 0.0
    %1277 = vmatpush1.msra.mxu0 0.0
    %1278 = vmatprep.subr.mxu0 0.0
    %1279 = vmatpush1.msra.mxu0 0.0
    %1280 = vmatprep.subr.mxu0 0.0
    %1281 = vmatpush1.msra.mxu0 0.0
    %1282 = vmatprep.subr.mxu0 0.0
    %1283 = vmatpush1.msra.mxu0 0.0
    %1284 = vmatprep.subr.mxu0 0.0
    %1285 = vmatpush1.msra.mxu0 0.0
    %1286 = vmatprep.subr.mxu0 0.0
    %1287 = vmatpush1.msra.mxu0 0.0
    %1288 = vmatprep.subr.mxu0 0.0
    %1289 = vmatpush1.msra.mxu0 0.0
    %1290 = vmatprep.subr.mxu0 0.0
    %1291 = vmatpush1.msra.mxu0 0.0
    %1292 = vmatprep.subr.mxu0 0.0
    %1293 = vmatpush1.msra.mxu0 0.0
    %1294 = vmatprep.subr.mxu0 0.0
    %1295 = vmatpush1.msra.mxu0 0.0
    %1296 = vmatprep.subr.mxu0 0.0
    %1297 = vmatpush1.msra.mxu0 0.0
    %1298 = vmatprep.subr.mxu0 0.0
    %1299 = vmatpush1.msra.mxu0 0.0
    %1300 = vmatprep.subr.mxu0 0.0
    %1301 = vmatpush1.msra.mxu0 0.0
    %1302 = vmatprep.subr.mxu0 0.0
    %1303 = vmatpush1.msra.mxu0 0.0
    %1304 = vmatprep.subr.mxu0 0.0
    %1305 = vmatpush1.msra.mxu0 0.0
    %1306 = vmatprep.subr.mxu0 0.0
    %1307 = vmatpush1.msra.mxu0 0.0
    %1308 = vmatprep.subr.mxu0 0.0
    %1309 = vmatpush1.msra.mxu0 0.0
    %1310 = vmatprep.subr.mxu0 0.0
    %1311 = vmatpush1.msra.mxu0 0.0
    %1312 = vmatprep.subr.mxu0 0.0
    %1313 = vmatpush1.msra.mxu0 0.0
    %1314 = vmatprep.mubr.f32.mxu0 0.0
    %1315 = vmatmul.mubr.f32.gmra.mrb[0].mxu0 %v1103
    %v1316 = vpop.f32.mrb[0].mxu0
    %v1317 = vadd.f32 %v1247, %v1316
    %v1318 = vpop.f32.mrb[0].mxu0
    %1319 = vdwg.mxu0
    %v1320 = vadd.f32 %v1317, %v649
    %v1321 = vtanh.pop %v1320
    %1322 = vmatprep.subr.mxu0 0.0
    %1323 = vmatpush1.msra.mxu0 %v47
    %1324 = vmatprep.subr.mxu0 0.0
    %1325 = vmatpush1.msra.mxu0 0.0
    %1326 = vmatprep.subr.mxu0 0.0
    %1327 = vmatpush1.msra.mxu0 0.0
    %1328 = vmatprep.subr.mxu0 0.0
    %1329 = vmatpush1.msra.mxu0 0.0
    %1330 = vmatprep.subr.mxu0 0.0
    %1331 = vmatpush1.msra.mxu0 0.0
    %1332 = vmatprep.subr.mxu0 0.0
    %1333 = vmatpush1.msra.mxu0 0.0
    %1334 = vmatprep.subr.mxu0 0.0
    %1335 = vmatpush1.msra.mxu0 0.0
    %1336 = vmatprep.subr.mxu0 0.0
    %1337 = vmatpush1.msra.mxu0 0.0
    %1338 = vmatprep.subr.mxu0 0.0
    %1339 = vmatpush1.msra.mxu0 0.0
    %1340 = vmatprep.subr.mxu0 0.0
    %1341 = vmatpush1.msra.mxu0 0.0
    %1342 = vmatprep.subr.mxu0 0.0
    %1343 = vmatpush1.msra.mxu0 0.0
    %1344 = vmatprep.subr.mxu0 0.0
    %1345 = vmatpush1.msra.mxu0 0.0
    %1346 = vmatprep.subr.mxu0 0.0
    %1347 = vmatpush1.msra.mxu0 0.0
    %1348 = vmatprep.subr.mxu0 0.0
    %1349 = vmatpush1.msra.mxu0 0.0
    %1350 = vmatprep.subr.mxu0 0.0
    %1351 = vmatpush1.msra.mxu0 0.0
    %1352 = vmatprep.subr.mxu0 0.0
    %1353 = vmatpush1.msra.mxu0 0.0
    %1354 = vmatprep.subr.mxu0 0.0
    %1355 = vmatpush1.msra.mxu0 0.0
    %1356 = vmatprep.subr.mxu0 0.0
    %1357 = vmatpush1.msra.mxu0 0.0
    %1358 = vmatprep.subr.mxu0 0.0
    %1359 = vmatpush1.msra.mxu0 0.0
    %1360 = vmatprep.subr.mxu0 0.0
    %1361 = vmatpush1.msra.mxu0 0.0
    %1362 = vmatprep.subr.mxu0 0.0
    %1363 = vmatpush1.msra.mxu0 0.0
    %1364 = vmatprep.subr.mxu0 0.0
    %1365 = vmatpush1.msra.mxu0 0.0
    %1366 = vmatprep.subr.mxu0 0.0
    %1367 = vmatpush1.msra.mxu0 0.0
    %1368 = vmatprep.subr.mxu0 0.0
    %1369 = vmatpush1.msra.mxu0 0.0
    %1370 = vmatprep.subr.mxu0 0.0
    %1371 = vmatpush1.msra.mxu0 0.0
    %1372 = vmatprep.subr.mxu0 0.0
    %1373 = vmatpush1.msra.mxu0 0.0
    %1374 = vmatprep.subr.mxu0 0.0
    %1375 = vmatpush1.msra.mxu0 0.0
    %1376 = vmatprep.subr.mxu0 0.0
    %1377 = vmatpush1.msra.mxu0 0.0
    %1378 = vmatprep.subr.mxu0 0.0
    %1379 = vmatpush1.msra.mxu0 0.0
    %1380 = vmatprep.subr.mxu0 0.0
    %1381 = vmatpush1.msra.mxu0 0.0
    %1382 = vmatprep.subr.mxu0 0.0
    %1383 = vmatpush1.msra.mxu0 0.0
    %1384 = vmatprep.subr.mxu0 0.0
    %1385 = vmatpush1.msra.mxu0 0.0
    %1386 = vmatprep.mubr.f32.mxu0 0.0
    %1387 = vmatmul.mubr.f32.gmra.mrb[0].mxu0 %v1026
    %v1388 = vpop.f32.mrb[0].mxu0
    %v1389 = vadd.f32 0.0, %v1388
    %v1390 = vpop.f32.mrb[0].mxu0
    %1391 = vdwg.mxu0
    %1392 = vmatprep.subr.mxu0 0.0
    %1393 = vmatpush1.msra.mxu0 %v45
    %1394 = vmatprep.subr.mxu0 0.0
    %1395 = vmatpush1.msra.mxu0 %v46
    %1396 = vmatprep.subr.mxu0 0.0
    %1397 = vmatpush1.msra.mxu0 0.0
    %1398 = vmatprep.subr.mxu0 0.0
    %1399 = vmatpush1.msra.mxu0 0.0
    %1400 = vmatprep.subr.mxu0 0.0
    %1401 = vmatpush1.msra.mxu0 0.0
    %1402 = vmatprep.subr.mxu0 0.0
    %1403 = vmatpush1.msra.mxu0 0.0
    %1404 = vmatprep.subr.mxu0 0.0
    %1405 = vmatpush1.msra.mxu0 0.0
    %1406 = vmatprep.subr.mxu0 0.0
    %1407 = vmatpush1.msra.mxu0 0.0
    %1408 = vmatprep.subr.mxu0 0.0
    %1409 = vmatpush1.msra.mxu0 0.0
    %1410 = vmatprep.subr.mxu0 0.0
    %1411 = vmatpush1.msra.mxu0 0.0
    %1412 = vmatprep.subr.mxu0 0.0
    %1413 = vmatpush1.msra.mxu0 0.0
    %1414 = vmatprep.subr.mxu0 0.0
    %1415 = vmatpush1.msra.mxu0 0.0
    %1416 = vmatprep.subr.mxu0 0.0
    %1417 = vmatpush1.msra.mxu0 0.0
    %1418 = vmatprep.subr.mxu0 0.0
    %1419 = vmatpush1.msra.mxu0 0.0
    %1420 = vmatprep.subr.mxu0 0.0
    %1421 = vmatpush1.msra.mxu0 0.0
    %1422 = vmatprep.subr.mxu0 0.0
    %1423 = vmatpush1.msra.mxu0 0.0
    %1424 = vmatprep.subr.mxu0 0.0
    %1425 = vmatpush1.msra.mxu0 0.0
    %1426 = vmatprep.subr.mxu0 0.0
    %1427 = vmatpush1.msra.mxu0 0.0
    %1428 = vmatprep.subr.mxu0 0.0
    %1429 = vmatpush1.msra.mxu0 0.0
    %1430 = vmatprep.subr.mxu0 0.0
    %1431 = vmatpush1.msra.mxu0 0.0
    %1432 = vmatprep.subr.mxu0 0.0
    %1433 = vmatpush1.msra.mxu0 0.0
    %1434 = vmatprep.subr.mxu0 0.0
    %1435 = vmatpush1.msra.mxu0 0.0
    %1436 = vmatprep.subr.mxu0 0.0
    %1437 = vmatpush1.msra.mxu0 0.0
    %1438 = vmatprep.subr.mxu0 0.0
    %1439 = vmatpush1.msra.mxu0 0.0
    %1440 = vmatprep.subr.mxu0 0.0
    %1441 = vmatpush1.msra.mxu0 0.0
    %1442 = vmatprep.subr.mxu0 0.0
    %1443 = vmatpush1.msra.mxu0 0.0
    %1444 = vmatprep.subr.mxu0 0.0
    %1445 = vmatpush1.msra.mxu0 0.0
    %1446 = vmatprep.subr.mxu0 0.0
    %1447 = vmatpush1.msra.mxu0 0.0
    %1448 = vmatprep.subr.mxu0 0.0
    %1449 = vmatpush1.msra.mxu0 0.0
    %1450 = vmatprep.subr.mxu0 0.0
    %1451 = vmatpush1.msra.mxu0 0.0
    %1452 = vmatprep.subr.mxu0 0.0
    %1453 = vmatpush1.msra.mxu0 0.0
    %1454 = vmatprep.subr.mxu0 0.0
    %1455 = vmatpush1.msra.mxu0 0.0
    %1456 = vmatprep.mubr.f32.mxu0 0.0
    %1457 = vmatmul.mubr.f32.gmra.mrb[0].mxu0 %v1178
    %v1458 = vpop.f32.mrb[0].mxu0
    %v1459 = vadd.f32 %v1389, %v1458
    %v1460 = vpop.f32.mrb[0].mxu0
    %1461 = vdwg.mxu0
    %v1462 = vadd.f32 %v1459, %v1018
    %v1463 = vtanh.pop %v1462
    %v1465 = vsel %vm872, %v1463, 0
    %1467 = vmatprep.subr.mxu0 0.0
    %1468 = vmatpush1.msra.mxu0 %v48
    %1469 = vmatprep.subr.mxu0 0.0
    %1470 = vmatpush1.msra.mxu0 0.0
    %1471 = vmatprep.subr.mxu0 0.0
    %1472 = vmatpush1.msra.mxu0 0.0
    %1473 = vmatprep.subr.mxu0 0.0
    %1474 = vmatpush1.msra.mxu0 0.0
    %1475 = vmatprep.subr.mxu0 0.0
    %1476 = vmatpush1.msra.mxu0 0.0
    %1477 = vmatprep.subr.mxu0 0.0
    %1478 = vmatpush1.msra.mxu0 0.0
    %1479 = vmatprep.subr.mxu0 0.0
    %1480 = vmatpush1.msra.mxu0 0.0
    %1481 = vmatprep.subr.mxu0 0.0
    %1482 = vmatpush1.msra.mxu0 0.0
    %1483 = vmatprep.subr.mxu0 0.0
    %1484 = vmatpush1.msra.mxu0 0.0
    %1485 = vmatprep.subr.mxu0 0.0
    %1486 = vmatpush1.msra.mxu0 0.0
    %1487 = vmatprep.subr.mxu0 0.0
    %1488 = vmatpush1.msra.mxu0 0.0
    %1489 = vmatprep.subr.mxu0 0.0
    %1490 = vmatpush1.msra.mxu0 0.0
    %1491 = vmatprep.subr.mxu0 0.0
    %1492 = vmatpush1.msra.mxu0 0.0
    %1493 = vmatprep.subr.mxu0 0.0
    %1494 = vmatpush1.msra.mxu0 0.0
    %1495 = vmatprep.subr.mxu0 0.0
    %1496 = vmatpush1.msra.mxu0 0.0
    %1497 = vmatprep.subr.mxu0 0.0
    %1498 = vmatpush1.msra.mxu0 0.0
    %1499 = vmatprep.subr.mxu0 0.0
    %1500 = vmatpush1.msra.mxu0 0.0
    %1501 = vmatprep.subr.mxu0 0.0
    %1502 = vmatpush1.msra.mxu0 0.0
    %1503 = vmatprep.subr.mxu0 0.0
    %1504 = vmatpush1.msra.mxu0 0.0
    %1505 = vmatprep.subr.mxu0 0.0
    %1506 = vmatpush1.msra.mxu0 0.0
    %1507 = vmatprep.subr.mxu0 0.0
    %1508 = vmatpush1.msra.mxu0 0.0
    %1509 = vmatprep.subr.mxu0 0.0
    %1510 = vmatpush1.msra.mxu0 0.0
    %1511 = vmatprep.subr.mxu0 0.0
    %1512 = vmatpush1.msra.mxu0 0.0
    %1513 = vmatprep.subr.mxu0 0.0
    %1514 = vmatpush1.msra.mxu0 0.0
    %1515 = vmatprep.subr.mxu0 0.0
    %1516 = vmatpush1.msra.mxu0 0.0
    %1517 = vmatprep.subr.mxu0 0.0
    %1518 = vmatpush1.msra.mxu0 0.0
    %1519 = vmatprep.subr.mxu0 0.0
    %1520 = vmatpush1.msra.mxu0 0.0
    %1521 = vmatprep.subr.mxu0 0.0
    %1522 = vmatpush1.msra.mxu0 0.0
    %1523 = vmatprep.subr.mxu0 0.0
    %1524 = vmatpush1.msra.mxu0 0.0
    %1525 = vmatprep.subr.mxu0 0.0
    %1526 = vmatpush1.msra.mxu0 0.0
    %1527 = vmatprep.subr.mxu0 0.0
    %1528 = vmatpush1.msra.mxu0 0.0
    %1529 = vmatprep.subr.mxu0 0.0
    %1530 = vmatpush1.msra.mxu0 0.0
    %1531 = vmatprep.mubr.f32.mxu0 0.0
    %1532 = vmatmul.mubr.f32.gmra.mrb[0].mxu0 %v1465
    %v1533 = vpop.f32.mrb[0].mxu0
    %v1534 = vadd.f32 %v1024, %v1533
    %v1535 = vpop.f32.mrb[0].mxu0
    %1536 = vdwg.mxu0
    %vm1537 = vcmp.gt.f32.partialorder %v1534, 0.0
    %v1538 = vmul.f32 %v1534, 0.01
    %v1539 = vsel %vm1537, %v1534, %v1538
    %1540 = vst [vmem:[#allocation5 + $0x8] sm:$0xff] %v1539
    %v1542 = vsel %vm224, %v1176, 0
    %1544 = vmatprep.subr.mxu0 0.0
    %1545 = vmatpush1.msra.mxu0 %v35
    %1546 = vmatprep.subr.mxu0 0.0
    %1547 = vmatpush1.msra.mxu0 %v36
    %1548 = vmatprep.subr.mxu0 0.0
    %1549 = vmatpush1.msra.mxu0 %v37
    %1550 = vmatprep.subr.mxu0 0.0
    %1551 = vmatpush1.msra.mxu0 %v38
    %1552 = vmatprep.subr.mxu0 0.0
    %1553 = vmatpush1.msra.mxu0 0.0
    %1554 = vmatprep.subr.mxu0 0.0
    %1555 = vmatpush1.msra.mxu0 0.0
    %1556 = vmatprep.subr.mxu0 0.0
    %1557 = vmatpush1.msra.mxu0 0.0
    %1558 = vmatprep.subr.mxu0 0.0
    %1559 = vmatpush1.msra.mxu0 0.0
    %1560 = vmatprep.subr.mxu0 0.0
    %1561 = vmatpush1.msra.mxu0 0.0
    %1562 = vmatprep.subr.mxu0 0.0
    %1563 = vmatpush1.msra.mxu0 0.0
    %1564 = vmatprep.subr.mxu0 0.0
    %1565 = vmatpush1.msra.mxu0 0.0
    %1566 = vmatprep.subr.mxu0 0.0
    %1567 = vmatpush1.msra.mxu0 0.0
    %1568 = vmatprep.subr.mxu0 0.0
    %1569 = vmatpush1.msra.mxu0 0.0
    %1570 = vmatprep.subr.mxu0 0.0
    %1571 = vmatpush1.msra.mxu0 0.0
    %1572 = vmatprep.subr.mxu0 0.0
    %1573 = vmatpush1.msra.mxu0 0.0
    %1574 = vmatprep.subr.mxu0 0.0
    %1575 = vmatpush1.msra.mxu0 0.0
    %1576 = vmatprep.subr.mxu0 0.0
    %1577 = vmatpush1.msra.mxu0 0.0
    %1578 = vmatprep.subr.mxu0 0.0
    %1579 = vmatpush1.msra.mxu0 0.0
    %1580 = vmatprep.subr.mxu0 0.0
    %1581 = vmatpush1.msra.mxu0 0.0
    %1582 = vmatprep.subr.mxu0 0.0
    %1583 = vmatpush1.msra.mxu0 0.0
    %1584 = vmatprep.subr.mxu0 0.0
    %1585 = vmatpush1.msra.mxu0 0.0
    %1586 = vmatprep.subr.mxu0 0.0
    %1587 = vmatpush1.msra.mxu0 0.0
    %1588 = vmatprep.subr.mxu0 0.0
    %1589 = vmatpush1.msra.mxu0 0.0
    %1590 = vmatprep.subr.mxu0 0.0
    %1591 = vmatpush1.msra.mxu0 0.0
    %1592 = vmatprep.subr.mxu0 0.0
    %1593 = vmatpush1.msra.mxu0 0.0
    %1594 = vmatprep.subr.mxu0 0.0
    %1595 = vmatpush1.msra.mxu0 0.0
    %1596 = vmatprep.subr.mxu0 0.0
    %1597 = vmatpush1.msra.mxu0 0.0
    %1598 = vmatprep.subr.mxu0 0.0
    %1599 = vmatpush1.msra.mxu0 0.0
    %1600 = vmatprep.subr.mxu0 0.0
    %1601 = vmatpush1.msra.mxu0 0.0
    %1602 = vmatprep.subr.mxu0 0.0
    %1603 = vmatpush1.msra.mxu0 0.0
    %1604 = vmatprep.subr.mxu0 0.0
    %1605 = vmatpush1.msra.mxu0 0.0
    %1606 = vmatprep.subr.mxu0 0.0
    %1607 = vmatpush1.msra.mxu0 0.0
    %1608 = vmatprep.mubr.f32.mxu0 0.0
    %1609 = vmatmul.mubr.f32.gmra.mrb[0].mxu0 %v1542
    %v1610 = vpop.f32.mrb[0].mxu0
    %v1611 = vadd.f32 0.0, %v1610
    %v1612 = vpop.f32.mrb[0].mxu0
    %1613 = vdwg.mxu0
    %v1614 = vadd.f32 %v336, %v1611
    %v1615 = vtanh.pop %v1614
    %v1617 = vsel %vm66, %v1321, 0
    %1619 = vmatprep.subr.mxu0 0.0
    %1620 = vmatpush1.msra.mxu0 %v43
    %1621 = vmatprep.subr.mxu0 0.0
    %1622 = vmatpush1.msra.mxu0 %v44
    %1623 = vmatprep.subr.mxu0 0.0
    %1624 = vmatpush1.msra.mxu0 0.0
    %1625 = vmatprep.subr.mxu0 0.0
    %1626 = vmatpush1.msra.mxu0 0.0
    %1627 = vmatprep.subr.mxu0 0.0
    %1628 = vmatpush1.msra.mxu0 0.0
    %1629 = vmatprep.subr.mxu0 0.0
    %1630 = vmatpush1.msra.mxu0 0.0
    %1631 = vmatprep.subr.mxu0 0.0
    %1632 = vmatpush1.msra.mxu0 0.0
    %1633 = vmatprep.subr.mxu0 0.0
    %1634 = vmatpush1.msra.mxu0 0.0
    %1635 = vmatprep.subr.mxu0 0.0
    %1636 = vmatpush1.msra.mxu0 0.0
    %1637 = vmatprep.subr.mxu0 0.0
    %1638 = vmatpush1.msra.mxu0 0.0
    %1639 = vmatprep.subr.mxu0 0.0
    %1640 = vmatpush1.msra.mxu0 0.0
    %1641 = vmatprep.subr.mxu0 0.0
    %1642 = vmatpush1.msra.mxu0 0.0
    %1643 = vmatprep.subr.mxu0 0.0
    %1644 = vmatpush1.msra.mxu0 0.0
    %1645 = vmatprep.subr.mxu0 0.0
    %1646 = vmatpush1.msra.mxu0 0.0
    %1647 = vmatprep.subr.mxu0 0.0
    %1648 = vmatpush1.msra.mxu0 0.0
    %1649 = vmatprep.subr.mxu0 0.0
    %1650 = vmatpush1.msra.mxu0 0.0
    %1651 = vmatprep.subr.mxu0 0.0
    %1652 = vmatpush1.msra.mxu0 0.0
    %1653 = vmatprep.subr.mxu0 0.0
    %1654 = vmatpush1.msra.mxu0 0.0
    %1655 = vmatprep.subr.mxu0 0.0
    %1656 = vmatpush1.msra.mxu0 0.0
    %1657 = vmatprep.subr.mxu0 0.0
    %1658 = vmatpush1.msra.mxu0 0.0
    %1659 = vmatprep.subr.mxu0 0.0
    %1660 = vmatpush1.msra.mxu0 0.0
    %1661 = vmatprep.subr.mxu0 0.0
    %1662 = vmatpush1.msra.mxu0 0.0
    %1663 = vmatprep.subr.mxu0 0.0
    %1664 = vmatpush1.msra.mxu0 0.0
    %1665 = vmatprep.subr.mxu0 0.0
    %1666 = vmatpush1.msra.mxu0 0.0
    %1667 = vmatprep.subr.mxu0 0.0
    %1668 = vmatpush1.msra.mxu0 0.0
    %1669 = vmatprep.subr.mxu0 0.0
    %1670 = vmatpush1.msra.mxu0 0.0
    %1671 = vmatprep.subr.mxu0 0.0
    %1672 = vmatpush1.msra.mxu0 0.0
    %1673 = vmatprep.subr.mxu0 0.0
    %1674 = vmatpush1.msra.mxu0 0.0
    %1675 = vmatprep.subr.mxu0 0.0
    %1676 = vmatpush1.msra.mxu0 0.0
    %1677 = vmatprep.subr.mxu0 0.0
    %1678 = vmatpush1.msra.mxu0 0.0
    %1679 = vmatprep.subr.mxu0 0.0
    %1680 = vmatpush1.msra.mxu0 0.0
    %1681 = vmatprep.subr.mxu0 0.0
    %1682 = vmatpush1.msra.mxu0 0.0
    %1683 = vmatprep.mubr.f32.mxu0 0.0
    %1684 = vmatmul.mubr.f32.gmra.mrb[0].mxu0 %v1617
    %v1685 = vpop.f32.mrb[0].mxu0
    %v1686 = vadd.f32 0.0, %v1685
    %v1687 = vpop.f32.mrb[0].mxu0
    %1688 = vdwg.mxu0
    %1689 = vmatprep.subr.mxu0 0.0
    %1690 = vmatpush1.msra.mxu0 %v39
    %1691 = vmatprep.subr.mxu0 0.0
    %1692 = vmatpush1.msra.mxu0 %v40
    %1693 = vmatprep.subr.mxu0 0.0
    %1694 = vmatpush1.msra.mxu0 %v41
    %1695 = vmatprep.subr.mxu0 0.0
    %1696 = vmatpush1.msra.mxu0 %v42
    %1697 = vmatprep.subr.mxu0 0.0
    %1698 = vmatpush1.msra.mxu0 0.0
    %1699 = vmatprep.subr.mxu0 0.0
    %1700 = vmatpush1.msra.mxu0 0.0
    %1701 = vmatprep.subr.mxu0 0.0
    %1702 = vmatpush1.msra.mxu0 0.0
    %1703 = vmatprep.subr.mxu0 0.0
    %1704 = vmatpush1.msra.mxu0 0.0
    %1705 = vmatprep.subr.mxu0 0.0
    %1706 = vmatpush1.msra.mxu0 0.0
    %1707 = vmatprep.subr.mxu0 0.0
    %1708 = vmatpush1.msra.mxu0 0.0
    %1709 = vmatprep.subr.mxu0 0.0
    %1710 = vmatpush1.msra.mxu0 0.0
    %1711 = vmatprep.subr.mxu0 0.0
    %1712 = vmatpush1.msra.mxu0 0.0
    %1713 = vmatprep.subr.mxu0 0.0
    %1714 = vmatpush1.msra.mxu0 0.0
    %1715 = vmatprep.subr.mxu0 0.0
    %1716 = vmatpush1.msra.mxu0 0.0
    %1717 = vmatprep.subr.mxu0 0.0
    %1718 = vmatpush1.msra.mxu0 0.0
    %1719 = vmatprep.subr.mxu0 0.0
    %1720 = vmatpush1.msra.mxu0 0.0
    %1721 = vmatprep.subr.mxu0 0.0
    %1722 = vmatpush1.msra.mxu0 0.0
    %1723 = vmatprep.subr.mxu0 0.0
    %1724 = vmatpush1.msra.mxu0 0.0
    %1725 = vmatprep.subr.mxu0 0.0
    %1726 = vmatpush1.msra.mxu0 0.0
    %1727 = vmatprep.subr.mxu0 0.0
    %1728 = vmatpush1.msra.mxu0 0.0
    %1729 = vmatprep.subr.mxu0 0.0
    %1730 = vmatpush1.msra.mxu0 0.0
    %1731 = vmatprep.subr.mxu0 0.0
    %1732 = vmatpush1.msra.mxu0 0.0
    %1733 = vmatprep.subr.mxu0 0.0
    %1734 = vmatpush1.msra.mxu0 0.0
    %1735 = vmatprep.subr.mxu0 0.0
    %1736 = vmatpush1.msra.mxu0 0.0
    %1737 = vmatprep.subr.mxu0 0.0
    %1738 = vmatpush1.msra.mxu0 0.0
    %1739 = vmatprep.subr.mxu0 0.0
    %1740 = vmatpush1.msra.mxu0 0.0
    %1741 = vmatprep.subr.mxu0 0.0
    %1742 = vmatpush1.msra.mxu0 0.0
    %1743 = vmatprep.subr.mxu0 0.0
    %1744 = vmatpush1.msra.mxu0 0.0
    %1745 = vmatprep.subr.mxu0 0.0
    %1746 = vmatpush1.msra.mxu0 0.0
    %1747 = vmatprep.subr.mxu0 0.0
    %1748 = vmatpush1.msra.mxu0 0.0
    %1749 = vmatprep.subr.mxu0 0.0
    %1750 = vmatpush1.msra.mxu0 0.0
    %1751 = vmatprep.subr.mxu0 0.0
    %1752 = vmatpush1.msra.mxu0 0.0
    %1753 = vmatprep.mubr.f32.mxu0 0.0
    %1754 = vmatmul.mubr.f32.gmra.mrb[0].mxu0 %v1542
    %v1755 = vpop.f32.mrb[0].mxu0
    %v1756 = vadd.f32 %v1686, %v1755
    %v1757 = vpop.f32.mrb[0].mxu0
    %1758 = vdwg.mxu0
    %v1759 = vadd.f32 %v1756, %v649
    %v1760 = vtanh.pop %v1759
    %1761 = vmatprep.subr.mxu0 0.0
    %1762 = vmatpush1.msra.mxu0 %v47
    %1763 = vmatprep.subr.mxu0 0.0
    %1764 = vmatpush1.msra.mxu0 0.0
    %1765 = vmatprep.subr.mxu0 0.0
    %1766 = vmatpush1.msra.mxu0 0.0
    %1767 = vmatprep.subr.mxu0 0.0
    %1768 = vmatpush1.msra.mxu0 0.0
    %1769 = vmatprep.subr.mxu0 0.0
    %1770 = vmatpush1.msra.mxu0 0.0
    %1771 = vmatprep.subr.mxu0 0.0
    %1772 = vmatpush1.msra.mxu0 0.0
    %1773 = vmatprep.subr.mxu0 0.0
    %1774 = vmatpush1.msra.mxu0 0.0
    %1775 = vmatprep.subr.mxu0 0.0
    %1776 = vmatpush1.msra.mxu0 0.0
    %1777 = vmatprep.subr.mxu0 0.0
    %1778 = vmatpush1.msra.mxu0 0.0
    %1779 = vmatprep.subr.mxu0 0.0
    %1780 = vmatpush1.msra.mxu0 0.0
    %1781 = vmatprep.subr.mxu0 0.0
    %1782 = vmatpush1.msra.mxu0 0.0
    %1783 = vmatprep.subr.mxu0 0.0
    %1784 = vmatpush1.msra.mxu0 0.0
    %1785 = vmatprep.subr.mxu0 0.0
    %1786 = vmatpush1.msra.mxu0 0.0
    %1787 = vmatprep.subr.mxu0 0.0
    %1788 = vmatpush1.msra.mxu0 0.0
    %1789 = vmatprep.subr.mxu0 0.0
    %1790 = vmatpush1.msra.mxu0 0.0
    %1791 = vmatprep.subr.mxu0 0.0
    %1792 = vmatpush1.msra.mxu0 0.0
    %1793 = vmatprep.subr.mxu0 0.0
    %1794 = vmatpush1.msra.mxu0 0.0
    %1795 = vmatprep.subr.mxu0 0.0
    %1796 = vmatpush1.msra.mxu0 0.0
    %1797 = vmatprep.subr.mxu0 0.0
    %1798 = vmatpush1.msra.mxu0 0.0
    %1799 = vmatprep.subr.mxu0 0.0
    %1800 = vmatpush1.msra.mxu0 0.0
    %1801 = vmatprep.subr.mxu0 0.0
    %1802 = vmatpush1.msra.mxu0 0.0
    %1803 = vmatprep.subr.mxu0 0.0
    %1804 = vmatpush1.msra.mxu0 0.0
    %1805 = vmatprep.subr.mxu0 0.0
    %1806 = vmatpush1.msra.mxu0 0.0
    %1807 = vmatprep.subr.mxu0 0.0
    %1808 = vmatpush1.msra.mxu0 0.0
    %1809 = vmatprep.subr.mxu0 0.0
    %1810 = vmatpush1.msra.mxu0 0.0
    %1811 = vmatprep.subr.mxu0 0.0
    %1812 = vmatpush1.msra.mxu0 0.0
    %1813 = vmatprep.subr.mxu0 0.0
    %1814 = vmatpush1.msra.mxu0 0.0
    %1815 = vmatprep.subr.mxu0 0.0
    %1816 = vmatpush1.msra.mxu0 0.0
    %1817 = vmatprep.subr.mxu0 0.0
    %1818 = vmatpush1.msra.mxu0 0.0
    %1819 = vmatprep.subr.mxu0 0.0
    %1820 = vmatpush1.msra.mxu0 0.0
    %1821 = vmatprep.subr.mxu0 0.0
    %1822 = vmatpush1.msra.mxu0 0.0
    %1823 = vmatprep.subr.mxu0 0.0
    %1824 = vmatpush1.msra.mxu0 0.0
    %1825 = vmatprep.mubr.f32.mxu0 0.0
    %1826 = vmatmul.mubr.f32.gmra.mrb[0].mxu0 %v1465
    %v1827 = vpop.f32.mrb[0].mxu0
    %v1828 = vadd.f32 0.0, %v1827
    %v1829 = vpop.f32.mrb[0].mxu0
    %1830 = vdwg.mxu0
    %1831 = vmatprep.subr.mxu0 0.0
    %1832 = vmatpush1.msra.mxu0 %v45
    %1833 = vmatprep.subr.mxu0 0.0
    %1834 = vmatpush1.msra.mxu0 %v46
    %1835 = vmatprep.subr.mxu0 0.0
    %1836 = vmatpush1.msra.mxu0 0.0
    %1837 = vmatprep.subr.mxu0 0.0
    %1838 = vmatpush1.msra.mxu0 0.0
    %1839 = vmatprep.subr.mxu0 0.0
    %1840 = vmatpush1.msra.mxu0 0.0
    %1841 = vmatprep.subr.mxu0 0.0
    %1842 = vmatpush1.msra.mxu0 0.0
    %1843 = vmatprep.subr.mxu0 0.0
    %1844 = vmatpush1.msra.mxu0 0.0
    %1845 = vmatprep.subr.mxu0 0.0
    %1846 = vmatpush1.msra.mxu0 0.0
    %1847 = vmatprep.subr.mxu0 0.0
    %1848 = vmatpush1.msra.mxu0 0.0
    %1849 = vmatprep.subr.mxu0 0.0
    %1850 = vmatpush1.msra.mxu0 0.0
    %1851 = vmatprep.subr.mxu0 0.0
    %1852 = vmatpush1.msra.mxu0 0.0
    %1853 = vmatprep.subr.mxu0 0.0
    %1854 = vmatpush1.msra.mxu0 0.0
    %1855 = vmatprep.subr.mxu0 0.0
    %1856 = vmatpush1.msra.mxu0 0.0
    %1857 = vmatprep.subr.mxu0 0.0
    %1858 = vmatpush1.msra.mxu0 0.0
    %1859 = vmatprep.subr.mxu0 0.0
    %1860 = vmatpush1.msra.mxu0 0.0
    %1861 = vmatprep.subr.mxu0 0.0
    %1862 = vmatpush1.msra.mxu0 0.0
    %1863 = vmatprep.subr.mxu0 0.0
    %1864 = vmatpush1.msra.mxu0 0.0
    %1865 = vmatprep.subr.mxu0 0.0
    %1866 = vmatpush1.msra.mxu0 0.0
    %1867 = vmatprep.subr.mxu0 0.0
    %1868 = vmatpush1.msra.mxu0 0.0
    %1869 = vmatprep.subr.mxu0 0.0
    %1870 = vmatpush1.msra.mxu0 0.0
    %1871 = vmatprep.subr.mxu0 0.0
    %1872 = vmatpush1.msra.mxu0 0.0
    %1873 = vmatprep.subr.mxu0 0.0
    %1874 = vmatpush1.msra.mxu0 0.0
    %1875 = vmatprep.subr.mxu0 0.0
    %1876 = vmatpush1.msra.mxu0 0.0
    %1877 = vmatprep.subr.mxu0 0.0
    %1878 = vmatpush1.msra.mxu0 0.0
    %1879 = vmatprep.subr.mxu0 0.0
    %1880 = vmatpush1.msra.mxu0 0.0
    %1881 = vmatprep.subr.mxu0 0.0
    %1882 = vmatpush1.msra.mxu0 0.0
    %1883 = vmatprep.subr.mxu0 0.0
    %1884 = vmatpush1.msra.mxu0 0.0
    %1885 = vmatprep.subr.mxu0 0.0
    %1886 = vmatpush1.msra.mxu0 0.0
    %1887 = vmatprep.subr.mxu0 0.0
    %1888 = vmatpush1.msra.mxu0 0.0
    %1889 = vmatprep.subr.mxu0 0.0
    %1890 = vmatpush1.msra.mxu0 0.0
    %1891 = vmatprep.subr.mxu0 0.0
    %1892 = vmatpush1.msra.mxu0 0.0
    %1893 = vmatprep.subr.mxu0 0.0
    %1894 = vmatpush1.msra.mxu0 0.0
    %1895 = vmatprep.mubr.f32.mxu0 0.0
    %1896 = vmatmul.mubr.f32.gmra.mrb[0].mxu0 %v1617
    %v1897 = vpop.f32.mrb[0].mxu0
    %v1898 = vadd.f32 %v1828, %v1897
    %v1899 = vpop.f32.mrb[0].mxu0
    %1900 = vdwg.mxu0
    %v1901 = vadd.f32 %v1898, %v1018
    %v1902 = vtanh.pop %v1901
    %v1904 = vsel %vm872, %v1902, 0
    %1906 = vmatprep.subr.mxu0 0.0
    %1907 = vmatpush1.msra.mxu0 %v48
    %1908 = vmatprep.subr.mxu0 0.0
    %1909 = vmatpush1.msra.mxu0 0.0
    %1910 = vmatprep.subr.mxu0 0.0
    %1911 = vmatpush1.msra.mxu0 0.0
    %1912 = vmatprep.subr.mxu0 0.0
    %1913 = vmatpush1.msra.mxu0 0.0
    %1914 = vmatprep.subr.mxu0 0.0
    %1915 = vmatpush1.msra.mxu0 0.0
    %1916 = vmatprep.subr.mxu0 0.0
    %1917 = vmatpush1.msra.mxu0 0.0
    %1918 = vmatprep.subr.mxu0 0.0
    %1919 = vmatpush1.msra.mxu0 0.0
    %1920 = vmatprep.subr.mxu0 0.0
    %1921 = vmatpush1.msra.mxu0 0.0
    %1922 = vmatprep.subr.mxu0 0.0
    %1923 = vmatpush1.msra.mxu0 0.0
    %1924 = vmatprep.subr.mxu0 0.0
    %1925 = vmatpush1.msra.mxu0 0.0
    %1926 = vmatprep.subr.mxu0 0.0
    %1927 = vmatpush1.msra.mxu0 0.0
    %1928 = vmatprep.subr.mxu0 0.0
    %1929 = vmatpush1.msra.mxu0 0.0
    %1930 = vmatprep.subr.mxu0 0.0
    %1931 = vmatpush1.msra.mxu0 0.0
    %1932 = vmatprep.subr.mxu0 0.0
    %1933 = vmatpush1.msra.mxu0 0.0
    %1934 = vmatprep.subr.mxu0 0.0
    %1935 = vmatpush1.msra.mxu0 0.0
    %1936 = vmatprep.subr.mxu0 0.0
    %1937 = vmatpush1.msra.mxu0 0.0
    %1938 = vmatprep.subr.mxu0 0.0
    %1939 = vmatpush1.msra.mxu0 0.0
    %1940 = vmatprep.subr.mxu0 0.0
    %1941 = vmatpush1.msra.mxu0 0.0
    %1942 = vmatprep.subr.mxu0 0.0
    %1943 = vmatpush1.msra.mxu0 0.0
    %1944 = vmatprep.subr.mxu0 0.0
    %1945 = vmatpush1.msra.mxu0 0.0
    %1946 = vmatprep.subr.mxu0 0.0
    %1947 = vmatpush1.msra.mxu0 0.0
    %1948 = vmatprep.subr.mxu0 0.0
    %1949 = vmatpush1.msra.mxu0 0.0
    %1950 = vmatprep.subr.mxu0 0.0
    %1951 = vmatpush1.msra.mxu0 0.0
    %1952 = vmatprep.subr.mxu0 0.0
    %1953 = vmatpush1.msra.mxu0 0.0
    %1954 = vmatprep.subr.mxu0 0.0
    %1955 = vmatpush1.msra.mxu0 0.0
    %1956 = vmatprep.subr.mxu0 0.0
    %1957 = vmatpush1.msra.mxu0 0.0
    %1958 = vmatprep.subr.mxu0 0.0
    %1959 = vmatpush1.msra.mxu0 0.0
    %1960 = vmatprep.subr.mxu0 0.0
    %1961 = vmatpush1.msra.mxu0 0.0
    %1962 = vmatprep.subr.mxu0 0.0
    %1963 = vmatpush1.msra.mxu0 0.0
    %1964 = vmatprep.subr.mxu0 0.0
    %1965 = vmatpush1.msra.mxu0 0.0
    %1966 = vmatprep.subr.mxu0 0.0
    %1967 = vmatpush1.msra.mxu0 0.0
    %1968 = vmatprep.subr.mxu0 0.0
    %1969 = vmatpush1.msra.mxu0 0.0
    %1970 = vmatprep.mubr.f32.mxu0 0.0
    %1971 = vmatmul.mubr.f32.gmra.mrb[0].mxu0 %v1904
    %v1972 = vpop.f32.mrb[0].mxu0
    %v1973 = vadd.f32 %v1024, %v1972
    %v1974 = vpop.f32.mrb[0].mxu0
    %1975 = vdwg.mxu0
    %vm1976 = vcmp.gt.f32.partialorder %v1973, 0.0
    %v1977 = vmul.f32 %v1973, 0.01
    %v1978 = vsel %vm1976, %v1973, %v1977
    %1979 = vst [vmem:[#allocation5 + $0x10] sm:$0xff] %v1978
    %v1981 = vsel %vm224, %v1615, 0
    %1983 = vmatprep.subr.mxu0 0.0
    %1984 = vmatpush1.msra.mxu0 %v35
    %1985 = vmatprep.subr.mxu0 0.0
    %1986 = vmatpush1.msra.mxu0 %v36
    %1987 = vmatprep.subr.mxu0 0.0
    %1988 = vmatpush1.msra.mxu0 %v37
    %1989 = vmatprep.subr.mxu0 0.0
    %1990 = vmatpush1.msra.mxu0 %v38
    %1991 = vmatprep.subr.mxu0 0.0
    %1992 = vmatpush1.msra.mxu0 0.0
    %1993 = vmatprep.subr.mxu0 0.0
    %1994 = vmatpush1.msra.mxu0 0.0
    %1995 = vmatprep.subr.mxu0 0.0
    %1996 = vmatpush1.msra.mxu0 0.0
    %1997 = vmatprep.subr.mxu0 0.0
    %1998 = vmatpush1.msra.mxu0 0.0
    %1999 = vmatprep.subr.mxu0 0.0
    %2000 = vmatpush1.msra.mxu0 0.0
    %2001 = vmatprep.subr.mxu0 0.0
    %2002 = vmatpush1.msra.mxu0 0.0
    %2003 = vmatprep.subr.mxu0 0.0
    %2004 = vmatpush1.msra.mxu0 0.0
    %2005 = vmatprep.subr.mxu0 0.0
    %2006 = vmatpush1.msra.mxu0 0.0
    %2007 = vmatprep.subr.mxu0 0.0
    %2008 = vmatpush1.msra.mxu0 0.0
    %2009 = vmatprep.subr.mxu0 0.0
    %2010 = vmatpush1.msra.mxu0 0.0
    %2011 = vmatprep.subr.mxu0 0.0
    %2012 = vmatpush1.msra.mxu0 0.0
    %2013 = vmatprep.subr.mxu0 0.0
    %2014 = vmatpush1.msra.mxu0 0.0
    %2015 = vmatprep.subr.mxu0 0.0
    %2016 = vmatpush1.msra.mxu0 0.0
    %2017 = vmatprep.subr.mxu0 0.0
    %2018 = vmatpush1.msra.mxu0 0.0
    %2019 = vmatprep.subr.mxu0 0.0
    %2020 = vmatpush1.msra.mxu0 0.0
    %2021 = vmatprep.subr.mxu0 0.0
    %2022 = vmatpush1.msra.mxu0 0.0
    %2023 = vmatprep.subr.mxu0 0.0
    %2024 = vmatpush1.msra.mxu0 0.0
    %2025 = vmatprep.subr.mxu0 0.0
    %2026 = vmatpush1.msra.mxu0 0.0
    %2027 = vmatprep.subr.mxu0 0.0
    %2028 = vmatpush1.msra.mxu0 0.0
    %2029 = vmatprep.subr.mxu0 0.0
    %2030 = vmatpush1.msra.mxu0 0.0
    %2031 = vmatprep.subr.mxu0 0.0
    %2032 = vmatpush1.msra.mxu0 0.0
    %2033 = vmatprep.subr.mxu0 0.0
    %2034 = vmatpush1.msra.mxu0 0.0
    %2035 = vmatprep.subr.mxu0 0.0
    %2036 = vmatpush1.msra.mxu0 0.0
    %2037 = vmatprep.subr.mxu0 0.0
    %2038 = vmatpush1.msra.mxu0 0.0
    %2039 = vmatprep.subr.mxu0 0.0
    %2040 = vmatpush1.msra.mxu0 0.0
    %2041 = vmatprep.subr.mxu0 0.0
    %2042 = vmatpush1.msra.mxu0 0.0
    %2043 = vmatprep.subr.mxu0 0.0
    %2044 = vmatpush1.msra.mxu0 0.0
    %2045 = vmatprep.subr.mxu0 0.0
    %2046 = vmatpush1.msra.mxu0 0.0
    %2047 = vmatprep.mubr.f32.mxu0 0.0
    %2048 = vmatmul.mubr.f32.gmra.mrb[0].mxu0 %v1981
    %v2049 = vpop.f32.mrb[0].mxu0
    %v2050 = vadd.f32 0.0, %v2049
    %v2051 = vpop.f32.mrb[0].mxu0
    %2052 = vdwg.mxu0
    %v2053 = vadd.f32 %v341, %v2050
    %v2054 = vtanh.pop %v2053
    %v2056 = vsel %vm66, %v1760, 0
    %2058 = vmatprep.subr.mxu0 0.0
    %2059 = vmatpush1.msra.mxu0 %v43
    %2060 = vmatprep.subr.mxu0 0.0
    %2061 = vmatpush1.msra.mxu0 %v44
    %2062 = vmatprep.subr.mxu0 0.0
    %2063 = vmatpush1.msra.mxu0 0.0
    %2064 = vmatprep.subr.mxu0 0.0
    %2065 = vmatpush1.msra.mxu0 0.0
    %2066 = vmatprep.subr.mxu0 0.0
    %2067 = vmatpush1.msra.mxu0 0.0
    %2068 = vmatprep.subr.mxu0 0.0
    %2069 = vmatpush1.msra.mxu0 0.0
    %2070 = vmatprep.subr.mxu0 0.0
    %2071 = vmatpush1.msra.mxu0 0.0
    %2072 = vmatprep.subr.mxu0 0.0
    %2073 = vmatpush1.msra.mxu0 0.0
    %2074 = vmatprep.subr.mxu0 0.0
    %2075 = vmatpush1.msra.mxu0 0.0
    %2076 = vmatprep.subr.mxu0 0.0
    %2077 = vmatpush1.msra.mxu0 0.0
    %2078 = vmatprep.subr.mxu0 0.0
    %2079 = vmatpush1.msra.mxu0 0.0
    %2080 = vmatprep.subr.mxu0 0.0
    %2081 = vmatpush1.msra.mxu0 0.0
    %2082 = vmatprep.subr.mxu0 0.0
    %2083 = vmatpush1.msra.mxu0 0.0
    %2084 = vmatprep.subr.mxu0 0.0
    %2085 = vmatpush1.msra.mxu0 0.0
    %2086 = vmatprep.subr.mxu0 0.0
    %2087 = vmatpush1.msra.mxu0 0.0
    %2088 = vmatprep.subr.mxu0 0.0
    %2089 = vmatpush1.msra.mxu0 0.0
    %2090 = vmatprep.subr.mxu0 0.0
    %2091 = vmatpush1.msra.mxu0 0.0
    %2092 = vmatprep.subr.mxu0 0.0
    %2093 = vmatpush1.msra.mxu0 0.0
    %2094 = vmatprep.subr.mxu0 0.0
    %2095 = vmatpush1.msra.mxu0 0.0
    %2096 = vmatprep.subr.mxu0 0.0
    %2097 = vmatpush1.msra.mxu0 0.0
    %2098 = vmatprep.subr.mxu0 0.0
    %2099 = vmatpush1.msra.mxu0 0.0
    %2100 = vmatprep.subr.mxu0 0.0
    %2101 = vmatpush1.msra.mxu0 0.0
    %2102 = vmatprep.subr.mxu0 0.0
    %2103 = vmatpush1.msra.mxu0 0.0
    %2104 = vmatprep.subr.mxu0 0.0
    %2105 = vmatpush1.msra.mxu0 0.0
    %2106 = vmatprep.subr.mxu0 0.0
    %2107 = vmatpush1.msra.mxu0 0.0
    %2108 = vmatprep.subr.mxu0 0.0
    %2109 = vmatpush1.msra.mxu0 0.0
    %2110 = vmatprep.subr.mxu0 0.0
    %2111 = vmatpush1.msra.mxu0 0.0
    %2112 = vmatprep.subr.mxu0 0.0
    %2113 = vmatpush1.msra.mxu0 0.0
    %2114 = vmatprep.subr.mxu0 0.0
    %2115 = vmatpush1.msra.mxu0 0.0
    %2116 = vmatprep.subr.mxu0 0.0
    %2117 = vmatpush1.msra.mxu0 0.0
    %2118 = vmatprep.subr.mxu0 0.0
    %2119 = vmatpush1.msra.mxu0 0.0
    %2120 = vmatprep.subr.mxu0 0.0
    %2121 = vmatpush1.msra.mxu0 0.0
    %2122 = vmatprep.mubr.f32.mxu0 0.0
    %2123 = vmatmul.mubr.f32.gmra.mrb[0].mxu0 %v2056
    %v2124 = vpop.f32.mrb[0].mxu0
    %v2125 = vadd.f32 0.0, %v2124
    %v2126 = vpop.f32.mrb[0].mxu0
    %2127 = vdwg.mxu0
    %2128 = vmatprep.subr.mxu0 0.0
    %2129 = vmatpush1.msra.mxu0 %v39
    %2130 = vmatprep.subr.mxu0 0.0
    %2131 = vmatpush1.msra.mxu0 %v40
    %2132 = vmatprep.subr.mxu0 0.0
    %2133 = vmatpush1.msra.mxu0 %v41
    %2134 = vmatprep.subr.mxu0 0.0
    %2135 = vmatpush1.msra.mxu0 %v42
    %2136 = vmatprep.subr.mxu0 0.0
    %2137 = vmatpush1.msra.mxu0 0.0
    %2138 = vmatprep.subr.mxu0 0.0
    %2139 = vmatpush1.msra.mxu0 0.0
    %2140 = vmatprep.subr.mxu0 0.0
    %2141 = vmatpush1.msra.mxu0 0.0
    %2142 = vmatprep.subr.mxu0 0.0
    %2143 = vmatpush1.msra.mxu0 0.0
    %2144 = vmatprep.subr.mxu0 0.0
    %2145 = vmatpush1.msra.mxu0 0.0
    %2146 = vmatprep.subr.mxu0 0.0
    %2147 = vmatpush1.msra.mxu0 0.0
    %2148 = vmatprep.subr.mxu0 0.0
    %2149 = vmatpush1.msra.mxu0 0.0
    %2150 = vmatprep.subr.mxu0 0.0
    %2151 = vmatpush1.msra.mxu0 0.0
    %2152 = vmatprep.subr.mxu0 0.0
    %2153 = vmatpush1.msra.mxu0 0.0
    %2154 = vmatprep.subr.mxu0 0.0
    %2155 = vmatpush1.msra.mxu0 0.0
    %2156 = vmatprep.subr.mxu0 0.0
    %2157 = vmatpush1.msra.mxu0 0.0
    %2158 = vmatprep.subr.mxu0 0.0
    %2159 = vmatpush1.msra.mxu0 0.0
    %2160 = vmatprep.subr.mxu0 0.0
    %2161 = vmatpush1.msra.mxu0 0.0
    %2162 = vmatprep.subr.mxu0 0.0
    %2163 = vmatpush1.msra.mxu0 0.0
    %2164 = vmatprep.subr.mxu0 0.0
    %2165 = vmatpush1.msra.mxu0 0.0
    %2166 = vmatprep.subr.mxu0 0.0
    %2167 = vmatpush1.msra.mxu0 0.0
    %2168 = vmatprep.subr.mxu0 0.0
    %2169 = vmatpush1.msra.mxu0 0.0
    %2170 = vmatprep.subr.mxu0 0.0
    %2171 = vmatpush1.msra.mxu0 0.0
    %2172 = vmatprep.subr.mxu0 0.0
    %2173 = vmatpush1.msra.mxu0 0.0
    %2174 = vmatprep.subr.mxu0 0.0
    %2175 = vmatpush1.msra.mxu0 0.0
    %2176 = vmatprep.subr.mxu0 0.0
    %2177 = vmatpush1.msra.mxu0 0.0
    %2178 = vmatprep.subr.mxu0 0.0
    %2179 = vmatpush1.msra.mxu0 0.0
    %2180 = vmatprep.subr.mxu0 0.0
    %2181 = vmatpush1.msra.mxu0 0.0
    %2182 = vmatprep.subr.mxu0 0.0
    %2183 = vmatpush1.msra.mxu0 0.0
    %2184 = vmatprep.subr.mxu0 0.0
    %2185 = vmatpush1.msra.mxu0 0.0
    %2186 = vmatprep.subr.mxu0 0.0
    %2187 = vmatpush1.msra.mxu0 0.0
    %2188 = vmatprep.subr.mxu0 0.0
    %2189 = vmatpush1.msra.mxu0 0.0
    %2190 = vmatprep.subr.mxu0 0.0
    %2191 = vmatpush1.msra.mxu0 0.0
    %2192 = vmatprep.mubr.f32.mxu0 0.0
    %2193 = vmatmul.mubr.f32.gmra.mrb[0].mxu0 %v1981
    %v2194 = vpop.f32.mrb[0].mxu0
    %v2195 = vadd.f32 %v2125, %v2194
    %v2196 = vpop.f32.mrb[0].mxu0
    %2197 = vdwg.mxu0
    %v2198 = vadd.f32 %v2195, %v649
    %v2199 = vtanh.pop %v2198
    %2200 = vmatprep.subr.mxu0 0.0
    %2201 = vmatpush1.msra.mxu0 %v47
    %2202 = vmatprep.subr.mxu0 0.0
    %2203 = vmatpush1.msra.mxu0 0.0
    %2204 = vmatprep.subr.mxu0 0.0
    %2205 = vmatpush1.msra.mxu0 0.0
    %2206 = vmatprep.subr.mxu0 0.0
    %2207 = vmatpush1.msra.mxu0 0.0
    %2208 = vmatprep.subr.mxu0 0.0
    %2209 = vmatpush1.msra.mxu0 0.0
    %2210 = vmatprep.subr.mxu0 0.0
    %2211 = vmatpush1.msra.mxu0 0.0
    %2212 = vmatprep.subr.mxu0 0.0
    %2213 = vmatpush1.msra.mxu0 0.0
    %2214 = vmatprep.subr.mxu0 0.0
    %2215 = vmatpush1.msra.mxu0 0.0
    %2216 = vmatprep.subr.mxu0 0.0
    %2217 = vmatpush1.msra.mxu0 0.0
    %2218 = vmatprep.subr.mxu0 0.0
    %2219 = vmatpush1.msra.mxu0 0.0
    %2220 = vmatprep.subr.mxu0 0.0
    %2221 = vmatpush1.msra.mxu0 0.0
    %2222 = vmatprep.subr.mxu0 0.0
    %2223 = vmatpush1.msra.mxu0 0.0
    %2224 = vmatprep.subr.mxu0 0.0
    %2225 = vmatpush1.msra.mxu0 0.0
    %2226 = vmatprep.subr.mxu0 0.0
    %2227 = vmatpush1.msra.mxu0 0.0
    %2228 = vmatprep.subr.mxu0 0.0
    %2229 = vmatpush1.msra.mxu0 0.0
    %2230 = vmatprep.subr.mxu0 0.0
    %2231 = vmatpush1.msra.mxu0 0.0
    %2232 = vmatprep.subr.mxu0 0.0
    %2233 = vmatpush1.msra.mxu0 0.0
    %2234 = vmatprep.subr.mxu0 0.0
    %2235 = vmatpush1.msra.mxu0 0.0
    %2236 = vmatprep.subr.mxu0 0.0
    %2237 = vmatpush1.msra.mxu0 0.0
    %2238 = vmatprep.subr.mxu0 0.0
    %2239 = vmatpush1.msra.mxu0 0.0
    %2240 = vmatprep.subr.mxu0 0.0
    %2241 = vmatpush1.msra.mxu0 0.0
    %2242 = vmatprep.subr.mxu0 0.0
    %2243 = vmatpush1.msra.mxu0 0.0
    %2244 = vmatprep.subr.mxu0 0.0
    %2245 = vmatpush1.msra.mxu0 0.0
    %2246 = vmatprep.subr.mxu0 0.0
    %2247 = vmatpush1.msra.mxu0 0.0
    %2248 = vmatprep.subr.mxu0 0.0
    %2249 = vmatpush1.msra.mxu0 0.0
    %2250 = vmatprep.subr.mxu0 0.0
    %2251 = vmatpush1.msra.mxu0 0.0
    %2252 = vmatprep.subr.mxu0 0.0
    %2253 = vmatpush1.msra.mxu0 0.0
    %2254 = vmatprep.subr.mxu0 0.0
    %2255 = vmatpush1.msra.mxu0 0.0
    %2256 = vmatprep.subr.mxu0 0.0
    %2257 = vmatpush1.msra.mxu0 0.0
    %2258 = vmatprep.subr.mxu0 0.0
    %2259 = vmatpush1.msra.mxu0 0.0
    %2260 = vmatprep.subr.mxu0 0.0
    %2261 = vmatpush1.msra.mxu0 0.0
    %2262 = vmatprep.subr.mxu0 0.0
    %2263 = vmatpush1.msra.mxu0 0.0
    %2264 = vmatprep.mubr.f32.mxu0 0.0
    %2265 = vmatmul.mubr.f32.gmra.mrb[0].mxu0 %v1904
    %v2266 = vpop.f32.mrb[0].mxu0
    %v2267 = vadd.f32 0.0, %v2266
    %v2268 = vpop.f32.mrb[0].mxu0
    %2269 = vdwg.mxu0
    %2270 = vmatprep.subr.mxu0 0.0
    %2271 = vmatpush1.msra.mxu0 %v45
    %2272 = vmatprep.subr.mxu0 0.0
    %2273 = vmatpush1.msra.mxu0 %v46
    %2274 = vmatprep.subr.mxu0 0.0
    %2275 = vmatpush1.msra.mxu0 0.0
    %2276 = vmatprep.subr.mxu0 0.0
    %2277 = vmatpush1.msra.mxu0 0.0
    %2278 = vmatprep.subr.mxu0 0.0
    %2279 = vmatpush1.msra.mxu0 0.0
    %2280 = vmatprep.subr.mxu0 0.0
    %2281 = vmatpush1.msra.mxu0 0.0
    %2282 = vmatprep.subr.mxu0 0.0
    %2283 = vmatpush1.msra.mxu0 0.0
    %2284 = vmatprep.subr.mxu0 0.0
    %2285 = vmatpush1.msra.mxu0 0.0
    %2286 = vmatprep.subr.mxu0 0.0
    %2287 = vmatpush1.msra.mxu0 0.0
    %2288 = vmatprep.subr.mxu0 0.0
    %2289 = vmatpush1.msra.mxu0 0.0
    %2290 = vmatprep.subr.mxu0 0.0
    %2291 = vmatpush1.msra.mxu0 0.0
    %2292 = vmatprep.subr.mxu0 0.0
    %2293 = vmatpush1.msra.mxu0 0.0
    %2294 = vmatprep.subr.mxu0 0.0
    %2295 = vmatpush1.msra.mxu0 0.0
    %2296 = vmatprep.subr.mxu0 0.0
    %2297 = vmatpush1.msra.mxu0 0.0
    %2298 = vmatprep.subr.mxu0 0.0
    %2299 = vmatpush1.msra.mxu0 0.0
    %2300 = vmatprep.subr.mxu0 0.0
    %2301 = vmatpush1.msra.mxu0 0.0
    %2302 = vmatprep.subr.mxu0 0.0
    %2303 = vmatpush1.msra.mxu0 0.0
    %2304 = vmatprep.subr.mxu0 0.0
    %2305 = vmatpush1.msra.mxu0 0.0
    %2306 = vmatprep.subr.mxu0 0.0
    %2307 = vmatpush1.msra.mxu0 0.0
    %2308 = vmatprep.subr.mxu0 0.0
    %2309 = vmatpush1.msra.mxu0 0.0
    %2310 = vmatprep.subr.mxu0 0.0
    %2311 = vmatpush1.msra.mxu0 0.0
    %2312 = vmatprep.subr.mxu0 0.0
    %2313 = vmatpush1.msra.mxu0 0.0
    %2314 = vmatprep.subr.mxu0 0.0
    %2315 = vmatpush1.msra.mxu0 0.0
    %2316 = vmatprep.subr.mxu0 0.0
    %2317 = vmatpush1.msra.mxu0 0.0
    %2318 = vmatprep.subr.mxu0 0.0
    %2319 = vmatpush1.msra.mxu0 0.0
    %2320 = vmatprep.subr.mxu0 0.0
    %2321 = vmatpush1.msra.mxu0 0.0
    %2322 = vmatprep.subr.mxu0 0.0
    %2323 = vmatpush1.msra.mxu0 0.0
    %2324 = vmatprep.subr.mxu0 0.0
    %2325 = vmatpush1.msra.mxu0 0.0
    %2326 = vmatprep.subr.mxu0 0.0
    %2327 = vmatpush1.msra.mxu0 0.0
    %2328 = vmatprep.subr.mxu0 0.0
    %2329 = vmatpush1.msra.mxu0 0.0
    %2330 = vmatprep.subr.mxu0 0.0
    %2331 = vmatpush1.msra.mxu0 0.0
    %2332 = vmatprep.subr.mxu0 0.0
    %2333 = vmatpush1.msra.mxu0 0.0
    %2334 = vmatprep.mubr.f32.mxu0 0.0
    %2335 = vmatmul.mubr.f32.gmra.mrb[0].mxu0 %v2056
    %v2336 = vpop.f32.mrb[0].mxu0
    %v2337 = vadd.f32 %v2267, %v2336
    %v2338 = vpop.f32.mrb[0].mxu0
    %2339 = vdwg.mxu0
    %v2340 = vadd.f32 %v2337, %v1018
    %v2341 = vtanh.pop %v2340
    %v2343 = vsel %vm872, %v2341, 0
    %2345 = vmatprep.subr.mxu0 0.0
    %2346 = vmatpush1.msra.mxu0 %v48
    %2347 = vmatprep.subr.mxu0 0.0
    %2348 = vmatpush1.msra.mxu0 0.0
    %2349 = vmatprep.subr.mxu0 0.0
    %2350 = vmatpush1.msra.mxu0 0.0
    %2351 = vmatprep.subr.mxu0 0.0
    %2352 = vmatpush1.msra.mxu0 0.0
    %2353 = vmatprep.subr.mxu0 0.0
    %2354 = vmatpush1.msra.mxu0 0.0
    %2355 = vmatprep.subr.mxu0 0.0
    %2356 = vmatpush1.msra.mxu0 0.0
    %2357 = vmatprep.subr.mxu0 0.0
    %2358 = vmatpush1.msra.mxu0 0.0
    %2359 = vmatprep.subr.mxu0 0.0
    %2360 = vmatpush1.msra.mxu0 0.0
    %2361 = vmatprep.subr.mxu0 0.0
    %2362 = vmatpush1.msra.mxu0 0.0
    %2363 = vmatprep.subr.mxu0 0.0
    %2364 = vmatpush1.msra.mxu0 0.0
    %2365 = vmatprep.subr.mxu0 0.0
    %2366 = vmatpush1.msra.mxu0 0.0
    %2367 = vmatprep.subr.mxu0 0.0
    %2368 = vmatpush1.msra.mxu0 0.0
    %2369 = vmatprep.subr.mxu0 0.0
    %2370 = vmatpush1.msra.mxu0 0.0
    %2371 = vmatprep.subr.mxu0 0.0
    %2372 = vmatpush1.msra.mxu0 0.0
    %2373 = vmatprep.subr.mxu0 0.0
    %2374 = vmatpush1.msra.mxu0 0.0
    %2375 = vmatprep.subr.mxu0 0.0
    %2376 = vmatpush1.msra.mxu0 0.0
    %2377 = vmatprep.subr.mxu0 0.0
    %2378 = vmatpush1.msra.mxu0 0.0
    %2379 = vmatprep.subr.mxu0 0.0
    %2380 = vmatpush1.msra.mxu0 0.0
    %2381 = vmatprep.subr.mxu0 0.0
    %2382 = vmatpush1.msra.mxu0 0.0
    %2383 = vmatprep.subr.mxu0 0.0
    %2384 = vmatpush1.msra.mxu0 0.0
    %2385 = vmatprep.subr.mxu0 0.0
    %2386 = vmatpush1.msra.mxu0 0.0
    %2387 = vmatprep.subr.mxu0 0.0
    %2388 = vmatpush1.msra.mxu0 0.0
    %2389 = vmatprep.subr.mxu0 0.0
    %2390 = vmatpush1.msra.mxu0 0.0
    %2391 = vmatprep.subr.mxu0 0.0
    %2392 = vmatpush1.msra.mxu0 0.0
    %2393 = vmatprep.subr.mxu0 0.0
    %2394 = vmatpush1.msra.mxu0 0.0
    %2395 = vmatprep.subr.mxu0 0.0
    %2396 = vmatpush1.msra.mxu0 0.0
    %2397 = vmatprep.subr.mxu0 0.0
    %2398 = vmatpush1.msra.mxu0 0.0
    %2399 = vmatprep.subr.mxu0 0.0
    %2400 = vmatpush1.msra.mxu0 0.0
    %2401 = vmatprep.subr.mxu0 0.0
    %2402 = vmatpush1.msra.mxu0 0.0
    %2403 = vmatprep.subr.mxu0 0.0
    %2404 = vmatpush1.msra.mxu0 0.0
    %2405 = vmatprep.subr.mxu0 0.0
    %2406 = vmatpush1.msra.mxu0 0.0
    %2407 = vmatprep.subr.mxu0 0.0
    %2408 = vmatpush1.msra.mxu0 0.0
    %2409 = vmatprep.mubr.f32.mxu0 0.0
    %2410 = vmatmul.mubr.f32.gmra.mrb[0].mxu0 %v2343
    %v2411 = vpop.f32.mrb[0].mxu0
    %v2412 = vadd.f32 %v1024, %v2411
    %v2413 = vpop.f32.mrb[0].mxu0
    %2414 = vdwg.mxu0
    %vm2415 = vcmp.gt.f32.partialorder %v2412, 0.0
    %v2416 = vmul.f32 %v2412, 0.01
    %v2417 = vsel %vm2415, %v2412, %v2416
    %2418 = vst [vmem:[#allocation5 + $0x18] sm:$0xff] %v2417
    %v2420 = vsel %vm224, %v2054, 0
    %2422 = vmatprep.subr.mxu0 0.0
    %2423 = vmatpush1.msra.mxu0 %v35
    %2424 = vmatprep.subr.mxu0 0.0
    %2425 = vmatpush1.msra.mxu0 %v36
    %2426 = vmatprep.subr.mxu0 0.0
    %2427 = vmatpush1.msra.mxu0 %v37
    %2428 = vmatprep.subr.mxu0 0.0
    %2429 = vmatpush1.msra.mxu0 %v38
    %2430 = vmatprep.subr.mxu0 0.0
    %2431 = vmatpush1.msra.mxu0 0.0
    %2432 = vmatprep.subr.mxu0 0.0
    %2433 = vmatpush1.msra.mxu0 0.0
    %2434 = vmatprep.subr.mxu0 0.0
    %2435 = vmatpush1.msra.mxu0 0.0
    %2436 = vmatprep.subr.mxu0 0.0
    %2437 = vmatpush1.msra.mxu0 0.0
    %2438 = vmatprep.subr.mxu0 0.0
    %2439 = vmatpush1.msra.mxu0 0.0
    %2440 = vmatprep.subr.mxu0 0.0
    %2441 = vmatpush1.msra.mxu0 0.0
    %2442 = vmatprep.subr.mxu0 0.0
    %2443 = vmatpush1.msra.mxu0 0.0
    %2444 = vmatprep.subr.mxu0 0.0
    %2445 = vmatpush1.msra.mxu0 0.0
    %2446 = vmatprep.subr.mxu0 0.0
    %2447 = vmatpush1.msra.mxu0 0.0
    %2448 = vmatprep.subr.mxu0 0.0
    %2449 = vmatpush1.msra.mxu0 0.0
    %2450 = vmatprep.subr.mxu0 0.0
    %2451 = vmatpush1.msra.mxu0 0.0
    %2452 = vmatprep.subr.mxu0 0.0
    %2453 = vmatpush1.msra.mxu0 0.0
    %2454 = vmatprep.subr.mxu0 0.0
    %2455 = vmatpush1.msra.mxu0 0.0
    %2456 = vmatprep.subr.mxu0 0.0
    %2457 = vmatpush1.msra.mxu0 0.0
    %2458 = vmatprep.subr.mxu0 0.0
    %2459 = vmatpush1.msra.mxu0 0.0
    %2460 = vmatprep.subr.mxu0 0.0
    %2461 = vmatpush1.msra.mxu0 0.0
    %2462 = vmatprep.subr.mxu0 0.0
    %2463 = vmatpush1.msra.mxu0 0.0
    %2464 = vmatprep.subr.mxu0 0.0
    %2465 = vmatpush1.msra.mxu0 0.0
    %2466 = vmatprep.subr.mxu0 0.0
    %2467 = vmatpush1.msra.mxu0 0.0
    %2468 = vmatprep.subr.mxu0 0.0
    %2469 = vmatpush1.msra.mxu0 0.0
    %2470 = vmatprep.subr.mxu0 0.0
    %2471 = vmatpush1.msra.mxu0 0.0
    %2472 = vmatprep.subr.mxu0 0.0
    %2473 = vmatpush1.msra.mxu0 0.0
    %2474 = vmatprep.subr.mxu0 0.0
    %2475 = vmatpush1.msra.mxu0 0.0
    %2476 = vmatprep.subr.mxu0 0.0
    %2477 = vmatpush1.msra.mxu0 0.0
    %2478 = vmatprep.subr.mxu0 0.0
    %2479 = vmatpush1.msra.mxu0 0.0
    %2480 = vmatprep.subr.mxu0 0.0
    %2481 = vmatpush1.msra.mxu0 0.0
    %2482 = vmatprep.subr.mxu0 0.0
    %2483 = vmatpush1.msra.mxu0 0.0
    %2484 = vmatprep.subr.mxu0 0.0
    %2485 = vmatpush1.msra.mxu0 0.0
    %2486 = vmatprep.mubr.f32.mxu0 0.0
    %2487 = vmatmul.mubr.f32.gmra.mrb[0].mxu0 %v2420
    %v2488 = vpop.f32.mrb[0].mxu0
    %v2489 = vadd.f32 0.0, %v2488
    %v2490 = vpop.f32.mrb[0].mxu0
    %2491 = vdwg.mxu0
    %v2492 = vadd.f32 %v346, %v2489
    %v2493 = vtanh.pop %v2492
    %v2495 = vsel %vm66, %v2199, 0
    %2497 = vmatprep.subr.mxu0 0.0
    %2498 = vmatpush1.msra.mxu0 %v43
    %2499 = vmatprep.subr.mxu0 0.0
    %2500 = vmatpush1.msra.mxu0 %v44
    %2501 = vmatprep.subr.mxu0 0.0
    %2502 = vmatpush1.msra.mxu0 0.0
    %2503 = vmatprep.subr.mxu0 0.0
    %2504 = vmatpush1.msra.mxu0 0.0
    %2505 = vmatprep.subr.mxu0 0.0
    %2506 = vmatpush1.msra.mxu0 0.0
    %2507 = vmatprep.subr.mxu0 0.0
    %2508 = vmatpush1.msra.mxu0 0.0
    %2509 = vmatprep.subr.mxu0 0.0
    %2510 = vmatpush1.msra.mxu0 0.0
    %2511 = vmatprep.subr.mxu0 0.0
    %2512 = vmatpush1.msra.mxu0 0.0
    %2513 = vmatprep.subr.mxu0 0.0
    %2514 = vmatpush1.msra.mxu0 0.0
    %2515 = vmatprep.subr.mxu0 0.0
    %2516 = vmatpush1.msra.mxu0 0.0
    %2517 = vmatprep.subr.mxu0 0.0
    %2518 = vmatpush1.msra.mxu0 0.0
    %2519 = vmatprep.subr.mxu0 0.0
    %2520 = vmatpush1.msra.mxu0 0.0
    %2521 = vmatprep.subr.mxu0 0.0
    %2522 = vmatpush1.msra.mxu0 0.0
    %2523 = vmatprep.subr.mxu0 0.0
    %2524 = vmatpush1.msra.mxu0 0.0
    %2525 = vmatprep.subr.mxu0 0.0
    %2526 = vmatpush1.msra.mxu0 0.0
    %2527 = vmatprep.subr.mxu0 0.0
    %2528 = vmatpush1.msra.mxu0 0.0
    %2529 = vmatprep.subr.mxu0 0.0
    %2530 = vmatpush1.msra.mxu0 0.0
    %2531 = vmatprep.subr.mxu0 0.0
    %2532 = vmatpush1.msra.mxu0 0.0
    %2533 = vmatprep.subr.mxu0 0.0
    %2534 = vmatpush1.msra.mxu0 0.0
    %2535 = vmatprep.subr.mxu0 0.0
    %2536 = vmatpush1.msra.mxu0 0.0
    %2537 = vmatprep.subr.mxu0 0.0
    %2538 = vmatpush1.msra.mxu0 0.0
    %2539 = vmatprep.subr.mxu0 0.0
    %2540 = vmatpush1.msra.mxu0 0.0
    %2541 = vmatprep.subr.mxu0 0.0
    %2542 = vmatpush1.msra.mxu0 0.0
    %2543 = vmatprep.subr.mxu0 0.0
    %2544 = vmatpush1.msra.mxu0 0.0
    %2545 = vmatprep.subr.mxu0 0.0
    %2546 = vmatpush1.msra.mxu0 0.0
    %2547 = vmatprep.subr.mxu0 0.0
    %2548 = vmatpush1.msra.mxu0 0.0
    %2549 = vmatprep.subr.mxu0 0.0
    %2550 = vmatpush1.msra.mxu0 0.0
    %2551 = vmatprep.subr.mxu0 0.0
    %2552 = vmatpush1.msra.mxu0 0.0
    %2553 = vmatprep.subr.mxu0 0.0
    %2554 = vmatpush1.msra.mxu0 0.0
    %2555 = vmatprep.subr.mxu0 0.0
    %2556 = vmatpush1.msra.mxu0 0.0
    %2557 = vmatprep.subr.mxu0 0.0
    %2558 = vmatpush1.msra.mxu0 0.0
    %2559 = vmatprep.subr.mxu0 0.0
    %2560 = vmatpush1.msra.mxu0 0.0
    %2561 = vmatprep.mubr.f32.mxu0 0.0
    %2562 = vmatmul.mubr.f32.gmra.mrb[0].mxu0 %v2495
    %v2563 = vpop.f32.mrb[0].mxu0
    %v2564 = vadd.f32 0.0, %v2563
    %v2565 = vpop.f32.mrb[0].mxu0
    %2566 = vdwg.mxu0
    %2567 = vmatprep.subr.mxu0 0.0
    %2568 = vmatpush1.msra.mxu0 %v39
    %2569 = vmatprep.subr.mxu0 0.0
    %2570 = vmatpush1.msra.mxu0 %v40
    %2571 = vmatprep.subr.mxu0 0.0
    %2572 = vmatpush1.msra.mxu0 %v41
    %2573 = vmatprep.subr.mxu0 0.0
    %2574 = vmatpush1.msra.mxu0 %v42
    %2575 = vmatprep.subr.mxu0 0.0
    %2576 = vmatpush1.msra.mxu0 0.0
    %2577 = vmatprep.subr.mxu0 0.0
    %2578 = vmatpush1.msra.mxu0 0.0
    %2579 = vmatprep.subr.mxu0 0.0
    %2580 = vmatpush1.msra.mxu0 0.0
    %2581 = vmatprep.subr.mxu0 0.0
    %2582 = vmatpush1.msra.mxu0 0.0
    %2583 = vmatprep.subr.mxu0 0.0
    %2584 = vmatpush1.msra.mxu0 0.0
    %2585 = vmatprep.subr.mxu0 0.0
    %2586 = vmatpush1.msra.mxu0 0.0
    %2587 = vmatprep.subr.mxu0 0.0
    %2588 = vmatpush1.msra.mxu0 0.0
    %2589 = vmatprep.subr.mxu0 0.0
    %2590 = vmatpush1.msra.mxu0 0.0
    %2591 = vmatprep.subr.mxu0 0.0
    %2592 = vmatpush1.msra.mxu0 0.0
    %2593 = vmatprep.subr.mxu0 0.0
    %2594 = vmatpush1.msra.mxu0 0.0
    %2595 = vmatprep.subr.mxu0 0.0
    %2596 = vmatpush1.msra.mxu0 0.0
    %2597 = vmatprep.subr.mxu0 0.0
    %2598 = vmatpush1.msra.mxu0 0.0
    %2599 = vmatprep.subr.mxu0 0.0
    %2600 = vmatpush1.msra.mxu0 0.0
    %2601 = vmatprep.subr.mxu0 0.0
    %2602 = vmatpush1.msra.mxu0 0.0
    %2603 = vmatprep.subr.mxu0 0.0
    %2604 = vmatpush1.msra.mxu0 0.0
    %2605 = vmatprep.subr.mxu0 0.0
    %2606 = vmatpush1.msra.mxu0 0.0
    %2607 = vmatprep.subr.mxu0 0.0
    %2608 = vmatpush1.msra.mxu0 0.0
    %2609 = vmatprep.subr.mxu0 0.0
    %2610 = vmatpush1.msra.mxu0 0.0
    %2611 = vmatprep.subr.mxu0 0.0
    %2612 = vmatpush1.msra.mxu0 0.0
    %2613 = vmatprep.subr.mxu0 0.0
    %2614 = vmatpush1.msra.mxu0 0.0
    %2615 = vmatprep.subr.mxu0 0.0
    %2616 = vmatpush1.msra.mxu0 0.0
    %2617 = vmatprep.subr.mxu0 0.0
    %2618 = vmatpush1.msra.mxu0 0.0
    %2619 = vmatprep.subr.mxu0 0.0
    %2620 = vmatpush1.msra.mxu0 0.0
    %2621 = vmatprep.subr.mxu0 0.0
    %2622 = vmatpush1.msra.mxu0 0.0
    %2623 = vmatprep.subr.mxu0 0.0
    %2624 = vmatpush1.msra.mxu0 0.0
    %2625 = vmatprep.subr.mxu0 0.0
    %2626 = vmatpush1.msra.mxu0 0.0
    %2627 = vmatprep.subr.mxu0 0.0
    %2628 = vmatpush1.msra.mxu0 0.0
    %2629 = vmatprep.subr.mxu0 0.0
    %2630 = vmatpush1.msra.mxu0 0.0
    %2631 = vmatprep.mubr.f32.mxu0 0.0
    %2632 = vmatmul.mubr.f32.gmra.mrb[0].mxu0 %v2420
    %v2633 = vpop.f32.mrb[0].mxu0
    %v2634 = vadd.f32 %v2564, %v2633
    %v2635 = vpop.f32.mrb[0].mxu0
    %2636 = vdwg.mxu0
    %v2637 = vadd.f32 %v2634, %v649
    %v2638 = vtanh.pop %v2637
    %2639 = vmatprep.subr.mxu0 0.0
    %2640 = vmatpush1.msra.mxu0 %v47
    %2641 = vmatprep.subr.mxu0 0.0
    %2642 = vmatpush1.msra.mxu0 0.0
    %2643 = vmatprep.subr.mxu0 0.0
    %2644 = vmatpush1.msra.mxu0 0.0
    %2645 = vmatprep.subr.mxu0 0.0
    %2646 = vmatpush1.msra.mxu0 0.0
    %2647 = vmatprep.subr.mxu0 0.0
    %2648 = vmatpush1.msra.mxu0 0.0
    %2649 = vmatprep.subr.mxu0 0.0
    %2650 = vmatpush1.msra.mxu0 0.0
    %2651 = vmatprep.subr.mxu0 0.0
    %2652 = vmatpush1.msra.mxu0 0.0
    %2653 = vmatprep.subr.mxu0 0.0
    %2654 = vmatpush1.msra.mxu0 0.0
    %2655 = vmatprep.subr.mxu0 0.0
    %2656 = vmatpush1.msra.mxu0 0.0
    %2657 = vmatprep.subr.mxu0 0.0
    %2658 = vmatpush1.msra.mxu0 0.0
    %2659 = vmatprep.subr.mxu0 0.0
    %2660 = vmatpush1.msra.mxu0 0.0
    %2661 = vmatprep.subr.mxu0 0.0
    %2662 = vmatpush1.msra.mxu0 0.0
    %2663 = vmatprep.subr.mxu0 0.0
    %2664 = vmatpush1.msra.mxu0 0.0
    %2665 = vmatprep.subr.mxu0 0.0
    %2666 = vmatpush1.msra.mxu0 0.0
    %2667 = vmatprep.subr.mxu0 0.0
    %2668 = vmatpush1.msra.mxu0 0.0
    %2669 = vmatprep.subr.mxu0 0.0
    %2670 = vmatpush1.msra.mxu0 0.0
    %2671 = vmatprep.subr.mxu0 0.0
    %2672 = vmatpush1.msra.mxu0 0.0
    %2673 = vmatprep.subr.mxu0 0.0
    %2674 = vmatpush1.msra.mxu0 0.0
    %2675 = vmatprep.subr.mxu0 0.0
    %2676 = vmatpush1.msra.mxu0 0.0
    %2677 = vmatprep.subr.mxu0 0.0
    %2678 = vmatpush1.msra.mxu0 0.0
    %2679 = vmatprep.subr.mxu0 0.0
    %2680 = vmatpush1.msra.mxu0 0.0
    %2681 = vmatprep.subr.mxu0 0.0
    %2682 = vmatpush1.msra.mxu0 0.0
    %2683 = vmatprep.subr.mxu0 0.0
    %2684 = vmatpush1.msra.mxu0 0.0
    %2685 = vmatprep.subr.mxu0 0.0
    %2686 = vmatpush1.msra.mxu0 0.0
    %2687 = vmatprep.subr.mxu0 0.0
    %2688 = vmatpush1.msra.mxu0 0.0
    %2689 = vmatprep.subr.mxu0 0.0
    %2690 = vmatpush1.msra.mxu0 0.0
    %2691 = vmatprep.subr.mxu0 0.0
    %2692 = vmatpush1.msra.mxu0 0.0
    %2693 = vmatprep.subr.mxu0 0.0
    %2694 = vmatpush1.msra.mxu0 0.0
    %2695 = vmatprep.subr.mxu0 0.0
    %2696 = vmatpush1.msra.mxu0 0.0
    %2697 = vmatprep.subr.mxu0 0.0
    %2698 = vmatpush1.msra.mxu0 0.0
    %2699 = vmatprep.subr.mxu0 0.0
    %2700 = vmatpush1.msra.mxu0 0.0
    %2701 = vmatprep.subr.mxu0 0.0
    %2702 = vmatpush1.msra.mxu0 0.0
    %2703 = vmatprep.mubr.f32.mxu0 0.0
    %2704 = vmatmul.mubr.f32.gmra.mrb[0].mxu0 %v2343
    %v2705 = vpop.f32.mrb[0].mxu0
    %v2706 = vadd.f32 0.0, %v2705
    %v2707 = vpop.f32.mrb[0].mxu0
    %2708 = vdwg.mxu0
    %2709 = vmatprep.subr.mxu0 0.0
    %2710 = vmatpush1.msra.mxu0 %v45
    %2711 = vmatprep.subr.mxu0 0.0
    %2712 = vmatpush1.msra.mxu0 %v46
    %2713 = vmatprep.subr.mxu0 0.0
    %2714 = vmatpush1.msra.mxu0 0.0
    %2715 = vmatprep.subr.mxu0 0.0
    %2716 = vmatpush1.msra.mxu0 0.0
    %2717 = vmatprep.subr.mxu0 0.0
    %2718 = vmatpush1.msra.mxu0 0.0
    %2719 = vmatprep.subr.mxu0 0.0
    %2720 = vmatpush1.msra.mxu0 0.0
    %2721 = vmatprep.subr.mxu0 0.0
    %2722 = vmatpush1.msra.mxu0 0.0
    %2723 = vmatprep.subr.mxu0 0.0
    %2724 = vmatpush1.msra.mxu0 0.0
    %2725 = vmatprep.subr.mxu0 0.0
    %2726 = vmatpush1.msra.mxu0 0.0
    %2727 = vmatprep.subr.mxu0 0.0
    %2728 = vmatpush1.msra.mxu0 0.0
    %2729 = vmatprep.subr.mxu0 0.0
    %2730 = vmatpush1.msra.mxu0 0.0
    %2731 = vmatprep.subr.mxu0 0.0
    %2732 = vmatpush1.msra.mxu0 0.0
    %2733 = vmatprep.subr.mxu0 0.0
    %2734 = vmatpush1.msra.mxu0 0.0
    %2735 = vmatprep.subr.mxu0 0.0
    %2736 = vmatpush1.msra.mxu0 0.0
    %2737 = vmatprep.subr.mxu0 0.0
    %2738 = vmatpush1.msra.mxu0 0.0
    %2739 = vmatprep.subr.mxu0 0.0
    %2740 = vmatpush1.msra.mxu0 0.0
    %2741 = vmatprep.subr.mxu0 0.0
    %2742 = vmatpush1.msra.mxu0 0.0
    %2743 = vmatprep.subr.mxu0 0.0
    %2744 = vmatpush1.msra.mxu0 0.0
    %2745 = vmatprep.subr.mxu0 0.0
    %2746 = vmatpush1.msra.mxu0 0.0
    %2747 = vmatprep.subr.mxu0 0.0
    %2748 = vmatpush1.msra.mxu0 0.0
    %2749 = vmatprep.subr.mxu0 0.0
    %2750 = vmatpush1.msra.mxu0 0.0
    %2751 = vmatprep.subr.mxu0 0.0
    %2752 = vmatpush1.msra.mxu0 0.0
    %2753 = vmatprep.subr.mxu0 0.0
    %2754 = vmatpush1.msra.mxu0 0.0
    %2755 = vmatprep.subr.mxu0 0.0
    %2756 = vmatpush1.msra.mxu0 0.0
    %2757 = vmatprep.subr.mxu0 0.0
    %2758 = vmatpush1.msra.mxu0 0.0
    %2759 = vmatprep.subr.mxu0 0.0
    %2760 = vmatpush1.msra.mxu0 0.0
    %2761 = vmatprep.subr.mxu0 0.0
    %2762 = vmatpush1.msra.mxu0 0.0
    %2763 = vmatprep.subr.mxu0 0.0
    %2764 = vmatpush1.msra.mxu0 0.0
    %2765 = vmatprep.subr.mxu0 0.0
    %2766 = vmatpush1.msra.mxu0 0.0
    %2767 = vmatprep.subr.mxu0 0.0
    %2768 = vmatpush1.msra.mxu0 0.0
    %2769 = vmatprep.subr.mxu0 0.0
    %2770 = vmatpush1.msra.mxu0 0.0
    %2771 = vmatprep.subr.mxu0 0.0
    %2772 = vmatpush1.msra.mxu0 0.0
    %2773 = vmatprep.mubr.f32.mxu0 0.0
    %2774 = vmatmul.mubr.f32.gmra.mrb[0].mxu0 %v2495
    %v2775 = vpop.f32.mrb[0].mxu0
    %v2776 = vadd.f32 %v2706, %v2775
    %v2777 = vpop.f32.mrb[0].mxu0
    %2778 = vdwg.mxu0
    %v2779 = vadd.f32 %v2776, %v1018
    %v2780 = vtanh.pop %v2779
    %v2782 = vsel %vm872, %v2780, 0
    %2784 = vmatprep.subr.mxu0 0.0
    %2785 = vmatpush1.msra.mxu0 %v48
    %2786 = vmatprep.subr.mxu0 0.0
    %2787 = vmatpush1.msra.mxu0 0.0
    %2788 = vmatprep.subr.mxu0 0.0
    %2789 = vmatpush1.msra.mxu0 0.0
    %2790 = vmatprep.subr.mxu0 0.0
    %2791 = vmatpush1.msra.mxu0 0.0
    %2792 = vmatprep.subr.mxu0 0.0
    %2793 = vmatpush1.msra.mxu0 0.0
    %2794 = vmatprep.subr.mxu0 0.0
    %2795 = vmatpush1.msra.mxu0 0.0
    %2796 = vmatprep.subr.mxu0 0.0
    %2797 = vmatpush1.msra.mxu0 0.0
    %2798 = vmatprep.subr.mxu0 0.0
    %2799 = vmatpush1.msra.mxu0 0.0
    %2800 = vmatprep.subr.mxu0 0.0
    %2801 = vmatpush1.msra.mxu0 0.0
    %2802 = vmatprep.subr.mxu0 0.0
    %2803 = vmatpush1.msra.mxu0 0.0
    %2804 = vmatprep.subr.mxu0 0.0
    %2805 = vmatpush1.msra.mxu0 0.0
    %2806 = vmatprep.subr.mxu0 0.0
    %2807 = vmatpush1.msra.mxu0 0.0
    %2808 = vmatprep.subr.mxu0 0.0
    %2809 = vmatpush1.msra.mxu0 0.0
    %2810 = vmatprep.subr.mxu0 0.0
    %2811 = vmatpush1.msra.mxu0 0.0
    %2812 = vmatprep.subr.mxu0 0.0
    %2813 = vmatpush1.msra.mxu0 0.0
    %2814 = vmatprep.subr.mxu0 0.0
    %2815 = vmatpush1.msra.mxu0 0.0
    %2816 = vmatprep.subr.mxu0 0.0
    %2817 = vmatpush1.msra.mxu0 0.0
    %2818 = vmatprep.subr.mxu0 0.0
    %2819 = vmatpush1.msra.mxu0 0.0
    %2820 = vmatprep.subr.mxu0 0.0
    %2821 = vmatpush1.msra.mxu0 0.0
    %2822 = vmatprep.subr.mxu0 0.0
    %2823 = vmatpush1.msra.mxu0 0.0
    %2824 = vmatprep.subr.mxu0 0.0
    %2825 = vmatpush1.msra.mxu0 0.0
    %2826 = vmatprep.subr.mxu0 0.0
    %2827 = vmatpush1.msra.mxu0 0.0
    %2828 = vmatprep.subr.mxu0 0.0
    %2829 = vmatpush1.msra.mxu0 0.0
    %2830 = vmatprep.subr.mxu0 0.0
    %2831 = vmatpush1.msra.mxu0 0.0
    %2832 = vmatprep.subr.mxu0 0.0
    %2833 = vmatpush1.msra.mxu0 0.0
    %2834 = vmatprep.subr.mxu0 0.0
    %2835 = vmatpush1.msra.mxu0 0.0
    %2836 = vmatprep.subr.mxu0 0.0
    %2837 = vmatpush1.msra.mxu0 0.0
    %2838 = vmatprep.subr.mxu0 0.0
    %2839 = vmatpush1.msra.mxu0 0.0
    %2840 = vmatprep.subr.mxu0 0.0
    %2841 = vmatpush1.msra.mxu0 0.0
    %2842 = vmatprep.subr.mxu0 0.0
    %2843 = vmatpush1.msra.mxu0 0.0
    %2844 = vmatprep.subr.mxu0 0.0
    %2845 = vmatpush1.msra.mxu0 0.0
    %2846 = vmatprep.subr.mxu0 0.0
    %2847 = vmatpush1.msra.mxu0 0.0
    %2848 = vmatprep.mubr.f32.mxu0 0.0
    %2849 = vmatmul.mubr.f32.gmra.mrb[0].mxu0 %v2782
    %v2850 = vpop.f32.mrb[0].mxu0
    %v2851 = vadd.f32 %v1024, %v2850
    %v2852 = vpop.f32.mrb[0].mxu0
    %2853 = vdwg.mxu0
    %vm2854 = vcmp.gt.f32.partialorder %v2851, 0.0
    %v2855 = vmul.f32 %v2851, 0.01
    %v2856 = vsel %vm2854, %v2851, %v2855
    %2857 = vst [vmem:[#allocation5 + $0x20] sm:$0xff] %v2856
    %v2859 = vsel %vm224, %v2493, 0
    %2861 = vmatprep.subr.mxu0 0.0
    %2862 = vmatpush1.msra.mxu0 %v35
    %2863 = vmatprep.subr.mxu0 0.0
    %2864 = vmatpush1.msra.mxu0 %v36
    %2865 = vmatprep.subr.mxu0 0.0
    %2866 = vmatpush1.msra.mxu0 %v37
    %2867 = vmatprep.subr.mxu0 0.0
    %2868 = vmatpush1.msra.mxu0 %v38
    %2869 = vmatprep.subr.mxu0 0.0
    %2870 = vmatpush1.msra.mxu0 0.0
    %2871 = vmatprep.subr.mxu0 0.0
    %2872 = vmatpush1.msra.mxu0 0.0
    %2873 = vmatprep.subr.mxu0 0.0
    %2874 = vmatpush1.msra.mxu0 0.0
    %2875 = vmatprep.subr.mxu0 0.0
    %2876 = vmatpush1.msra.mxu0 0.0
    %2877 = vmatprep.subr.mxu0 0.0
    %2878 = vmatpush1.msra.mxu0 0.0
    %2879 = vmatprep.subr.mxu0 0.0
    %2880 = vmatpush1.msra.mxu0 0.0
    %2881 = vmatprep.subr.mxu0 0.0
    %2882 = vmatpush1.msra.mxu0 0.0
    %2883 = vmatprep.subr.mxu0 0.0
    %2884 = vmatpush1.msra.mxu0 0.0
    %2885 = vmatprep.subr.mxu0 0.0
    %2886 = vmatpush1.msra.mxu0 0.0
    %2887 = vmatprep.subr.mxu0 0.0
    %2888 = vmatpush1.msra.mxu0 0.0
    %2889 = vmatprep.subr.mxu0 0.0
    %2890 = vmatpush1.msra.mxu0 0.0
    %2891 = vmatprep.subr.mxu0 0.0
    %2892 = vmatpush1.msra.mxu0 0.0
    %2893 = vmatprep.subr.mxu0 0.0
    %2894 = vmatpush1.msra.mxu0 0.0
    %2895 = vmatprep.subr.mxu0 0.0
    %2896 = vmatpush1.msra.mxu0 0.0
    %2897 = vmatprep.subr.mxu0 0.0
    %2898 = vmatpush1.msra.mxu0 0.0
    %2899 = vmatprep.subr.mxu0 0.0
    %2900 = vmatpush1.msra.mxu0 0.0
    %2901 = vmatprep.subr.mxu0 0.0
    %2902 = vmatpush1.msra.mxu0 0.0
    %2903 = vmatprep.subr.mxu0 0.0
    %2904 = vmatpush1.msra.mxu0 0.0
    %2905 = vmatprep.subr.mxu0 0.0
    %2906 = vmatpush1.msra.mxu0 0.0
    %2907 = vmatprep.subr.mxu0 0.0
    %2908 = vmatpush1.msra.mxu0 0.0
    %2909 = vmatprep.subr.mxu0 0.0
    %2910 = vmatpush1.msra.mxu0 0.0
    %2911 = vmatprep.subr.mxu0 0.0
    %2912 = vmatpush1.msra.mxu0 0.0
    %2913 = vmatprep.subr.mxu0 0.0
    %2914 = vmatpush1.msra.mxu0 0.0
    %2915 = vmatprep.subr.mxu0 0.0
    %2916 = vmatpush1.msra.mxu0 0.0
    %2917 = vmatprep.subr.mxu0 0.0
    %2918 = vmatpush1.msra.mxu0 0.0
    %2919 = vmatprep.subr.mxu0 0.0
    %2920 = vmatpush1.msra.mxu0 0.0
    %2921 = vmatprep.subr.mxu0 0.0
    %2922 = vmatpush1.msra.mxu0 0.0
    %2923 = vmatprep.subr.mxu0 0.0
    %2924 = vmatpush1.msra.mxu0 0.0
    %2925 = vmatprep.mubr.f32.mxu0 0.0
    %2926 = vmatmul.mubr.f32.gmra.mrb[0].mxu0 %v2859
    %v2927 = vpop.f32.mrb[0].mxu0
    %v2928 = vadd.f32 0.0, %v2927
    %v2929 = vpop.f32.mrb[0].mxu0
    %2930 = vdwg.mxu0
    %v2931 = vadd.f32 %v351, %v2928
    %v2932 = vtanh.pop %v2931
    %v2934 = vsel %vm66, %v2638, 0
    %2936 = vmatprep.subr.mxu0 0.0
    %2937 = vmatpush1.msra.mxu0 %v43
    %2938 = vmatprep.subr.mxu0 0.0
    %2939 = vmatpush1.msra.mxu0 %v44
    %2940 = vmatprep.subr.mxu0 0.0
    %2941 = vmatpush1.msra.mxu0 0.0
    %2942 = vmatprep.subr.mxu0 0.0
    %2943 = vmatpush1.msra.mxu0 0.0
    %2944 = vmatprep.subr.mxu0 0.0
    %2945 = vmatpush1.msra.mxu0 0.0
    %2946 = vmatprep.subr.mxu0 0.0
    %2947 = vmatpush1.msra.mxu0 0.0
    %2948 = vmatprep.subr.mxu0 0.0
    %2949 = vmatpush1.msra.mxu0 0.0
    %2950 = vmatprep.subr.mxu0 0.0
    %2951 = vmatpush1.msra.mxu0 0.0
    %2952 = vmatprep.subr.mxu0 0.0
    %2953 = vmatpush1.msra.mxu0 0.0
    %2954 = vmatprep.subr.mxu0 0.0
    %2955 = vmatpush1.msra.mxu0 0.0
    %2956 = vmatprep.subr.mxu0 0.0
    %2957 = vmatpush1.msra.mxu0 0.0
    %2958 = vmatprep.subr.mxu0 0.0
    %2959 = vmatpush1.msra.mxu0 0.0
    %2960 = vmatprep.subr.mxu0 0.0
    %2961 = vmatpush1.msra.mxu0 0.0
    %2962 = vmatprep.subr.mxu0 0.0
    %2963 = vmatpush1.msra.mxu0 0.0
    %2964 = vmatprep.subr.mxu0 0.0
    %2965 = vmatpush1.msra.mxu0 0.0
    %2966 = vmatprep.subr.mxu0 0.0
    %2967 = vmatpush1.msra.mxu0 0.0
    %2968 = vmatprep.subr.mxu0 0.0
    %2969 = vmatpush1.msra.mxu0 0.0
    %2970 = vmatprep.subr.mxu0 0.0
    %2971 = vmatpush1.msra.mxu0 0.0
    %2972 = vmatprep.subr.mxu0 0.0
    %2973 = vmatpush1.msra.mxu0 0.0
    %2974 = vmatprep.subr.mxu0 0.0
    %2975 = vmatpush1.msra.mxu0 0.0
    %2976 = vmatprep.subr.mxu0 0.0
    %2977 = vmatpush1.msra.mxu0 0.0
    %2978 = vmatprep.subr.mxu0 0.0
    %2979 = vmatpush1.msra.mxu0 0.0
    %2980 = vmatprep.subr.mxu0 0.0
    %2981 = vmatpush1.msra.mxu0 0.0
    %2982 = vmatprep.subr.mxu0 0.0
    %2983 = vmatpush1.msra.mxu0 0.0
    %2984 = vmatprep.subr.mxu0 0.0
    %2985 = vmatpush1.msra.mxu0 0.0
    %2986 = vmatprep.subr.mxu0 0.0
    %2987 = vmatpush1.msra.mxu0 0.0
    %2988 = vmatprep.subr.mxu0 0.0
    %2989 = vmatpush1.msra.mxu0 0.0
    %2990 = vmatprep.subr.mxu0 0.0
    %2991 = vmatpush1.msra.mxu0 0.0
    %2992 = vmatprep.subr.mxu0 0.0
    %2993 = vmatpush1.msra.mxu0 0.0
    %2994 = vmatprep.subr.mxu0 0.0
    %2995 = vmatpush1.msra.mxu0 0.0
    %2996 = vmatprep.subr.mxu0 0.0
    %2997 = vmatpush1.msra.mxu0 0.0
    %2998 = vmatprep.subr.mxu0 0.0
    %2999 = vmatpush1.msra.mxu0 0.0
    %3000 = vmatprep.mubr.f32.mxu0 0.0
    %3001 = vmatmul.mubr.f32.gmra.mrb[0].mxu0 %v2934
    %v3002 = vpop.f32.mrb[0].mxu0
    %v3003 = vadd.f32 0.0, %v3002
    %v3004 = vpop.f32.mrb[0].mxu0
    %3005 = vdwg.mxu0
    %3006 = vmatprep.subr.mxu0 0.0
    %3007 = vmatpush1.msra.mxu0 %v39
    %3008 = vmatprep.subr.mxu0 0.0
    %3009 = vmatpush1.msra.mxu0 %v40
    %3010 = vmatprep.subr.mxu0 0.0
    %3011 = vmatpush1.msra.mxu0 %v41
    %3012 = vmatprep.subr.mxu0 0.0
    %3013 = vmatpush1.msra.mxu0 %v42
    %3014 = vmatprep.subr.mxu0 0.0
    %3015 = vmatpush1.msra.mxu0 0.0
    %3016 = vmatprep.subr.mxu0 0.0
    %3017 = vmatpush1.msra.mxu0 0.0
    %3018 = vmatprep.subr.mxu0 0.0
    %3019 = vmatpush1.msra.mxu0 0.0
    %3020 = vmatprep.subr.mxu0 0.0
    %3021 = vmatpush1.msra.mxu0 0.0
    %3022 = vmatprep.subr.mxu0 0.0
    %3023 = vmatpush1.msra.mxu0 0.0
    %3024 = vmatprep.subr.mxu0 0.0
    %3025 = vmatpush1.msra.mxu0 0.0
    %3026 = vmatprep.subr.mxu0 0.0
    %3027 = vmatpush1.msra.mxu0 0.0
    %3028 = vmatprep.subr.mxu0 0.0
    %3029 = vmatpush1.msra.mxu0 0.0
    %3030 = vmatprep.subr.mxu0 0.0
    %3031 = vmatpush1.msra.mxu0 0.0
    %3032 = vmatprep.subr.mxu0 0.0
    %3033 = vmatpush1.msra.mxu0 0.0
    %3034 = vmatprep.subr.mxu0 0.0
    %3035 = vmatpush1.msra.mxu0 0.0
    %3036 = vmatprep.subr.mxu0 0.0
    %3037 = vmatpush1.msra.mxu0 0.0
    %3038 = vmatprep.subr.mxu0 0.0
    %3039 = vmatpush1.msra.mxu0 0.0
    %3040 = vmatprep.subr.mxu0 0.0
    %3041 = vmatpush1.msra.mxu0 0.0
    %3042 = vmatprep.subr.mxu0 0.0
    %3043 = vmatpush1.msra.mxu0 0.0
    %3044 = vmatprep.subr.mxu0 0.0
    %3045 = vmatpush1.msra.mxu0 0.0
    %3046 = vmatprep.subr.mxu0 0.0
    %3047 = vmatpush1.msra.mxu0 0.0
    %3048 = vmatprep.subr.mxu0 0.0
    %3049 = vmatpush1.msra.mxu0 0.0
    %3050 = vmatprep.subr.mxu0 0.0
    %3051 = vmatpush1.msra.mxu0 0.0
    %3052 = vmatprep.subr.mxu0 0.0
    %3053 = vmatpush1.msra.mxu0 0.0
    %3054 = vmatprep.subr.mxu0 0.0
    %3055 = vmatpush1.msra.mxu0 0.0
    %3056 = vmatprep.subr.mxu0 0.0
    %3057 = vmatpush1.msra.mxu0 0.0
    %3058 = vmatprep.subr.mxu0 0.0
    %3059 = vmatpush1.msra.mxu0 0.0
    %3060 = vmatprep.subr.mxu0 0.0
    %3061 = vmatpush1.msra.mxu0 0.0
    %3062 = vmatprep.subr.mxu0 0.0
    %3063 = vmatpush1.msra.mxu0 0.0
    %3064 = vmatprep.subr.mxu0 0.0
    %3065 = vmatpush1.msra.mxu0 0.0
    %3066 = vmatprep.subr.mxu0 0.0
    %3067 = vmatpush1.msra.mxu0 0.0
    %3068 = vmatprep.subr.mxu0 0.0
    %3069 = vmatpush1.msra.mxu0 0.0
    %3070 = vmatprep.mubr.f32.mxu0 0.0
    %3071 = vmatmul.mubr.f32.gmra.mrb[0].mxu0 %v2859
    %v3072 = vpop.f32.mrb[0].mxu0
    %v3073 = vadd.f32 %v3003, %v3072
    %v3074 = vpop.f32.mrb[0].mxu0
    %3075 = vdwg.mxu0
    %v3076 = vadd.f32 %v3073, %v649
    %v3077 = vtanh.pop %v3076
    %3078 = vmatprep.subr.mxu0 0.0
    %3079 = vmatpush1.msra.mxu0 %v47
    %3080 = vmatprep.subr.mxu0 0.0
    %3081 = vmatpush1.msra.mxu0 0.0
    %3082 = vmatprep.subr.mxu0 0.0
    %3083 = vmatpush1.msra.mxu0 0.0
    %3084 = vmatprep.subr.mxu0 0.0
    %3085 = vmatpush1.msra.mxu0 0.0
    %3086 = vmatprep.subr.mxu0 0.0
    %3087 = vmatpush1.msra.mxu0 0.0
    %3088 = vmatprep.subr.mxu0 0.0
    %3089 = vmatpush1.msra.mxu0 0.0
    %3090 = vmatprep.subr.mxu0 0.0
    %3091 = vmatpush1.msra.mxu0 0.0
    %3092 = vmatprep.subr.mxu0 0.0
    %3093 = vmatpush1.msra.mxu0 0.0
    %3094 = vmatprep.subr.mxu0 0.0
    %3095 = vmatpush1.msra.mxu0 0.0
    %3096 = vmatprep.subr.mxu0 0.0
    %3097 = vmatpush1.msra.mxu0 0.0
    %3098 = vmatprep.subr.mxu0 0.0
    %3099 = vmatpush1.msra.mxu0 0.0
    %3100 = vmatprep.subr.mxu0 0.0
    %3101 = vmatpush1.msra.mxu0 0.0
    %3102 = vmatprep.subr.mxu0 0.0
    %3103 = vmatpush1.msra.mxu0 0.0
    %3104 = vmatprep.subr.mxu0 0.0
    %3105 = vmatpush1.msra.mxu0 0.0
    %3106 = vmatprep.subr.mxu0 0.0
    %3107 = vmatpush1.msra.mxu0 0.0
    %3108 = vmatprep.subr.mxu0 0.0
    %3109 = vmatpush1.msra.mxu0 0.0
    %3110 = vmatprep.subr.mxu0 0.0
    %3111 = vmatpush1.msra.mxu0 0.0
    %3112 = vmatprep.subr.mxu0 0.0
    %3113 = vmatpush1.msra.mxu0 0.0
    %3114 = vmatprep.subr.mxu0 0.0
    %3115 = vmatpush1.msra.mxu0 0.0
    %3116 = vmatprep.subr.mxu0 0.0
    %3117 = vmatpush1.msra.mxu0 0.0
    %3118 = vmatprep.subr.mxu0 0.0
    %3119 = vmatpush1.msra.mxu0 0.0
    %3120 = vmatprep.subr.mxu0 0.0
    %3121 = vmatpush1.msra.mxu0 0.0
    %3122 = vmatprep.subr.mxu0 0.0
    %3123 = vmatpush1.msra.mxu0 0.0
    %3124 = vmatprep.subr.mxu0 0.0
    %3125 = vmatpush1.msra.mxu0 0.0
    %3126 = vmatprep.subr.mxu0 0.0
    %3127 = vmatpush1.msra.mxu0 0.0
    %3128 = vmatprep.subr.mxu0 0.0
    %3129 = vmatpush1.msra.mxu0 0.0
    %3130 = vmatprep.subr.mxu0 0.0
    %3131 = vmatpush1.msra.mxu0 0.0
    %3132 = vmatprep.subr.mxu0 0.0
    %3133 = vmatpush1.msra.mxu0 0.0
    %3134 = vmatprep.subr.mxu0 0.0
    %3135 = vmatpush1.msra.mxu0 0.0
    %3136 = vmatprep.subr.mxu0 0.0
    %3137 = vmatpush1.msra.mxu0 0.0
    %3138 = vmatprep.subr.mxu0 0.0
    %3139 = vmatpush1.msra.mxu0 0.0
    %3140 = vmatprep.subr.mxu0 0.0
    %3141 = vmatpush1.msra.mxu0 0.0
    %3142 = vmatprep.mubr.f32.mxu0 0.0
    %3143 = vmatmul.mubr.f32.gmra.mrb[0].mxu0 %v2782
    %v3144 = vpop.f32.mrb[0].mxu0
    %v3145 = vadd.f32 0.0, %v3144
    %v3146 = vpop.f32.mrb[0].mxu0
    %3147 = vdwg.mxu0
    %3148 = vmatprep.subr.mxu0 0.0
    %3149 = vmatpush1.msra.mxu0 %v45
    %3150 = vmatprep.subr.mxu0 0.0
    %3151 = vmatpush1.msra.mxu0 %v46
    %3152 = vmatprep.subr.mxu0 0.0
    %3153 = vmatpush1.msra.mxu0 0.0
    %3154 = vmatprep.subr.mxu0 0.0
    %3155 = vmatpush1.msra.mxu0 0.0
    %3156 = vmatprep.subr.mxu0 0.0
    %3157 = vmatpush1.msra.mxu0 0.0
    %3158 = vmatprep.subr.mxu0 0.0
    %3159 = vmatpush1.msra.mxu0 0.0
    %3160 = vmatprep.subr.mxu0 0.0
    %3161 = vmatpush1.msra.mxu0 0.0
    %3162 = vmatprep.subr.mxu0 0.0
    %3163 = vmatpush1.msra.mxu0 0.0
    %3164 = vmatprep.subr.mxu0 0.0
    %3165 = vmatpush1.msra.mxu0 0.0
    %3166 = vmatprep.subr.mxu0 0.0
    %3167 = vmatpush1.msra.mxu0 0.0
    %3168 = vmatprep.subr.mxu0 0.0
    %3169 = vmatpush1.msra.mxu0 0.0
    %3170 = vmatprep.subr.mxu0 0.0
    %3171 = vmatpush1.msra.mxu0 0.0
    %3172 = vmatprep.subr.mxu0 0.0
    %3173 = vmatpush1.msra.mxu0 0.0
    %3174 = vmatprep.subr.mxu0 0.0
    %3175 = vmatpush1.msra.mxu0 0.0
    %3176 = vmatprep.subr.mxu0 0.0
    %3177 = vmatpush1.msra.mxu0 0.0
    %3178 = vmatprep.subr.mxu0 0.0
    %3179 = vmatpush1.msra.mxu0 0.0
    %3180 = vmatprep.subr.mxu0 0.0
    %3181 = vmatpush1.msra.mxu0 0.0
    %3182 = vmatprep.subr.mxu0 0.0
    %3183 = vmatpush1.msra.mxu0 0.0
    %3184 = vmatprep.subr.mxu0 0.0
    %3185 = vmatpush1.msra.mxu0 0.0
    %3186 = vmatprep.subr.mxu0 0.0
    %3187 = vmatpush1.msra.mxu0 0.0
    %3188 = vmatprep.subr.mxu0 0.0
    %3189 = vmatpush1.msra.mxu0 0.0
    %3190 = vmatprep.subr.mxu0 0.0
    %3191 = vmatpush1.msra.mxu0 0.0
    %3192 = vmatprep.subr.mxu0 0.0
    %3193 = vmatpush1.msra.mxu0 0.0
    %3194 = vmatprep.subr.mxu0 0.0
    %3195 = vmatpush1.msra.mxu0 0.0
    %3196 = vmatprep.subr.mxu0 0.0
    %3197 = vmatpush1.msra.mxu0 0.0
    %3198 = vmatprep.subr.mxu0 0.0
    %3199 = vmatpush1.msra.mxu0 0.0
    %3200 = vmatprep.subr.mxu0 0.0
    %3201 = vmatpush1.msra.mxu0 0.0
    %3202 = vmatprep.subr.mxu0 0.0
    %3203 = vmatpush1.msra.mxu0 0.0
    %3204 = vmatprep.subr.mxu0 0.0
    %3205 = vmatpush1.msra.mxu0 0.0
    %3206 = vmatprep.subr.mxu0 0.0
    %3207 = vmatpush1.msra.mxu0 0.0
    %3208 = vmatprep.subr.mxu0 0.0
    %3209 = vmatpush1.msra.mxu0 0.0
    %3210 = vmatprep.subr.mxu0 0.0
    %3211 = vmatpush1.msra.mxu0 0.0
    %3212 = vmatprep.mubr.f32.mxu0 0.0
    %3213 = vmatmul.mubr.f32.gmra.mrb[0].mxu0 %v2934
    %v3214 = vpop.f32.mrb[0].mxu0
    %v3215 = vadd.f32 %v3145, %v3214
    %v3216 = vpop.f32.mrb[0].mxu0
    %3217 = vdwg.mxu0
    %v3218 = vadd.f32 %v3215, %v1018
    %v3219 = vtanh.pop %v3218
    %v3221 = vsel %vm872, %v3219, 0
    %3223 = vmatprep.subr.mxu0 0.0
    %3224 = vmatpush1.msra.mxu0 %v48
    %3225 = vmatprep.subr.mxu0 0.0
    %3226 = vmatpush1.msra.mxu0 0.0
    %3227 = vmatprep.subr.mxu0 0.0
    %3228 = vmatpush1.msra.mxu0 0.0
    %3229 = vmatprep.subr.mxu0 0.0
    %3230 = vmatpush1.msra.mxu0 0.0
    %3231 = vmatprep.subr.mxu0 0.0
    %3232 = vmatpush1.msra.mxu0 0.0
    %3233 = vmatprep.subr.mxu0 0.0
    %3234 = vmatpush1.msra.mxu0 0.0
    %3235 = vmatprep.subr.mxu0 0.0
    %3236 = vmatpush1.msra.mxu0 0.0
    %3237 = vmatprep.subr.mxu0 0.0
    %3238 = vmatpush1.msra.mxu0 0.0
    %3239 = vmatprep.subr.mxu0 0.0
    %3240 = vmatpush1.msra.mxu0 0.0
    %3241 = vmatprep.subr.mxu0 0.0
    %3242 = vmatpush1.msra.mxu0 0.0
    %3243 = vmatprep.subr.mxu0 0.0
    %3244 = vmatpush1.msra.mxu0 0.0
    %3245 = vmatprep.subr.mxu0 0.0
    %3246 = vmatpush1.msra.mxu0 0.0
    %3247 = vmatprep.subr.mxu0 0.0
    %3248 = vmatpush1.msra.mxu0 0.0
    %3249 = vmatprep.subr.mxu0 0.0
    %3250 = vmatpush1.msra.mxu0 0.0
    %3251 = vmatprep.subr.mxu0 0.0
    %3252 = vmatpush1.msra.mxu0 0.0
    %3253 = vmatprep.subr.mxu0 0.0
    %3254 = vmatpush1.msra.mxu0 0.0
    %3255 = vmatprep.subr.mxu0 0.0
    %3256 = vmatpush1.msra.mxu0 0.0
    %3257 = vmatprep.subr.mxu0 0.0
    %3258 = vmatpush1.msra.mxu0 0.0
    %3259 = vmatprep.subr.mxu0 0.0
    %3260 = vmatpush1.msra.mxu0 0.0
    %3261 = vmatprep.subr.mxu0 0.0
    %3262 = vmatpush1.msra.mxu0 0.0
    %3263 = vmatprep.subr.mxu0 0.0
    %3264 = vmatpush1.msra.mxu0 0.0
    %3265 = vmatprep.subr.mxu0 0.0
    %3266 = vmatpush1.msra.mxu0 0.0
    %3267 = vmatprep.subr.mxu0 0.0
    %3268 = vmatpush1.msra.mxu0 0.0
    %3269 = vmatprep.subr.mxu0 0.0
    %3270 = vmatpush1.msra.mxu0 0.0
    %3271 = vmatprep.subr.mxu0 0.0
    %3272 = vmatpush1.msra.mxu0 0.0
    %3273 = vmatprep.subr.mxu0 0.0
    %3274 = vmatpush1.msra.mxu0 0.0
    %3275 = vmatprep.subr.mxu0 0.0
    %3276 = vmatpush1.msra.mxu0 0.0
    %3277 = vmatprep.subr.mxu0 0.0
    %3278 = vmatpush1.msra.mxu0 0.0
    %3279 = vmatprep.subr.mxu0 0.0
    %3280 = vmatpush1.msra.mxu0 0.0
    %3281 = vmatprep.subr.mxu0 0.0
    %3282 = vmatpush1.msra.mxu0 0.0
    %3283 = vmatprep.subr.mxu0 0.0
    %3284 = vmatpush1.msra.mxu0 0.0
    %3285 = vmatprep.subr.mxu0 0.0
    %3286 = vmatpush1.msra.mxu0 0.0
    %3287 = vmatprep.mubr.f32.mxu0 0.0
    %3288 = vmatmul.mubr.f32.gmra.mrb[0].mxu0 %v3221
    %v3289 = vpop.f32.mrb[0].mxu0
    %v3290 = vadd.f32 %v1024, %v3289
    %v3291 = vpop.f32.mrb[0].mxu0
    %3292 = vdwg.mxu0
    %vm3293 = vcmp.gt.f32.partialorder %v3290, 0.0
    %v3294 = vmul.f32 %v3290, 0.01
    %v3295 = vsel %vm3293, %v3290, %v3294
    %3296 = vst [vmem:[#allocation5 + $0x28] sm:$0xff] %v3295
    %v3298 = vsel %vm66, %v3077, 0
    %3300 = vmatprep.subr.mxu0 0.0
    %3301 = vmatpush1.msra.mxu0 %v43
    %3302 = vmatprep.subr.mxu0 0.0
    %3303 = vmatpush1.msra.mxu0 %v44
    %3304 = vmatprep.subr.mxu0 0.0
    %3305 = vmatpush1.msra.mxu0 0.0
    %3306 = vmatprep.subr.mxu0 0.0
    %3307 = vmatpush1.msra.mxu0 0.0
    %3308 = vmatprep.subr.mxu0 0.0
    %3309 = vmatpush1.msra.mxu0 0.0
    %3310 = vmatprep.subr.mxu0 0.0
    %3311 = vmatpush1.msra.mxu0 0.0
    %3312 = vmatprep.subr.mxu0 0.0
    %3313 = vmatpush1.msra.mxu0 0.0
    %3314 = vmatprep.subr.mxu0 0.0
    %3315 = vmatpush1.msra.mxu0 0.0
    %3316 = vmatprep.subr.mxu0 0.0
    %3317 = vmatpush1.msra.mxu0 0.0
    %3318 = vmatprep.subr.mxu0 0.0
    %3319 = vmatpush1.msra.mxu0 0.0
    %3320 = vmatprep.subr.mxu0 0.0
    %3321 = vmatpush1.msra.mxu0 0.0
    %3322 = vmatprep.subr.mxu0 0.0
    %3323 = vmatpush1.msra.mxu0 0.0
    %3324 = vmatprep.subr.mxu0 0.0
    %3325 = vmatpush1.msra.mxu0 0.0
    %3326 = vmatprep.subr.mxu0 0.0
    %3327 = vmatpush1.msra.mxu0 0.0
    %3328 = vmatprep.subr.mxu0 0.0
    %3329 = vmatpush1.msra.mxu0 0.0
    %3330 = vmatprep.subr.mxu0 0.0
    %3331 = vmatpush1.msra.mxu0 0.0
    %3332 = vmatprep.subr.mxu0 0.0
    %3333 = vmatpush1.msra.mxu0 0.0
    %3334 = vmatprep.subr.mxu0 0.0
    %3335 = vmatpush1.msra.mxu0 0.0
    %3336 = vmatprep.subr.mxu0 0.0
    %3337 = vmatpush1.msra.mxu0 0.0
    %3338 = vmatprep.subr.mxu0 0.0
    %3339 = vmatpush1.msra.mxu0 0.0
    %3340 = vmatprep.subr.mxu0 0.0
    %3341 = vmatpush1.msra.mxu0 0.0
    %3342 = vmatprep.subr.mxu0 0.0
    %3343 = vmatpush1.msra.mxu0 0.0
    %3344 = vmatprep.subr.mxu0 0.0
    %3345 = vmatpush1.msra.mxu0 0.0
    %3346 = vmatprep.subr.mxu0 0.0
    %3347 = vmatpush1.msra.mxu0 0.0
    %3348 = vmatprep.subr.mxu0 0.0
    %3349 = vmatpush1.msra.mxu0 0.0
    %3350 = vmatprep.subr.mxu0 0.0
    %3351 = vmatpush1.msra.mxu0 0.0
    %3352 = vmatprep.subr.mxu0 0.0
    %3353 = vmatpush1.msra.mxu0 0.0
    %3354 = vmatprep.subr.mxu0 0.0
    %3355 = vmatpush1.msra.mxu0 0.0
    %3356 = vmatprep.subr.mxu0 0.0
    %3357 = vmatpush1.msra.mxu0 0.0
    %3358 = vmatprep.subr.mxu0 0.0
    %3359 = vmatpush1.msra.mxu0 0.0
    %3360 = vmatprep.subr.mxu0 0.0
    %3361 = vmatpush1.msra.mxu0 0.0
    %3362 = vmatprep.subr.mxu0 0.0
    %3363 = vmatpush1.msra.mxu0 0.0
    %3364 = vmatprep.mubr.f32.mxu0 0.0
    %3365 = vmatmul.mubr.f32.gmra.mrb[0].mxu0 %v3298
    %v3366 = vpop.f32.mrb[0].mxu0
    %v3367 = vadd.f32 0.0, %v3366
    %v3368 = vpop.f32.mrb[0].mxu0
    %3369 = vdwg.mxu0
    %v3371 = vsel %vm224, %v2932, 0
    %3373 = vmatprep.subr.mxu0 0.0
    %3374 = vmatpush1.msra.mxu0 %v39
    %3375 = vmatprep.subr.mxu0 0.0
    %3376 = vmatpush1.msra.mxu0 %v40
    %3377 = vmatprep.subr.mxu0 0.0
    %3378 = vmatpush1.msra.mxu0 %v41
    %3379 = vmatprep.subr.mxu0 0.0
    %3380 = vmatpush1.msra.mxu0 %v42
    %3381 = vmatprep.subr.mxu0 0.0
    %3382 = vmatpush1.msra.mxu0 0.0
    %3383 = vmatprep.subr.mxu0 0.0
    %3384 = vmatpush1.msra.mxu0 0.0
    %3385 = vmatprep.subr.mxu0 0.0
    %3386 = vmatpush1.msra.mxu0 0.0
    %3387 = vmatprep.subr.mxu0 0.0
    %3388 = vmatpush1.msra.mxu0 0.0
    %3389 = vmatprep.subr.mxu0 0.0
    %3390 = vmatpush1.msra.mxu0 0.0
    %3391 = vmatprep.subr.mxu0 0.0
    %3392 = vmatpush1.msra.mxu0 0.0
    %3393 = vmatprep.subr.mxu0 0.0
    %3394 = vmatpush1.msra.mxu0 0.0
    %3395 = vmatprep.subr.mxu0 0.0
    %3396 = vmatpush1.msra.mxu0 0.0
    %3397 = vmatprep.subr.mxu0 0.0
    %3398 = vmatpush1.msra.mxu0 0.0
    %3399 = vmatprep.subr.mxu0 0.0
    %3400 = vmatpush1.msra.mxu0 0.0
    %3401 = vmatprep.subr.mxu0 0.0
    %3402 = vmatpush1.msra.mxu0 0.0
    %3403 = vmatprep.subr.mxu0 0.0
    %3404 = vmatpush1.msra.mxu0 0.0
    %3405 = vmatprep.subr.mxu0 0.0
    %3406 = vmatpush1.msra.mxu0 0.0
    %3407 = vmatprep.subr.mxu0 0.0
    %3408 = vmatpush1.msra.mxu0 0.0
    %3409 = vmatprep.subr.mxu0 0.0
    %3410 = vmatpush1.msra.mxu0 0.0
    %3411 = vmatprep.subr.mxu0 0.0
    %3412 = vmatpush1.msra.mxu0 0.0
    %3413 = vmatprep.subr.mxu0 0.0
    %3414 = vmatpush1.msra.mxu0 0.0
    %3415 = vmatprep.subr.mxu0 0.0
    %3416 = vmatpush1.msra.mxu0 0.0
    %3417 = vmatprep.subr.mxu0 0.0
    %3418 = vmatpush1.msra.mxu0 0.0
    %3419 = vmatprep.subr.mxu0 0.0
    %3420 = vmatpush1.msra.mxu0 0.0
    %3421 = vmatprep.subr.mxu0 0.0
    %3422 = vmatpush1.msra.mxu0 0.0
    %3423 = vmatprep.subr.mxu0 0.0
    %3424 = vmatpush1.msra.mxu0 0.0
    %3425 = vmatprep.subr.mxu0 0.0
    %3426 = vmatpush1.msra.mxu0 0.0
    %3427 = vmatprep.subr.mxu0 0.0
    %3428 = vmatpush1.msra.mxu0 0.0
    %3429 = vmatprep.subr.mxu0 0.0
    %3430 = vmatpush1.msra.mxu0 0.0
    %3431 = vmatprep.subr.mxu0 0.0
    %3432 = vmatpush1.msra.mxu0 0.0
    %3433 = vmatprep.subr.mxu0 0.0
    %3434 = vmatpush1.msra.mxu0 0.0
    %3435 = vmatprep.subr.mxu0 0.0
    %3436 = vmatpush1.msra.mxu0 0.0
    %3437 = vmatprep.mubr.f32.mxu0 0.0
    %3438 = vmatmul.mubr.f32.gmra.mrb[0].mxu0 %v3371
    %v3439 = vpop.f32.mrb[0].mxu0
    %v3440 = vadd.f32 %v3367, %v3439
    %v3441 = vpop.f32.mrb[0].mxu0
    %3442 = vdwg.mxu0
    %v3443 = vadd.f32 %v3440, %v649
    %v3444 = vtanh.pop %v3443
    %3445 = vmatprep.subr.mxu0 0.0
    %3446 = vmatpush1.msra.mxu0 %v47
    %3447 = vmatprep.subr.mxu0 0.0
    %3448 = vmatpush1.msra.mxu0 0.0
    %3449 = vmatprep.subr.mxu0 0.0
    %3450 = vmatpush1.msra.mxu0 0.0
    %3451 = vmatprep.subr.mxu0 0.0
    %3452 = vmatpush1.msra.mxu0 0.0
    %3453 = vmatprep.subr.mxu0 0.0
    %3454 = vmatpush1.msra.mxu0 0.0
    %3455 = vmatprep.subr.mxu0 0.0
    %3456 = vmatpush1.msra.mxu0 0.0
    %3457 = vmatprep.subr.mxu0 0.0
    %3458 = vmatpush1.msra.mxu0 0.0
    %3459 = vmatprep.subr.mxu0 0.0
    %3460 = vmatpush1.msra.mxu0 0.0
    %3461 = vmatprep.subr.mxu0 0.0
    %3462 = vmatpush1.msra.mxu0 0.0
    %3463 = vmatprep.subr.mxu0 0.0
    %3464 = vmatpush1.msra.mxu0 0.0
    %3465 = vmatprep.subr.mxu0 0.0
    %3466 = vmatpush1.msra.mxu0 0.0
    %3467 = vmatprep.subr.mxu0 0.0
    %3468 = vmatpush1.msra.mxu0 0.0
    %3469 = vmatprep.subr.mxu0 0.0
    %3470 = vmatpush1.msra.mxu0 0.0
    %3471 = vmatprep.subr.mxu0 0.0
    %3472 = vmatpush1.msra.mxu0 0.0
    %3473 = vmatprep.subr.mxu0 0.0
    %3474 = vmatpush1.msra.mxu0 0.0
    %3475 = vmatprep.subr.mxu0 0.0
    %3476 = vmatpush1.msra.mxu0 0.0
    %3477 = vmatprep.subr.mxu0 0.0
    %3478 = vmatpush1.msra.mxu0 0.0
    %3479 = vmatprep.subr.mxu0 0.0
    %3480 = vmatpush1.msra.mxu0 0.0
    %3481 = vmatprep.subr.mxu0 0.0
    %3482 = vmatpush1.msra.mxu0 0.0
    %3483 = vmatprep.subr.mxu0 0.0
    %3484 = vmatpush1.msra.mxu0 0.0
    %3485 = vmatprep.subr.mxu0 0.0
    %3486 = vmatpush1.msra.mxu0 0.0
    %3487 = vmatprep.subr.mxu0 0.0
    %3488 = vmatpush1.msra.mxu0 0.0
    %3489 = vmatprep.subr.mxu0 0.0
    %3490 = vmatpush1.msra.mxu0 0.0
    %3491 = vmatprep.subr.mxu0 0.0
    %3492 = vmatpush1.msra.mxu0 0.0
    %3493 = vmatprep.subr.mxu0 0.0
    %3494 = vmatpush1.msra.mxu0 0.0
    %3495 = vmatprep.subr.mxu0 0.0
    %3496 = vmatpush1.msra.mxu0 0.0
    %3497 = vmatprep.subr.mxu0 0.0
    %3498 = vmatpush1.msra.mxu0 0.0
    %3499 = vmatprep.subr.mxu0 0.0
    %3500 = vmatpush1.msra.mxu0 0.0
    %3501 = vmatprep.subr.mxu0 0.0
    %3502 = vmatpush1.msra.mxu0 0.0
    %3503 = vmatprep.subr.mxu0 0.0
    %3504 = vmatpush1.msra.mxu0 0.0
    %3505 = vmatprep.subr.mxu0 0.0
    %3506 = vmatpush1.msra.mxu0 0.0
    %3507 = vmatprep.subr.mxu0 0.0
    %3508 = vmatpush1.msra.mxu0 0.0
    %3509 = vmatprep.mubr.f32.mxu0 0.0
    %3510 = vmatmul.mubr.f32.gmra.mrb[0].mxu0 %v3221
    %v3511 = vpop.f32.mrb[0].mxu0
    %v3512 = vadd.f32 0.0, %v3511
    %v3513 = vpop.f32.mrb[0].mxu0
    %3514 = vdwg.mxu0
    %3515 = vmatprep.subr.mxu0 0.0
    %3516 = vmatpush1.msra.mxu0 %v45
    %3517 = vmatprep.subr.mxu0 0.0
    %3518 = vmatpush1.msra.mxu0 %v46
    %3519 = vmatprep.subr.mxu0 0.0
    %3520 = vmatpush1.msra.mxu0 0.0
    %3521 = vmatprep.subr.mxu0 0.0
    %3522 = vmatpush1.msra.mxu0 0.0
    %3523 = vmatprep.subr.mxu0 0.0
    %3524 = vmatpush1.msra.mxu0 0.0
    %3525 = vmatprep.subr.mxu0 0.0
    %3526 = vmatpush1.msra.mxu0 0.0
    %3527 = vmatprep.subr.mxu0 0.0
    %3528 = vmatpush1.msra.mxu0 0.0
    %3529 = vmatprep.subr.mxu0 0.0
    %3530 = vmatpush1.msra.mxu0 0.0
    %3531 = vmatprep.subr.mxu0 0.0
    %3532 = vmatpush1.msra.mxu0 0.0
    %3533 = vmatprep.subr.mxu0 0.0
    %3534 = vmatpush1.msra.mxu0 0.0
    %3535 = vmatprep.subr.mxu0 0.0
    %3536 = vmatpush1.msra.mxu0 0.0
    %3537 = vmatprep.subr.mxu0 0.0
    %3538 = vmatpush1.msra.mxu0 0.0
    %3539 = vmatprep.subr.mxu0 0.0
    %3540 = vmatpush1.msra.mxu0 0.0
    %3541 = vmatprep.subr.mxu0 0.0
    %3542 = vmatpush1.msra.mxu0 0.0
    %3543 = vmatprep.subr.mxu0 0.0
    %3544 = vmatpush1.msra.mxu0 0.0
    %3545 = vmatprep.subr.mxu0 0.0
    %3546 = vmatpush1.msra.mxu0 0.0
    %3547 = vmatprep.subr.mxu0 0.0
    %3548 = vmatpush1.msra.mxu0 0.0
    %3549 = vmatprep.subr.mxu0 0.0
    %3550 = vmatpush1.msra.mxu0 0.0
    %3551 = vmatprep.subr.mxu0 0.0
    %3552 = vmatpush1.msra.mxu0 0.0
    %3553 = vmatprep.subr.mxu0 0.0
    %3554 = vmatpush1.msra.mxu0 0.0
    %3555 = vmatprep.subr.mxu0 0.0
    %3556 = vmatpush1.msra.mxu0 0.0
    %3557 = vmatprep.subr.mxu0 0.0
    %3558 = vmatpush1.msra.mxu0 0.0
    %3559 = vmatprep.subr.mxu0 0.0
    %3560 = vmatpush1.msra.mxu0 0.0
    %3561 = vmatprep.subr.mxu0 0.0
    %3562 = vmatpush1.msra.mxu0 0.0
    %3563 = vmatprep.subr.mxu0 0.0
    %3564 = vmatpush1.msra.mxu0 0.0
    %3565 = vmatprep.subr.mxu0 0.0
    %3566 = vmatpush1.msra.mxu0 0.0
    %3567 = vmatprep.subr.mxu0 0.0
    %3568 = vmatpush1.msra.mxu0 0.0
    %3569 = vmatprep.subr.mxu0 0.0
    %3570 = vmatpush1.msra.mxu0 0.0
    %3571 = vmatprep.subr.mxu0 0.0
    %3572 = vmatpush1.msra.mxu0 0.0
    %3573 = vmatprep.subr.mxu0 0.0
    %3574 = vmatpush1.msra.mxu0 0.0
    %3575 = vmatprep.subr.mxu0 0.0
    %3576 = vmatpush1.msra.mxu0 0.0
    %3577 = vmatprep.subr.mxu0 0.0
    %3578 = vmatpush1.msra.mxu0 0.0
    %3579 = vmatprep.mubr.f32.mxu0 0.0
    %3580 = vmatmul.mubr.f32.gmra.mrb[0].mxu0 %v3298
    %v3581 = vpop.f32.mrb[0].mxu0
    %v3582 = vadd.f32 %v3512, %v3581
    %v3583 = vpop.f32.mrb[0].mxu0
    %3584 = vdwg.mxu0
    %v3585 = vadd.f32 %v3582, %v1018
    %v3586 = vtanh.pop %v3585
    %v3588 = vsel %vm872, %v3586, 0
    %3590 = vmatprep.subr.mxu0 0.0
    %3591 = vmatpush1.msra.mxu0 %v48
    %3592 = vmatprep.subr.mxu0 0.0
    %3593 = vmatpush1.msra.mxu0 0.0
    %3594 = vmatprep.subr.mxu0 0.0
    %3595 = vmatpush1.msra.mxu0 0.0
    %3596 = vmatprep.subr.mxu0 0.0
    %3597 = vmatpush1.msra.mxu0 0.0
    %3598 = vmatprep.subr.mxu0 0.0
    %3599 = vmatpush1.msra.mxu0 0.0
    %3600 = vmatprep.subr.mxu0 0.0
    %3601 = vmatpush1.msra.mxu0 0.0
    %3602 = vmatprep.subr.mxu0 0.0
    %3603 = vmatpush1.msra.mxu0 0.0
    %3604 = vmatprep.subr.mxu0 0.0
    %3605 = vmatpush1.msra.mxu0 0.0
    %3606 = vmatprep.subr.mxu0 0.0
    %3607 = vmatpush1.msra.mxu0 0.0
    %3608 = vmatprep.subr.mxu0 0.0
    %3609 = vmatpush1.msra.mxu0 0.0
    %3610 = vmatprep.subr.mxu0 0.0
    %3611 = vmatpush1.msra.mxu0 0.0
    %3612 = vmatprep.subr.mxu0 0.0
    %3613 = vmatpush1.msra.mxu0 0.0
    %3614 = vmatprep.subr.mxu0 0.0
    %3615 = vmatpush1.msra.mxu0 0.0
    %3616 = vmatprep.subr.mxu0 0.0
    %3617 = vmatpush1.msra.mxu0 0.0
    %3618 = vmatprep.subr.mxu0 0.0
    %3619 = vmatpush1.msra.mxu0 0.0
    %3620 = vmatprep.subr.mxu0 0.0
    %3621 = vmatpush1.msra.mxu0 0.0
    %3622 = vmatprep.subr.mxu0 0.0
    %3623 = vmatpush1.msra.mxu0 0.0
    %3624 = vmatprep.subr.mxu0 0.0
    %3625 = vmatpush1.msra.mxu0 0.0
    %3626 = vmatprep.subr.mxu0 0.0
    %3627 = vmatpush1.msra.mxu0 0.0
    %3628 = vmatprep.subr.mxu0 0.0
    %3629 = vmatpush1.msra.mxu0 0.0
    %3630 = vmatprep.subr.mxu0 0.0
    %3631 = vmatpush1.msra.mxu0 0.0
    %3632 = vmatprep.subr.mxu0 0.0
    %3633 = vmatpush1.msra.mxu0 0.0
    %3634 = vmatprep.subr.mxu0 0.0
    %3635 = vmatpush1.msra.mxu0 0.0
    %3636 = vmatprep.subr.mxu0 0.0
    %3637 = vmatpush1.msra.mxu0 0.0
    %3638 = vmatprep.subr.mxu0 0.0
    %3639 = vmatpush1.msra.mxu0 0.0
    %3640 = vmatprep.subr.mxu0 0.0
    %3641 = vmatpush1.msra.mxu0 0.0
    %3642 = vmatprep.subr.mxu0 0.0
    %3643 = vmatpush1.msra.mxu0 0.0
    %3644 = vmatprep.subr.mxu0 0.0
    %3645 = vmatpush1.msra.mxu0 0.0
    %3646 = vmatprep.subr.mxu0 0.0
    %3647 = vmatpush1.msra.mxu0 0.0
    %3648 = vmatprep.subr.mxu0 0.0
    %3649 = vmatpush1.msra.mxu0 0.0
    %3650 = vmatprep.subr.mxu0 0.0
    %3651 = vmatpush1.msra.mxu0 0.0
    %3652 = vmatprep.subr.mxu0 0.0
    %3653 = vmatpush1.msra.mxu0 0.0
    %3654 = vmatprep.mubr.f32.mxu0 0.0
    %3655 = vmatmul.mubr.f32.gmra.mrb[0].mxu0 %v3588
    %v3656 = vpop.f32.mrb[0].mxu0
    %v3657 = vadd.f32 %v1024, %v3656
    %v3658 = vpop.f32.mrb[0].mxu0
    %3659 = vdwg.mxu0
    %vm3660 = vcmp.gt.f32.partialorder %v3657, 0.0
    %v3661 = vmul.f32 %v3657, 0.01
    %v3662 = vsel %vm3660, %v3657, %v3661
    %3663 = vst [vmem:[#allocation5 + $0x30] sm:$0xff] %v3662
    %3664 = vmatprep.subr.mxu0 0.0
    %3665 = vmatpush1.msra.mxu0 %v47
    %3666 = vmatprep.subr.mxu0 0.0
    %3667 = vmatpush1.msra.mxu0 0.0
    %3668 = vmatprep.subr.mxu0 0.0
    %3669 = vmatpush1.msra.mxu0 0.0
    %3670 = vmatprep.subr.mxu0 0.0
    %3671 = vmatpush1.msra.mxu0 0.0
    %3672 = vmatprep.subr.mxu0 0.0
    %3673 = vmatpush1.msra.mxu0 0.0
    %3674 = vmatprep.subr.mxu0 0.0
    %3675 = vmatpush1.msra.mxu0 0.0
    %3676 = vmatprep.subr.mxu0 0.0
    %3677 = vmatpush1.msra.mxu0 0.0
    %3678 = vmatprep.subr.mxu0 0.0
    %3679 = vmatpush1.msra.mxu0 0.0
    %3680 = vmatprep.subr.mxu0 0.0
    %3681 = vmatpush1.msra.mxu0 0.0
    %3682 = vmatprep.subr.mxu0 0.0
    %3683 = vmatpush1.msra.mxu0 0.0
    %3684 = vmatprep.subr.mxu0 0.0
    %3685 = vmatpush1.msra.mxu0 0.0
    %3686 = vmatprep.subr.mxu0 0.0
    %3687 = vmatpush1.msra.mxu0 0.0
    %3688 = vmatprep.subr.mxu0 0.0
    %3689 = vmatpush1.msra.mxu0 0.0
    %3690 = vmatprep.subr.mxu0 0.0
    %3691 = vmatpush1.msra.mxu0 0.0
    %3692 = vmatprep.subr.mxu0 0.0
    %3693 = vmatpush1.msra.mxu0 0.0
    %3694 = vmatprep.subr.mxu0 0.0
    %3695 = vmatpush1.msra.mxu0 0.0
    %3696 = vmatprep.subr.mxu0 0.0
    %3697 = vmatpush1.msra.mxu0 0.0
    %3698 = vmatprep.subr.mxu0 0.0
    %3699 = vmatpush1.msra.mxu0 0.0
    %3700 = vmatprep.subr.mxu0 0.0
    %3701 = vmatpush1.msra.mxu0 0.0
    %3702 = vmatprep.subr.mxu0 0.0
    %3703 = vmatpush1.msra.mxu0 0.0
    %3704 = vmatprep.subr.mxu0 0.0
    %3705 = vmatpush1.msra.mxu0 0.0
    %3706 = vmatprep.subr.mxu0 0.0
    %3707 = vmatpush1.msra.mxu0 0.0
    %3708 = vmatprep.subr.mxu0 0.0
    %3709 = vmatpush1.msra.mxu0 0.0
    %3710 = vmatprep.subr.mxu0 0.0
    %3711 = vmatpush1.msra.mxu0 0.0
    %3712 = vmatprep.subr.mxu0 0.0
    %3713 = vmatpush1.msra.mxu0 0.0
    %3714 = vmatprep.subr.mxu0 0.0
    %3715 = vmatpush1.msra.mxu0 0.0
    %3716 = vmatprep.subr.mxu0 0.0
    %3717 = vmatpush1.msra.mxu0 0.0
    %3718 = vmatprep.subr.mxu0 0.0
    %3719 = vmatpush1.msra.mxu0 0.0
    %3720 = vmatprep.subr.mxu0 0.0
    %3721 = vmatpush1.msra.mxu0 0.0
    %3722 = vmatprep.subr.mxu0 0.0
    %3723 = vmatpush1.msra.mxu0 0.0
    %3724 = vmatprep.subr.mxu0 0.0
    %3725 = vmatpush1.msra.mxu0 0.0
    %3726 = vmatprep.subr.mxu0 0.0
    %3727 = vmatpush1.msra.mxu0 0.0
    %3728 = vmatprep.mubr.f32.mxu0 0.0
    %3729 = vmatmul.mubr.f32.gmra.mrb[0].mxu0 %v3588
    %v3730 = vpop.f32.mrb[0].mxu0
    %v3731 = vadd.f32 0.0, %v3730
    %v3732 = vpop.f32.mrb[0].mxu0
    %3733 = vdwg.mxu0
    %v3735 = vsel %vm66, %v3444, 0
    %3737 = vmatprep.subr.mxu0 0.0
    %3738 = vmatpush1.msra.mxu0 %v45
    %3739 = vmatprep.subr.mxu0 0.0
    %3740 = vmatpush1.msra.mxu0 %v46
    %3741 = vmatprep.subr.mxu0 0.0
    %3742 = vmatpush1.msra.mxu0 0.0
    %3743 = vmatprep.subr.mxu0 0.0
    %3744 = vmatpush1.msra.mxu0 0.0
    %3745 = vmatprep.subr.mxu0 0.0
    %3746 = vmatpush1.msra.mxu0 0.0
    %3747 = vmatprep.subr.mxu0 0.0
    %3748 = vmatpush1.msra.mxu0 0.0
    %3749 = vmatprep.subr.mxu0 0.0
    %3750 = vmatpush1.msra.mxu0 0.0
    %3751 = vmatprep.subr.mxu0 0.0
    %3752 = vmatpush1.msra.mxu0 0.0
    %3753 = vmatprep.subr.mxu0 0.0
    %3754 = vmatpush1.msra.mxu0 0.0
    %3755 = vmatprep.subr.mxu0 0.0
    %3756 = vmatpush1.msra.mxu0 0.0
    %3757 = vmatprep.subr.mxu0 0.0
    %3758 = vmatpush1.msra.mxu0 0.0
    %3759 = vmatprep.subr.mxu0 0.0
    %3760 = vmatpush1.msra.mxu0 0.0
    %3761 = vmatprep.subr.mxu0 0.0
    %3762 = vmatpush1.msra.mxu0 0.0
    %3763 = vmatprep.subr.mxu0 0.0
    %3764 = vmatpush1.msra.mxu0 0.0
    %3765 = vmatprep.subr.mxu0 0.0
    %3766 = vmatpush1.msra.mxu0 0.0
    %3767 = vmatprep.subr.mxu0 0.0
    %3768 = vmatpush1.msra.mxu0 0.0
    %3769 = vmatprep.subr.mxu0 0.0
    %3770 = vmatpush1.msra.mxu0 0.0
    %3771 = vmatprep.subr.mxu0 0.0
    %3772 = vmatpush1.msra.mxu0 0.0
    %3773 = vmatprep.subr.mxu0 0.0
    %3774 = vmatpush1.msra.mxu0 0.0
    %3775 = vmatprep.subr.mxu0 0.0
    %3776 = vmatpush1.msra.mxu0 0.0
    %3777 = vmatprep.subr.mxu0 0.0
    %3778 = vmatpush1.msra.mxu0 0.0
    %3779 = vmatprep.subr.mxu0 0.0
    %3780 = vmatpush1.msra.mxu0 0.0
    %3781 = vmatprep.subr.mxu0 0.0
    %3782 = vmatpush1.msra.mxu0 0.0
    %3783 = vmatprep.subr.mxu0 0.0
    %3784 = vmatpush1.msra.mxu0 0.0
    %3785 = vmatprep.subr.mxu0 0.0
    %3786 = vmatpush1.msra.mxu0 0.0
    %3787 = vmatprep.subr.mxu0 0.0
    %3788 = vmatpush1.msra.mxu0 0.0
    %3789 = vmatprep.subr.mxu0 0.0
    %3790 = vmatpush1.msra.mxu0 0.0
    %3791 = vmatprep.subr.mxu0 0.0
    %3792 = vmatpush1.msra.mxu0 0.0
    %3793 = vmatprep.subr.mxu0 0.0
    %3794 = vmatpush1.msra.mxu0 0.0
    %3795 = vmatprep.subr.mxu0 0.0
    %3796 = vmatpush1.msra.mxu0 0.0
    %3797 = vmatprep.subr.mxu0 0.0
    %3798 = vmatpush1.msra.mxu0 0.0
    %3799 = vmatprep.subr.mxu0 0.0
    %3800 = vmatpush1.msra.mxu0 0.0
    %3801 = vmatprep.mubr.f32.mxu0 0.0
    %3802 = vmatmul.mubr.f32.gmra.mrb[0].mxu0 %v3735
    %v3803 = vpop.f32.mrb[0].mxu0
    %v3804 = vadd.f32 %v3731, %v3803
    %v3805 = vpop.f32.mrb[0].mxu0
    %3806 = vdwg.mxu0
    %v3807 = vadd.f32 %v3804, %v1018
    %v3808 = vtanh.pop %v3807
    %v3810 = vsel %vm872, %v3808, 0
    %3812 = vmatprep.subr.mxu0 0.0
    %3813 = vmatpush1.msra.mxu0 %v48
    %3814 = vmatprep.subr.mxu0 0.0
    %3815 = vmatpush1.msra.mxu0 0.0
    %3816 = vmatprep.subr.mxu0 0.0
    %3817 = vmatpush1.msra.mxu0 0.0
    %3818 = vmatprep.subr.mxu0 0.0
    %3819 = vmatpush1.msra.mxu0 0.0
    %3820 = vmatprep.subr.mxu0 0.0
    %3821 = vmatpush1.msra.mxu0 0.0
    %3822 = vmatprep.subr.mxu0 0.0
    %3823 = vmatpush1.msra.mxu0 0.0
    %3824 = vmatprep.subr.mxu0 0.0
    %3825 = vmatpush1.msra.mxu0 0.0
    %3826 = vmatprep.subr.mxu0 0.0
    %3827 = vmatpush1.msra.mxu0 0.0
    %3828 = vmatprep.subr.mxu0 0.0
    %3829 = vmatpush1.msra.mxu0 0.0
    %3830 = vmatprep.subr.mxu0 0.0
    %3831 = vmatpush1.msra.mxu0 0.0
    %3832 = vmatprep.subr.mxu0 0.0
    %3833 = vmatpush1.msra.mxu0 0.0
    %3834 = vmatprep.subr.mxu0 0.0
    %3835 = vmatpush1.msra.mxu0 0.0
    %3836 = vmatprep.subr.mxu0 0.0
    %3837 = vmatpush1.msra.mxu0 0.0
    %3838 = vmatprep.subr.mxu0 0.0
    %3839 = vmatpush1.msra.mxu0 0.0
    %3840 = vmatprep.subr.mxu0 0.0
    %3841 = vmatpush1.msra.mxu0 0.0
    %3842 = vmatprep.subr.mxu0 0.0
    %3843 = vmatpush1.msra.mxu0 0.0
    %3844 = vmatprep.subr.mxu0 0.0
    %3845 = vmatpush1.msra.mxu0 0.0
    %3846 = vmatprep.subr.mxu0 0.0
    %3847 = vmatpush1.msra.mxu0 0.0
    %3848 = vmatprep.subr.mxu0 0.0
    %3849 = vmatpush1.msra.mxu0 0.0
    %3850 = vmatprep.subr.mxu0 0.0
    %3851 = vmatpush1.msra.mxu0 0.0
    %3852 = vmatprep.subr.mxu0 0.0
    %3853 = vmatpush1.msra.mxu0 0.0
    %3854 = vmatprep.subr.mxu0 0.0
    %3855 = vmatpush1.msra.mxu0 0.0
    %3856 = vmatprep.subr.mxu0 0.0
    %3857 = vmatpush1.msra.mxu0 0.0
    %3858 = vmatprep.subr.mxu0 0.0
    %3859 = vmatpush1.msra.mxu0 0.0
    %3860 = vmatprep.subr.mxu0 0.0
    %3861 = vmatpush1.msra.mxu0 0.0
    %3862 = vmatprep.subr.mxu0 0.0
    %3863 = vmatpush1.msra.mxu0 0.0
    %3864 = vmatprep.subr.mxu0 0.0
    %3865 = vmatpush1.msra.mxu0 0.0
    %3866 = vmatprep.subr.mxu0 0.0
    %3867 = vmatpush1.msra.mxu0 0.0
    %3868 = vmatprep.subr.mxu0 0.0
    %3869 = vmatpush1.msra.mxu0 0.0
    %3870 = vmatprep.subr.mxu0 0.0
    %3871 = vmatpush1.msra.mxu0 0.0
    %3872 = vmatprep.subr.mxu0 0.0
    %3873 = vmatpush1.msra.mxu0 0.0
    %3874 = vmatprep.subr.mxu0 0.0
    %3875 = vmatpush1.msra.mxu0 0.0
    %3876 = vmatprep.mubr.f32.mxu0 0.0
    %3877 = vmatmul.mubr.f32.gmra.mrb[0].mxu0 %v3810
    %v3878 = vpop.f32.mrb[0].mxu0
    %v3879 = vadd.f32 %v1024, %v3878
    %v3880 = vpop.f32.mrb[0].mxu0
    %3881 = vdwg.mxu0
    %vm3882 = vcmp.gt.f32.partialorder %v3879, 0.0
    %v3883 = vmul.f32 %v3879, 0.01
    %v3884 = vsel %vm3882, %v3879, %v3883
    %3885 = vst [vmem:[#allocation5 + $0x38] sm:$0xff] %v3884
    // Predicated region
    $region18: #{tpu_custom_call.1} parent=1 // pred_check
      _
    $region19: #{tpu_custom_call.1} parent=1 // pred_check_branch
      %3887 = sbr.rel (0) target = $region21
    $region20: #{tpu_custom_call.1} parent=1 // pred_region
      %s3889 = ssub.s32 1024, 1024
      %3890 = vsyncadd [#allocation4], %s3889
      %s3891 = sshll.u32 [#allocation5], 4
      %s3892 = int_to_ptr.vmem [resolvable:$true] %s3891
      %3897 = dma.vmem_to_hbm [thread:$0]  %s3892, 1024, %s3, [#allocation4], 128, 128, 8
    $region21: #{tpu_custom_call.1} parent=1 // pred_fallthru
      _
    // Predicated region
    $region22: #{tpu_custom_call.1} parent=1 // pred_check
      _
    $region23: #{tpu_custom_call.1} parent=1 // pred_check_branch
      %3899 = sbr.rel (0) target = $region25
    $region24: #{tpu_custom_call.1} parent=1 // pred_region
      %3900 = dma.done [#allocation4], 1024
    $region25: #{tpu_custom_call.1} parent=1 // pred_fallthru
      _
    %3901 = vsyncpa [#allocation3], 1
    %3902 = vsyncpa [#allocation4], 1

</llo_original>
